<compile_context>
chip_gen: v7x
topology: tpu7x:2x2x1
jax: 0.10.0
libtpu: 0.0.40
codegen_flags: <defaults>
</compile_context>

<pallas_src>
import jax
import jax.numpy as jnp
import numpy as np
from jax.experimental import pallas as pl
from jax.experimental.pallas import tpu as pltpu

CHANNELS = (3, 64, 128, 128, 256, 512)
BN_EPS = 1e-5


def _encoder_kernel(x_ref,
                    w1, b1, w2, b2, w3, b3, w4, b4, w5, b5,
                    out_ref, acc_ref):
    """Grid = (batch, point_split, k).  Per step:

    x_ref  : (1, 3, TN)   VMEM, points on lanes
    w1, b1 : (64, 3) f32, (64, 1) f32           (BN folded)
    w_i    : (Cout, Cin) bf16, b_i (Cout, 1) f32  for i = 2..5
    out_ref: (1, 1, 512, 1) written once at k == last
    acc_ref: (512, 1) f32 running max, reset at k == 0
    """
    k = pl.program_id(2)

    @pl.when(k == 0)
    def _():
        acc_ref[...] = jnp.full_like(acc_ref, -jnp.inf)

    h = x_ref[0].astype(jnp.float32)                       # (3, TN)

    # Layer 1 (Cin=3): broadcasted VPU FMAs, no degenerate K=3 MXU matmul.
    w1v = w1[...]                                          # (64, 3) f32
    h = (w1v[:, 0:1] * h[0:1, :] +
         w1v[:, 1:2] * h[1:2, :] +
         w1v[:, 2:3] * h[2:3, :] + b1[...])                # (64, TN)
    h = jnp.maximum(h, 0.0)

    # Layers 2..5: bf16 MXU matmuls, f32 accumulation, BN folded into w/b.
    for w, b in ((w2, b2), (w3, b3), (w4, b4), (w5, b5)):
        h = jnp.dot(w[...], h.astype(jnp.bfloat16),
                    preferred_element_type=jnp.float32) + b[...]
        h = jnp.maximum(h, 0.0)                            # (Cout, TN) f32

    # Max over the points (lane) axis -> (512, 1) column; running max.
    acc_ref[...] = jnp.maximum(acc_ref[...],
                               jnp.max(h, axis=-1, keepdims=True))

    @pl.when(k == pl.num_programs(2) - 1)
    def _():
        out_ref[0, 0] = acc_ref[...]


def _fold_bn(params):
    """Fold eval-mode BatchNorm1d into the 1x1 conv weights/biases.

    Weights of layers 2..5 are kept in bf16 (MXU fast path); layer 1 stays in
    f32 (it runs on the VPU and is 3x64 elements).  Biases stay f32.
    """
    folded = []
    for i in range(5):
        w = params[f"conv{i+1}_w"].astype(jnp.float32)     # (Cout, Cin)
        b = params[f"conv{i+1}_b"].astype(jnp.float32)     # (Cout,)
        gamma = params[f"bn{i+1}_gamma"]
        beta = params[f"bn{i+1}_beta"]
        mean = params[f"bn{i+1}_mean"]
        var = params[f"bn{i+1}_var"]
        s = gamma / jnp.sqrt(var + BN_EPS)                 # (Cout,)
        w_f = w * s[:, None]                               # (Cout, Cin)
        b_f = (s * (b - mean) + beta)[:, None]             # (Cout, 1)
        w_dtype = jnp.float32 if i == 0 else jnp.bfloat16
        folded.append((w_f.astype(w_dtype), b_f.astype(jnp.float32)))
    return folded


def _pick_tile_n(n, cap):
    """Largest multiple-of-128 tile <= cap that divides n."""
    t = min(cap, n)
    t -= t % 128
    while t >= 128:
        if n % t == 0:
            return t
        t -= 128
    raise ValueError(f"point count {n} has no multiple-of-128 tiling")


def encoder_forward(x_ncl, params, *, tile_n=None, point_splits=None,
                    max_tile_n=2048):
    """x_ncl: (B, 3, N) float32 -> (B, 512) float32 (eval-mode forward)."""
    B, C, N = x_ncl.shape
    assert C == 3, C

    # Points-axis split: extra "parallel" grid axis so a batch of 1 can still
    # occupy both TensorCores on v7x; no effect on single-core chips.
    if point_splits is None:
        point_splits = 2 if B == 1 else 1
    assert N % point_splits == 0, (N, point_splits)
    n_per_split = N // point_splits

    if tile_n is None:
        tile_n = _pick_tile_n(n_per_split, max_tile_n)
    assert n_per_split % tile_n == 0 and tile_n % 128 == 0, (N, tile_n)
    k_steps = n_per_split // tile_n

    folded = _fold_bn(params)

    in_specs = [pl.BlockSpec((1, 3, tile_n),
                             lambda b, s, k, kk=k_steps: (b, 0, s * kk + k))]
    flat_args = [x_ncl]
    for w_f, b_f in folded:
        # TODO(synk): pipeline_mode=pl.Buffered(1) on these constant blocks
        # would save their duplicate (double-buffer) copy in VMEM.
        in_specs.append(pl.BlockSpec(w_f.shape, lambda b, s, k: (0, 0)))
        in_specs.append(pl.BlockSpec(b_f.shape, lambda b, s, k: (0, 0)))
        flat_args.extend([w_f, b_f])

    cout = CHANNELS[-1]
    cp_kwargs = dict(dimension_semantics=("parallel", "parallel", "arbitrary"))
    if tile_n >= 1024:
        # Large tiles: raise the scoped-VMEM budget above the 16/32 MiB
        # defaults while staying below v7x's 64 MiB physical VMEM.
        cp_kwargs["vmem_limit_bytes"] = 48 * 1024 * 1024

    out = pl.pallas_call(
        _encoder_kernel,
        out_shape=jax.ShapeDtypeStruct((B, point_splits, cout, 1), jnp.float32),
        grid_spec=pltpu.PrefetchScalarGridSpec(
            num_scalar_prefetch=0,
            grid=(B, point_splits, k_steps),
            in_specs=in_specs,
            out_specs=pl.BlockSpec((1, 1, cout, 1),
                                   lambda b, s, k: (b, s, 0, 0)),
            scratch_shapes=[pltpu.VMEM((cout, 1), jnp.float32)]),
        compiler_params=pltpu.CompilerParams(**cp_kwargs),
    )(*flat_args)

    # Combine per-split partial maxima and drop the trailing lane dim.
    return jnp.max(out[..., 0], axis=1)                    # (B, 512)


def encoder_ref(x_ncl, params):
    """Pure-JAX f32 reference matching PyTorch eval-mode forward."""
    h = x_ncl.astype(jnp.float32)                          # (B, C, N)
    for i in range(5):
        w = params[f"conv{i+1}_w"]
        b = params[f"conv{i+1}_b"]
        gamma = params[f"bn{i+1}_gamma"]
        beta = params[f"bn{i+1}_beta"]
        mean = params[f"bn{i+1}_mean"]
        var = params[f"bn{i+1}_var"]
        h = jnp.einsum("oc,bcn->bon", w, h) + b[None, :, None]
        h = gamma[None, :, None] * (h - mean[None, :, None]) / \
            jnp.sqrt(var + BN_EPS)[None, :, None] + beta[None, :, None]
        h = jnp.maximum(h, 0.0)
    return jnp.max(h, axis=-1)


def make_params(key):
    params = {}
    for i in range(5):
        cin, cout = CHANNELS[i], CHANNELS[i + 1]
        key, k1, k2, k3, k4, k5, k6 = jax.random.split(key, 7)
        scale = 1.0 / np.sqrt(cin)
        params[f"conv{i+1}_w"] = jax.random.uniform(
            k1, (cout, cin), jnp.float32, -scale, scale)
        params[f"conv{i+1}_b"] = jax.random.uniform(
            k2, (cout,), jnp.float32, -scale, scale)
        params[f"bn{i+1}_gamma"] = 1.0 + 0.1 * jax.random.normal(k3, (cout,), jnp.float32)
        params[f"bn{i+1}_beta"] = 0.1 * jax.random.normal(k4, (cout,), jnp.float32)
        params[f"bn{i+1}_mean"] = 0.1 * jax.random.normal(k5, (cout,), jnp.float32)
        params[f"bn{i+1}_var"] = 0.5 + jnp.abs(jax.random.normal(k6, (cout,), jnp.float32))
    return params


if __name__ == "__main__":
    key = jax.random.PRNGKey(0)
    key, kx = jax.random.split(key)
    B, N = 2, 512                                          # small point cloud
    x = jax.random.normal(kx, (B, 3, N), jnp.float32)      # PyTorch layout (B, 3, N)
    params = make_params(key)

    ref = jax.block_until_ready(encoder_ref(x, params))

    # Default config: single k-step, whole split in one tile.
    out = jax.block_until_ready(encoder_forward(x, params))
    assert out.shape == (B, 512), out.shape
    np.testing.assert_allclose(np.asarray(out), np.asarray(ref),
                               rtol=5e-2, atol=5e-2)

    # Stressed config: multi-step running-max + points-axis split (v7x path).
    out2 = jax.block_until_ready(
        encoder_forward(x, params, tile_n=128, point_splits=2))
    np.testing.assert_allclose(np.asarray(out2), np.asarray(ref),
                               rtol=5e-2, atol=5e-2)

    print("KERNEL_OK")
</pallas_src>

<mosaic_0001>
module attributes {stable_mosaic.version = 11 : i64} {
  func.func @_encoder_kernel(%arg0: i32, %arg1: i32, %arg2: i32, %arg3: memref<1x3x512xf32, #tpu.memory_space<vmem>>, %arg4: memref<64x3xf32, #tpu.memory_space<vmem>>, %arg5: memref<64x1xf32, #tpu.memory_space<vmem>>, %arg6: memref<128x64xbf16, #tpu.memory_space<vmem>>, %arg7: memref<128x1xf32, #tpu.memory_space<vmem>>, %arg8: memref<128x128xbf16, #tpu.memory_space<vmem>>, %arg9: memref<128x1xf32, #tpu.memory_space<vmem>>, %arg10: memref<256x128xbf16, #tpu.memory_space<vmem>>, %arg11: memref<256x1xf32, #tpu.memory_space<vmem>>, %arg12: memref<512x256xbf16, #tpu.memory_space<vmem>>, %arg13: memref<512x1xf32, #tpu.memory_space<vmem>>, %arg14: memref<1x1x512x1xf32, #tpu.memory_space<vmem>>, %arg15: memref<512x1xf32, #tpu.memory_space<vmem>>) attributes {dimension_semantics = [#tpu.dimension_semantics<parallel>, #tpu.dimension_semantics<parallel>, #tpu.dimension_semantics<arbitrary>], iteration_bounds = array<i64: 2, 1, 1>, scalar_prefetch = 0 : i64, scratch_operands = 1 : i64, tpu.core_type = #tpu.core_type<tc>, window_params = [{transform_indices = @transform_0, window_bounds = array<i64: 1, 3, 512>}, {pipeline_mode = #tpu.pipeline_mode<synchronous>, transform_indices = @transform_1, window_bounds = array<i64: 64, 3>}, {pipeline_mode = #tpu.pipeline_mode<synchronous>, transform_indices = @transform_2, window_bounds = array<i64: 64, 1>}, {pipeline_mode = #tpu.pipeline_mode<synchronous>, transform_indices = @transform_3, window_bounds = array<i64: 128, 64>}, {pipeline_mode = #tpu.pipeline_mode<synchronous>, transform_indices = @transform_4, window_bounds = array<i64: 128, 1>}, {pipeline_mode = #tpu.pipeline_mode<synchronous>, transform_indices = @transform_5, window_bounds = array<i64: 128, 128>}, {pipeline_mode = #tpu.pipeline_mode<synchronous>, transform_indices = @transform_6, window_bounds = array<i64: 128, 1>}, {pipeline_mode = #tpu.pipeline_mode<synchronous>, transform_indices = @transform_7, window_bounds = array<i64: 256, 128>}, {pipeline_mode = #tpu.pipeline_mode<synchronous>, transform_indices = @transform_8, window_bounds = array<i64: 256, 1>}, {pipeline_mode = #tpu.pipeline_mode<synchronous>, transform_indices = @transform_9, window_bounds = array<i64: 512, 256>}, {pipeline_mode = #tpu.pipeline_mode<synchronous>, transform_indices = @transform_10, window_bounds = array<i64: 512, 1>}, {transform_indices = @transform_11, window_bounds = array<i64: 1, 1, 512, 1>}]} {
    %c0_i32 = arith.constant 0 : i32
    %0 = arith.cmpi eq, %arg2, %c0_i32 : i32
    %1 = arith.extui %0 : i1 to i32
    %c0_i32_0 = arith.constant 0 : i32
    %2 = arith.cmpi ne, %1, %c0_i32_0 : i32
    scf.if %2 {
      %cst_38 = arith.constant 0xFF800000 : f32
      %68 = vector.broadcast %cst_38 : f32 to vector<512x1xf32>
      %c0_39 = arith.constant 0 : index
      %c0_40 = arith.constant 0 : index
      %69 = vector.load %arg15[%c0_39, %c0_40] : memref<512x1xf32, #tpu.memory_space<vmem>>, vector<512x1xf32>
      tpu.vector_store %arg15[%c0_39, %c0_40], %68 {strides = array<i32>} : memref<512x1xf32, #tpu.memory_space<vmem>>, vector<512x1xf32>,
    } else {
    }
    %c0 = arith.constant 0 : index
    %c0_1 = arith.constant 0 : index
    %c0_2 = arith.constant 0 : index
    %3 = vector.load %arg3[%c0, %c0_1, %c0_2] : memref<1x3x512xf32, #tpu.memory_space<vmem>>, vector<1x3x512xf32>
    %4 = vector.shape_cast %3 : vector<1x3x512xf32> to vector<3x512xf32>
    %c0_3 = arith.constant 0 : index
    %c0_4 = arith.constant 0 : index
    %5 = vector.load %arg4[%c0_3, %c0_4] : memref<64x3xf32, #tpu.memory_space<vmem>>, vector<64x3xf32>
    %6 = vector.extract_strided_slice %5 {offsets = [0, 0], sizes = [64, 1], strides = [1, 1]} : vector<64x3xf32> to vector<64x1xf32>
    %7 = vector.extract_strided_slice %4 {offsets = [0, 0], sizes = [1, 512], strides = [1, 1]} : vector<3x512xf32> to vector<1x512xf32>
    %8 = vector.broadcast %6 : vector<64x1xf32> to vector<64x512xf32>
    %9 = vector.broadcast %7 : vector<1x512xf32> to vector<64x512xf32>
    %10 = arith.mulf %8, %9 : vector<64x512xf32>
    %11 = vector.extract_strided_slice %5 {offsets = [0, 1], sizes = [64, 1], strides = [1, 1]} : vector<64x3xf32> to vector<64x1xf32>
    %12 = vector.extract_strided_slice %4 {offsets = [1, 0], sizes = [1, 512], strides = [1, 1]} : vector<3x512xf32> to vector<1x512xf32>
    %13 = vector.broadcast %11 : vector<64x1xf32> to vector<64x512xf32>
    %14 = vector.broadcast %12 : vector<1x512xf32> to vector<64x512xf32>
    %15 = arith.mulf %13, %14 : vector<64x512xf32>
    %16 = arith.addf %10, %15 : vector<64x512xf32>
    %17 = vector.extract_strided_slice %5 {offsets = [0, 2], sizes = [64, 1], strides = [1, 1]} : vector<64x3xf32> to vector<64x1xf32>
    %18 = vector.extract_strided_slice %4 {offsets = [2, 0], sizes = [1, 512], strides = [1, 1]} : vector<3x512xf32> to vector<1x512xf32>
    %19 = vector.broadcast %17 : vector<64x1xf32> to vector<64x512xf32>
    %20 = vector.broadcast %18 : vector<1x512xf32> to vector<64x512xf32>
    %21 = arith.mulf %19, %20 : vector<64x512xf32>
    %22 = arith.addf %16, %21 : vector<64x512xf32>
    %c0_5 = arith.constant 0 : index
    %c0_6 = arith.constant 0 : index
    %23 = vector.load %arg5[%c0_5, %c0_6] : memref<64x1xf32, #tpu.memory_space<vmem>>, vector<64x1xf32>
    %24 = vector.broadcast %23 : vector<64x1xf32> to vector<64x512xf32>
    %25 = arith.addf %22, %24 : vector<64x512xf32>
    %cst = arith.constant 0.000000e+00 : f32
    %26 = vector.broadcast %cst : f32 to vector<64x512xf32>
    %27 = arith.maximumf %25, %26 : vector<64x512xf32>
    %c0_7 = arith.constant 0 : index
    %c0_8 = arith.constant 0 : index
    %28 = vector.load %arg6[%c0_7, %c0_8] : memref<128x64xbf16, #tpu.memory_space<vmem>>, vector<128x64xbf16>
    %29 = arith.truncf %27 : vector<64x512xf32> to vector<64x512xbf16>
    %cst_9 = arith.constant dense<0.000000e+00> : vector<128x512xf32>
    %30 = tpu.matmul %28, %29, %cst_9 {dimension_numbers = #tpu.dot_dimension_numbers<[1], [0], [0], [1], [0, 0, 1, 1], [], []>} : vector<128x64xbf16>, vector<64x512xbf16>, vector<128x512xf32> -> vector<128x512xf32>
    %c0_10 = arith.constant 0 : index
    %c0_11 = arith.constant 0 : index
    %31 = vector.load %arg7[%c0_10, %c0_11] : memref<128x1xf32, #tpu.memory_space<vmem>>, vector<128x1xf32>
    %32 = vector.broadcast %31 : vector<128x1xf32> to vector<128x512xf32>
    %33 = arith.addf %30, %32 : vector<128x512xf32>
    %cst_12 = arith.constant 0.000000e+00 : f32
    %34 = vector.broadcast %cst_12 : f32 to vector<128x512xf32>
    %35 = arith.maximumf %33, %34 : vector<128x512xf32>
    %c0_13 = arith.constant 0 : index
    %c0_14 = arith.constant 0 : index
    %36 = vector.load %arg8[%c0_13, %c0_14] : memref<128x128xbf16, #tpu.memory_space<vmem>>, vector<128x128xbf16>
    %37 = arith.truncf %35 : vector<128x512xf32> to vector<128x512xbf16>
    %cst_15 = arith.constant dense<0.000000e+00> : vector<128x512xf32>
    %38 = tpu.matmul %36, %37, %cst_15 {dimension_numbers = #tpu.dot_dimension_numbers<[1], [0], [0], [1], [0, 0, 1, 1], [], []>} : vector<128x128xbf16>, vector<128x512xbf16>, vector<128x512xf32> -> vector<128x512xf32>
    %c0_16 = arith.constant 0 : index
    %c0_17 = arith.constant 0 : index
    %39 = vector.load %arg9[%c0_16, %c0_17] : memref<128x1xf32, #tpu.memory_space<vmem>>, vector<128x1xf32>
    %40 = vector.broadcast %39 : vector<128x1xf32> to vector<128x512xf32>
    %41 = arith.addf %38, %40 : vector<128x512xf32>
    %cst_18 = arith.constant 0.000000e+00 : f32
    %42 = vector.broadcast %cst_18 : f32 to vector<128x512xf32>
    %43 = arith.maximumf %41, %42 : vector<128x512xf32>
    %c0_19 = arith.constant 0 : index
    %c0_20 = arith.constant 0 : index
    %44 = vector.load %arg10[%c0_19, %c0_20] : memref<256x128xbf16, #tpu.memory_space<vmem>>, vector<256x128xbf16>
    %45 = arith.truncf %43 : vector<128x512xf32> to vector<128x512xbf16>
    %cst_21 = arith.constant dense<0.000000e+00> : vector<256x512xf32>
    %46 = tpu.matmul %44, %45, %cst_21 {dimension_numbers = #tpu.dot_dimension_numbers<[1], [0], [0], [1], [0, 0, 1, 1], [], []>} : vector<256x128xbf16>, vector<128x512xbf16>, vector<256x512xf32> -> vector<256x512xf32>
    %c0_22 = arith.constant 0 : index
    %c0_23 = arith.constant 0 : index
    %47 = vector.load %arg11[%c0_22, %c0_23] : memref<256x1xf32, #tpu.memory_space<vmem>>, vector<256x1xf32>
    %48 = vector.broadcast %47 : vector<256x1xf32> to vector<256x512xf32>
    %49 = arith.addf %46, %48 : vector<256x512xf32>
    %cst_24 = arith.constant 0.000000e+00 : f32
    %50 = vector.broadcast %cst_24 : f32 to vector<256x512xf32>
    %51 = arith.maximumf %49, %50 : vector<256x512xf32>
    %c0_25 = arith.constant 0 : index
    %c0_26 = arith.constant 0 : index
    %52 = vector.load %arg12[%c0_25, %c0_26] : memref<512x256xbf16, #tpu.memory_space<vmem>>, vector<512x256xbf16>
    %53 = arith.truncf %51 : vector<256x512xf32> to vector<256x512xbf16>
    %cst_27 = arith.constant dense<0.000000e+00> : vector<512x512xf32>
    %54 = tpu.matmul %52, %53, %cst_27 {dimension_numbers = #tpu.dot_dimension_numbers<[1], [0], [0], [1], [0, 0, 1, 1], [], []>} : vector<512x256xbf16>, vector<256x512xbf16>, vector<512x512xf32> -> vector<512x512xf32>
    %c0_28 = arith.constant 0 : index
    %c0_29 = arith.constant 0 : index
    %55 = vector.load %arg13[%c0_28, %c0_29] : memref<512x1xf32, #tpu.memory_space<vmem>>, vector<512x1xf32>
    %56 = vector.broadcast %55 : vector<512x1xf32> to vector<512x512xf32>
    %57 = arith.addf %54, %56 : vector<512x512xf32>
    %cst_30 = arith.constant 0.000000e+00 : f32
    %58 = vector.broadcast %cst_30 : f32 to vector<512x512xf32>
    %59 = arith.maximumf %57, %58 : vector<512x512xf32>
    %c0_31 = arith.constant 0 : index
    %c0_32 = arith.constant 0 : index
    %60 = vector.load %arg15[%c0_31, %c0_32] : memref<512x1xf32, #tpu.memory_space<vmem>>, vector<512x1xf32>
    %cst_33 = arith.constant dense<0xFF800000> : vector<512xf32>
    %61 = vector.multi_reduction <maximumf>, %59, %cst_33 [1] : vector<512x512xf32> to vector<512xf32>
    %62 = vector.shape_cast %61 : vector<512xf32> to vector<512x1xf32>
    %63 = arith.maximumf %60, %62 : vector<512x1xf32>
    %c0_34 = arith.constant 0 : index
    %c0_35 = arith.constant 0 : index
    %64 = vector.load %arg15[%c0_34, %c0_35] : memref<512x1xf32, #tpu.memory_space<vmem>>, vector<512x1xf32>
    tpu.vector_store %arg15[%c0_34, %c0_35], %63 {strides = array<i32>} : memref<512x1xf32, #tpu.memory_space<vmem>>, vector<512x1xf32>,
    %c0_i32_36 = arith.constant 0 : i32
    %65 = arith.cmpi eq, %arg2, %c0_i32_36 : i32
    %66 = arith.extui %65 : i1 to i32
    %c0_i32_37 = arith.constant 0 : i32
    %67 = arith.cmpi ne, %66, %c0_i32_37 : i32
    scf.if %67 {
      %c0_38 = arith.constant 0 : index
      %c0_39 = arith.constant 0 : index
      %68 = vector.load %arg15[%c0_38, %c0_39] : memref<512x1xf32, #tpu.memory_space<vmem>>, vector<512x1xf32>
      %c0_40 = arith.constant 0 : index
      %c0_41 = arith.constant 0 : index
      %c0_42 = arith.constant 0 : index
      %c0_43 = arith.constant 0 : index
      %69 = vector.load %arg14[%c0_40, %c0_41, %c0_42, %c0_43] : memref<1x1x512x1xf32, #tpu.memory_space<vmem>>, vector<1x1x512x1xf32>
      %70 = vector.shape_cast %69 : vector<1x1x512x1xf32> to vector<512x1xf32>
      %71 = vector.shape_cast %68 : vector<512x1xf32> to vector<1x1x512x1xf32>
      tpu.vector_store %arg14[%c0_40, %c0_41, %c0_42, %c0_43], %71 {strides = array<i32>} : memref<1x1x512x1xf32, #tpu.memory_space<vmem>>, vector<1x1x512x1xf32>,
    } else {
    }
    return
  }
  func.func @transform_0(%arg0: i32, %arg1: i32, %arg2: i32) -> (i32, i32, i32) {
    %c1_i32 = arith.constant 1 : i32
    %0 = arith.muli %arg1, %c1_i32 : i32
    %1 = arith.addi %0, %arg2 : i32
    %c0_i32 = arith.constant 0 : i32
    %c0_i32_0 = arith.constant 0 : i32
    return %arg0, %c0_i32, %1 : i32, i32, i32
  }
  func.func @transform_1(%arg0: i32, %arg1: i32, %arg2: i32) -> (i32, i32) {
    %c0_i32 = arith.constant 0 : i32
    %c0_i32_0 = arith.constant 0 : i32
    %c0_i32_1 = arith.constant 0 : i32
    return %c0_i32, %c0_i32_0 : i32, i32
  }
  func.func @transform_2(%arg0: i32, %arg1: i32, %arg2: i32) -> (i32, i32) {
    %c0_i32 = arith.constant 0 : i32
    %c0_i32_0 = arith.constant 0 : i32
    %c0_i32_1 = arith.constant 0 : i32
    return %c0_i32, %c0_i32_0 : i32, i32
  }
  func.func @transform_3(%arg0: i32, %arg1: i32, %arg2: i32) -> (i32, i32) {
    %c0_i32 = arith.constant 0 : i32
    %c0_i32_0 = arith.constant 0 : i32
    %c0_i32_1 = arith.constant 0 : i32
    return %c0_i32, %c0_i32_0 : i32, i32
  }
  func.func @transform_4(%arg0: i32, %arg1: i32, %arg2: i32) -> (i32, i32) {
    %c0_i32 = arith.constant 0 : i32
    %c0_i32_0 = arith.constant 0 : i32
    %c0_i32_1 = arith.constant 0 : i32
    return %c0_i32, %c0_i32_0 : i32, i32
  }
  func.func @transform_5(%arg0: i32, %arg1: i32, %arg2: i32) -> (i32, i32) {
    %c0_i32 = arith.constant 0 : i32
    %c0_i32_0 = arith.constant 0 : i32
    %c0_i32_1 = arith.constant 0 : i32
    return %c0_i32, %c0_i32_0 : i32, i32
  }
  func.func @transform_6(%arg0: i32, %arg1: i32, %arg2: i32) -> (i32, i32) {
    %c0_i32 = arith.constant 0 : i32
    %c0_i32_0 = arith.constant 0 : i32
    %c0_i32_1 = arith.constant 0 : i32
    return %c0_i32, %c0_i32_0 : i32, i32
  }
  func.func @transform_7(%arg0: i32, %arg1: i32, %arg2: i32) -> (i32, i32) {
    %c0_i32 = arith.constant 0 : i32
    %c0_i32_0 = arith.constant 0 : i32
    %c0_i32_1 = arith.constant 0 : i32
    return %c0_i32, %c0_i32_0 : i32, i32
  }
  func.func @transform_8(%arg0: i32, %arg1: i32, %arg2: i32) -> (i32, i32) {
    %c0_i32 = arith.constant 0 : i32
    %c0_i32_0 = arith.constant 0 : i32
    %c0_i32_1 = arith.constant 0 : i32
    return %c0_i32, %c0_i32_0 : i32, i32
  }
  func.func @transform_9(%arg0: i32, %arg1: i32, %arg2: i32) -> (i32, i32) {
    %c0_i32 = arith.constant 0 : i32
    %c0_i32_0 = arith.constant 0 : i32
    %c0_i32_1 = arith.constant 0 : i32
    return %c0_i32, %c0_i32_0 : i32, i32
  }
  func.func @transform_10(%arg0: i32, %arg1: i32, %arg2: i32) -> (i32, i32) {
    %c0_i32 = arith.constant 0 : i32
    %c0_i32_0 = arith.constant 0 : i32
    %c0_i32_1 = arith.constant 0 : i32
    return %c0_i32, %c0_i32_0 : i32, i32
  }
  func.func @transform_11(%arg0: i32, %arg1: i32, %arg2: i32) -> (i32, i32, i32, i32) {
    %c0_i32 = arith.constant 0 : i32
    %c0_i32_0 = arith.constant 0 : i32
    %c0_i32_1 = arith.constant 0 : i32
    return %arg0, %arg1, %c0_i32, %c0_i32_0 : i32, i32, i32, i32
  }
}

</mosaic_0001>

<llo_original>
// kernel: tpu_custom_call.1
$region0: #{tpu_custom_call.1}
  #allocation0 [shape = 'u32[]', space=smem, size = 0x4, offset = 0x4, fixed_abs, tag = 'smem constant byte address 0x4 - core index']
  #allocation1 [shape = 'u32[144,128]{1,0:T(1,128)}', space=vmem, size = 0x12000, scoped, tag = 'internal scratch']
  #allocation2 [shape = 'f32[512,1]{1,0:T(8,128)}', space=vmem, size = 0x40000, scoped, tag = 'scratch operand']
  %s0 = inlined_call_operand.vmem [shape: f32[2,3,512], index: 0, kind: input, shape index: {}]
  %s1 = inlined_call_operand.vmem [shape: f32[64,3], index: 1, kind: input, shape index: {}]
  %s2 = inlined_call_operand.vmem [shape: f32[64,1], index: 2, kind: input, shape index: {}]
  %s3 = inlined_call_operand.vmem [shape: bf16[128,64], index: 3, kind: input, shape index: {}]
  %s4 = inlined_call_operand.vmem [shape: f32[128,1], index: 4, kind: input, shape index: {}]
  %s5 = inlined_call_operand.vmem [shape: bf16[128,128], index: 5, kind: input, shape index: {}]
  %s6 = inlined_call_operand.vmem [shape: f32[128,1], index: 6, kind: input, shape index: {}]
  %s7 = inlined_call_operand.vmem [shape: bf16[256,128], index: 7, kind: input, shape index: {}]
  %s8 = inlined_call_operand.vmem [shape: f32[256,1], index: 8, kind: input, shape index: {}]
  %s9 = inlined_call_operand.vmem [shape: bf16[512,256], index: 9, kind: input, shape index: {}]
  %s10 = inlined_call_operand.vmem [shape: f32[512,1], index: 10, kind: input, shape index: {}]
  %s11 = inlined_call_operand.vmem [shape: f32[2,1,512,1], index: 11, kind: output, shape index: {}]
  %s12 = sld [smem:[#allocation0]]
  $region85: #{tpu_custom_call.1} parent=0
    _
  %s14 = ssub.s32 1, %s12
  %s15 = scalar_select 0, %s14, %s12
  loop: start=0, step=1, limit=4
  $region2: #{tpu_custom_call.1} parent=0 // loop_pre_header
    _
  $region3: #{tpu_custom_call.1} parent=0 // loop_header
    %s17 = sphi 0, %s21
    %p18 = scmp.ge.s32.totalorder %s17, 4
    %s24 = sphi 0, %s43
    %s25 = sphi 0, %s39
    %s26 = sphi 0, %s35
    %s27 = sphi 0, %s24
    %s28 = sphi 0, %s25
    %s29 = sphi 0, %s26
    %s30 = sphi 0, %s27
    %s31 = sphi 0, %s28
    %s32 = sphi 0, %s29
    %s50 = sphi 0, %s52
    %s53 = sphi 0, %s50
    %s54 = sphi 0, %s53
    %s70 = sphi 0, %s54
    %s74 = sphi 0, %s74
    %s76 = sphi 0, %s74
    %s77 = sphi 0, %s76
    %s91 = sphi 0, %s77
    %s95 = sphi 0, %s95
    %s97 = sphi 0, %s95
    %s98 = sphi 0, %s97
    %s112 = sphi 0, %s98
    %s116 = sphi 0, %s116
    %s118 = sphi 0, %s116
    %s119 = sphi 0, %s118
    %s133 = sphi 0, %s119
    %s137 = sphi 0, %s137
    %s139 = sphi 0, %s137
    %s140 = sphi 0, %s139
    %s154 = sphi 0, %s140
    %s158 = sphi 0, %s158
    %s160 = sphi 0, %s158
    %s161 = sphi 0, %s160
    %s175 = sphi 0, %s161
    %s179 = sphi 0, %s179
    %s181 = sphi 0, %s179
    %s182 = sphi 0, %s181
    %s196 = sphi 0, %s182
    %s200 = sphi 0, %s200
    %s202 = sphi 0, %s200
    %s203 = sphi 0, %s202
    %s217 = sphi 0, %s203
    %s221 = sphi 0, %s221
    %s223 = sphi 0, %s221
    %s224 = sphi 0, %s223
    %s238 = sphi 0, %s224
    %s242 = sphi 0, %s242
    %s244 = sphi 0, %s242
    %s245 = sphi 0, %s244
    %s259 = sphi 0, %s245
    %s263 = sphi 0, %s263
    %s265 = sphi 0, %s263
    %s266 = sphi 0, %s265
    %s280 = sphi 0, %s266
    %s288 = sphi 0, %s290
    %s291 = sphi 0, %s288
    %s292 = sphi 0, %s291
    %s308 = sphi 0, %s292
  $region4: #{tpu_custom_call.1} parent=0 // loop_header_branch
    %20 = sbr.rel (%p18) target = $region8
  $region5: #{tpu_custom_call.1} parent=0 // loop_body
    %s22 = ssub.s32 %s17, 1
    %s23 = ssub.s32 %s17, 2
    %s33 = sadd.s32 1, %s26
    %p34 = scmp.ge.s32.totalorder %s33, 1
    %s35 = scalar_select %p34, 0, %s33
    %s36 = sadd.s32 1, %s25
    %s37 = scalar_select %p34, %s36, %s25
    %p38 = scmp.ge.s32.totalorder %s37, 1
    %s39 = scalar_select %p38, 0, %s37
    %s40 = sadd.s32 1, %s24
    %s41 = scalar_select %p38, %s40, %s24
    %p42 = scmp.ge.s32.totalorder %s41, 2
    %s43 = scalar_select %p42, 0, %s41
    %s44 = sadd.s32 %s25, %s26
    %s45 = sadd.s32 %s39, %s35
    %s46 = ssub.s32 %s24, %s43
    %s47 = ssub.s32 %s44, %s45
    %s48 = sor.u32 %s46, %s47
    %p49 = scmp.eq.s32.totalorder %s48, 0
    %s51 = sadd.s32 %s50, 1
    %s52 = scalar_select %p49, %s50, %s51
    %p55 = pneg %p49
    %p56 = scmp.eq.s32.totalorder %s17, 1
    %p57 = por %p55, %p56
    %p58 = scmp.ne.s32.totalorder %s50, %s53
    %p59 = scmp.eq.s32.totalorder %s17, 0
    %p60 = por %p58, %p59
    %p61 = scmp.ne.s32.totalorder %s50, %s53
    %p62 = scmp.eq.s32.totalorder %s22, 1
    %p63 = por %p61, %p62
    %p64 = scmp.ne.s32.totalorder %s53, %s54
    %p65 = scmp.eq.s32.totalorder %s22, 0
    %p66 = por %p64, %p65
    %p67 = scmp.ne.s32.totalorder %s53, %s54
    %p68 = scmp.eq.s32.totalorder %s23, 1
    %p69 = por %p67, %p68
    %p71 = scmp.ne.s32.totalorder %s54, %s70
    %p72 = scmp.eq.s32.totalorder %s23, 0
    %p73 = por %p71, %p72
    %s75 = sadd.s32 %s74, 1
    %p78 = scmp.eq.s32.totalorder %s17, 1
    %p79 = scmp.ne.s32.totalorder %s74, %s76
    %p80 = scmp.eq.s32.totalorder %s17, 0
    %p81 = por %p79, %p80
    %p82 = scmp.ne.s32.totalorder %s74, %s76
    %p83 = scmp.eq.s32.totalorder %s22, 1
    %p84 = por %p82, %p83
    %p85 = scmp.ne.s32.totalorder %s76, %s77
    %p86 = scmp.eq.s32.totalorder %s22, 0
    %p87 = por %p85, %p86
    %p88 = scmp.ne.s32.totalorder %s76, %s77
    %p89 = scmp.eq.s32.totalorder %s23, 1
    %p90 = por %p88, %p89
    %p92 = scmp.ne.s32.totalorder %s77, %s91
    %p93 = scmp.eq.s32.totalorder %s23, 0
    %p94 = por %p92, %p93
    %s96 = sadd.s32 %s95, 1
    %p99 = scmp.eq.s32.totalorder %s17, 1
    %p100 = scmp.ne.s32.totalorder %s95, %s97
    %p101 = scmp.eq.s32.totalorder %s17, 0
    %p102 = por %p100, %p101
    %p103 = scmp.ne.s32.totalorder %s95, %s97
    %p104 = scmp.eq.s32.totalorder %s22, 1
    %p105 = por %p103, %p104
    %p106 = scmp.ne.s32.totalorder %s97, %s98
    %p107 = scmp.eq.s32.totalorder %s22, 0
    %p108 = por %p106, %p107
    %p109 = scmp.ne.s32.totalorder %s97, %s98
    %p110 = scmp.eq.s32.totalorder %s23, 1
    %p111 = por %p109, %p110
    %p113 = scmp.ne.s32.totalorder %s98, %s112
    %p114 = scmp.eq.s32.totalorder %s23, 0
    %p115 = por %p113, %p114
    %s117 = sadd.s32 %s116, 1
    %p120 = scmp.eq.s32.totalorder %s17, 1
    %p121 = scmp.ne.s32.totalorder %s116, %s118
    %p122 = scmp.eq.s32.totalorder %s17, 0
    %p123 = por %p121, %p122
    %p124 = scmp.ne.s32.totalorder %s116, %s118
    %p125 = scmp.eq.s32.totalorder %s22, 1
    %p126 = por %p124, %p125
    %p127 = scmp.ne.s32.totalorder %s118, %s119
    %p128 = scmp.eq.s32.totalorder %s22, 0
    %p129 = por %p127, %p128
    %p130 = scmp.ne.s32.totalorder %s118, %s119
    %p131 = scmp.eq.s32.totalorder %s23, 1
    %p132 = por %p130, %p131
    %p134 = scmp.ne.s32.totalorder %s119, %s133
    %p135 = scmp.eq.s32.totalorder %s23, 0
    %p136 = por %p134, %p135
    %s138 = sadd.s32 %s137, 1
    %p141 = scmp.eq.s32.totalorder %s17, 1
    %p142 = scmp.ne.s32.totalorder %s137, %s139
    %p143 = scmp.eq.s32.totalorder %s17, 0
    %p144 = por %p142, %p143
    %p145 = scmp.ne.s32.totalorder %s137, %s139
    %p146 = scmp.eq.s32.totalorder %s22, 1
    %p147 = por %p145, %p146
    %p148 = scmp.ne.s32.totalorder %s139, %s140
    %p149 = scmp.eq.s32.totalorder %s22, 0
    %p150 = por %p148, %p149
    %p151 = scmp.ne.s32.totalorder %s139, %s140
    %p152 = scmp.eq.s32.totalorder %s23, 1
    %p153 = por %p151, %p152
    %p155 = scmp.ne.s32.totalorder %s140, %s154
    %p156 = scmp.eq.s32.totalorder %s23, 0
    %p157 = por %p155, %p156
    %s159 = sadd.s32 %s158, 1
    %p162 = scmp.eq.s32.totalorder %s17, 1
    %p163 = scmp.ne.s32.totalorder %s158, %s160
    %p164 = scmp.eq.s32.totalorder %s17, 0
    %p165 = por %p163, %p164
    %p166 = scmp.ne.s32.totalorder %s158, %s160
    %p167 = scmp.eq.s32.totalorder %s22, 1
    %p168 = por %p166, %p167
    %p169 = scmp.ne.s32.totalorder %s160, %s161
    %p170 = scmp.eq.s32.totalorder %s22, 0
    %p171 = por %p169, %p170
    %p172 = scmp.ne.s32.totalorder %s160, %s161
    %p173 = scmp.eq.s32.totalorder %s23, 1
    %p174 = por %p172, %p173
    %p176 = scmp.ne.s32.totalorder %s161, %s175
    %p177 = scmp.eq.s32.totalorder %s23, 0
    %p178 = por %p176, %p177
    %s180 = sadd.s32 %s179, 1
    %p183 = scmp.eq.s32.totalorder %s17, 1
    %p184 = scmp.ne.s32.totalorder %s179, %s181
    %p185 = scmp.eq.s32.totalorder %s17, 0
    %p186 = por %p184, %p185
    %p187 = scmp.ne.s32.totalorder %s179, %s181
    %p188 = scmp.eq.s32.totalorder %s22, 1
    %p189 = por %p187, %p188
    %p190 = scmp.ne.s32.totalorder %s181, %s182
    %p191 = scmp.eq.s32.totalorder %s22, 0
    %p192 = por %p190, %p191
    %p193 = scmp.ne.s32.totalorder %s181, %s182
    %p194 = scmp.eq.s32.totalorder %s23, 1
    %p195 = por %p193, %p194
    %p197 = scmp.ne.s32.totalorder %s182, %s196
    %p198 = scmp.eq.s32.totalorder %s23, 0
    %p199 = por %p197, %p198
    %s201 = sadd.s32 %s200, 1
    %p204 = scmp.eq.s32.totalorder %s17, 1
    %p205 = scmp.ne.s32.totalorder %s200, %s202
    %p206 = scmp.eq.s32.totalorder %s17, 0
    %p207 = por %p205, %p206
    %p208 = scmp.ne.s32.totalorder %s200, %s202
    %p209 = scmp.eq.s32.totalorder %s22, 1
    %p210 = por %p208, %p209
    %p211 = scmp.ne.s32.totalorder %s202, %s203
    %p212 = scmp.eq.s32.totalorder %s22, 0
    %p213 = por %p211, %p212
    %p214 = scmp.ne.s32.totalorder %s202, %s203
    %p215 = scmp.eq.s32.totalorder %s23, 1
    %p216 = por %p214, %p215
    %p218 = scmp.ne.s32.totalorder %s203, %s217
    %p219 = scmp.eq.s32.totalorder %s23, 0
    %p220 = por %p218, %p219
    %s222 = sadd.s32 %s221, 1
    %p225 = scmp.eq.s32.totalorder %s17, 1
    %p226 = scmp.ne.s32.totalorder %s221, %s223
    %p227 = scmp.eq.s32.totalorder %s17, 0
    %p228 = por %p226, %p227
    %p229 = scmp.ne.s32.totalorder %s221, %s223
    %p230 = scmp.eq.s32.totalorder %s22, 1
    %p231 = por %p229, %p230
    %p232 = scmp.ne.s32.totalorder %s223, %s224
    %p233 = scmp.eq.s32.totalorder %s22, 0
    %p234 = por %p232, %p233
    %p235 = scmp.ne.s32.totalorder %s223, %s224
    %p236 = scmp.eq.s32.totalorder %s23, 1
    %p237 = por %p235, %p236
    %p239 = scmp.ne.s32.totalorder %s224, %s238
    %p240 = scmp.eq.s32.totalorder %s23, 0
    %p241 = por %p239, %p240
    %s243 = sadd.s32 %s242, 1
    %p246 = scmp.eq.s32.totalorder %s17, 1
    %p247 = scmp.ne.s32.totalorder %s242, %s244
    %p248 = scmp.eq.s32.totalorder %s17, 0
    %p249 = por %p247, %p248
    %p250 = scmp.ne.s32.totalorder %s242, %s244
    %p251 = scmp.eq.s32.totalorder %s22, 1
    %p252 = por %p250, %p251
    %p253 = scmp.ne.s32.totalorder %s244, %s245
    %p254 = scmp.eq.s32.totalorder %s22, 0
    %p255 = por %p253, %p254
    %p256 = scmp.ne.s32.totalorder %s244, %s245
    %p257 = scmp.eq.s32.totalorder %s23, 1
    %p258 = por %p256, %p257
    %p260 = scmp.ne.s32.totalorder %s245, %s259
    %p261 = scmp.eq.s32.totalorder %s23, 0
    %p262 = por %p260, %p261
    %s264 = sadd.s32 %s263, 1
    %p267 = scmp.eq.s32.totalorder %s17, 1
    %p268 = scmp.ne.s32.totalorder %s263, %s265
    %p269 = scmp.eq.s32.totalorder %s17, 0
    %p270 = por %p268, %p269
    %p271 = scmp.ne.s32.totalorder %s263, %s265
    %p272 = scmp.eq.s32.totalorder %s22, 1
    %p273 = por %p271, %p272
    %p274 = scmp.ne.s32.totalorder %s265, %s266
    %p275 = scmp.eq.s32.totalorder %s22, 0
    %p276 = por %p274, %p275
    %p277 = scmp.ne.s32.totalorder %s265, %s266
    %p278 = scmp.eq.s32.totalorder %s23, 1
    %p279 = por %p277, %p278
    %p281 = scmp.ne.s32.totalorder %s266, %s280
    %p282 = scmp.eq.s32.totalorder %s23, 0
    %p283 = por %p281, %p282
    %s284 = ssub.s32 %s24, %s43
    %s285 = ssub.s32 %s25, %s39
    %s286 = sor.u32 %s284, %s285
    %p287 = scmp.eq.s32.totalorder %s286, 0
    %s289 = sadd.s32 %s288, 1
    %s290 = scalar_select %p287, %s288, %s289
    %p293 = pneg %p287
    %p294 = scmp.eq.s32.totalorder %s17, 1
    %p295 = por %p293, %p294
    %p296 = scmp.ne.s32.totalorder %s288, %s291
    %p297 = scmp.eq.s32.totalorder %s17, 0
    %p298 = por %p296, %p297
    %p299 = scmp.ne.s32.totalorder %s288, %s291
    %p300 = scmp.eq.s32.totalorder %s22, 1
    %p301 = por %p299, %p300
    %p302 = scmp.ne.s32.totalorder %s291, %s292
    %p303 = scmp.eq.s32.totalorder %s22, 0
    %p304 = por %p302, %p303
    %p305 = scmp.ne.s32.totalorder %s291, %s292
    %p306 = scmp.eq.s32.totalorder %s23, 1
    %p307 = por %p305, %p306
    %p309 = scmp.ne.s32.totalorder %s292, %s308
    %p310 = scmp.eq.s32.totalorder %s23, 0
    %p311 = por %p309, %p310
    %p312 = scmp.le.s32.totalorder 1, %s17
    %p313 = scmp.lt.s32.totalorder %s17, 3
    %p314 = pnand %p312, %p313
    %p315 = pneg %p314
    // Predicated region
    $region9: #{tpu_custom_call.1} parent=5 // pred_check
      _
    $region10: #{tpu_custom_call.1} parent=5 // pred_check_branch
      %317 = sbr.rel (%p314) target = $region12
    $region11: #{tpu_custom_call.1} parent=5 // pred_region
      %s318 = ssub.s32 %s17, 1
      // Predicated region
      $region13: #{tpu_custom_call.1} parent=11 // pred_check
        %p319 = pneg %p87
      $region14: #{tpu_custom_call.1} parent=11 // pred_check_branch
        %321 = sbr.rel (%p319) target = $region16
      $region15: #{tpu_custom_call.1} parent=11 // pred_region
        _
      $region16: #{tpu_custom_call.1} parent=11 // pred_fallthru
        _
      // Predicated region
      $region17: #{tpu_custom_call.1} parent=11 // pred_check
        %p322 = pneg %p108
      $region18: #{tpu_custom_call.1} parent=11 // pred_check_branch
        %324 = sbr.rel (%p322) target = $region20
      $region19: #{tpu_custom_call.1} parent=11 // pred_region
        _
      $region20: #{tpu_custom_call.1} parent=11 // pred_fallthru
        _
      // Predicated region
      $region21: #{tpu_custom_call.1} parent=11 // pred_check
        %p325 = pneg %p129
      $region22: #{tpu_custom_call.1} parent=11 // pred_check_branch
        %327 = sbr.rel (%p325) target = $region24
      $region23: #{tpu_custom_call.1} parent=11 // pred_region
        _
      $region24: #{tpu_custom_call.1} parent=11 // pred_fallthru
        _
      // Predicated region
      $region25: #{tpu_custom_call.1} parent=11 // pred_check
        %p328 = pneg %p150
      $region26: #{tpu_custom_call.1} parent=11 // pred_check_branch
        %330 = sbr.rel (%p328) target = $region28
      $region27: #{tpu_custom_call.1} parent=11 // pred_region
        _
      $region28: #{tpu_custom_call.1} parent=11 // pred_fallthru
        _
      // Predicated region
      $region29: #{tpu_custom_call.1} parent=11 // pred_check
        %p331 = pneg %p171
      $region30: #{tpu_custom_call.1} parent=11 // pred_check_branch
        %333 = sbr.rel (%p331) target = $region32
      $region31: #{tpu_custom_call.1} parent=11 // pred_region
        _
      $region32: #{tpu_custom_call.1} parent=11 // pred_fallthru
        _
      // Predicated region
      $region33: #{tpu_custom_call.1} parent=11 // pred_check
        %p334 = pneg %p192
      $region34: #{tpu_custom_call.1} parent=11 // pred_check_branch
        %336 = sbr.rel (%p334) target = $region36
      $region35: #{tpu_custom_call.1} parent=11 // pred_region
        _
      $region36: #{tpu_custom_call.1} parent=11 // pred_fallthru
        _
      // Predicated region
      $region37: #{tpu_custom_call.1} parent=11 // pred_check
        %p337 = pneg %p213
      $region38: #{tpu_custom_call.1} parent=11 // pred_check_branch
        %339 = sbr.rel (%p337) target = $region40
      $region39: #{tpu_custom_call.1} parent=11 // pred_region
        _
      $region40: #{tpu_custom_call.1} parent=11 // pred_fallthru
        _
      // Predicated region
      $region41: #{tpu_custom_call.1} parent=11 // pred_check
        %p340 = pneg %p234
      $region42: #{tpu_custom_call.1} parent=11 // pred_check_branch
        %342 = sbr.rel (%p340) target = $region44
      $region43: #{tpu_custom_call.1} parent=11 // pred_region
        _
      $region44: #{tpu_custom_call.1} parent=11 // pred_fallthru
        _
      // Predicated region
      $region45: #{tpu_custom_call.1} parent=11 // pred_check
        %p343 = pneg %p255
      $region46: #{tpu_custom_call.1} parent=11 // pred_check_branch
        %345 = sbr.rel (%p343) target = $region48
      $region47: #{tpu_custom_call.1} parent=11 // pred_region
        _
      $region48: #{tpu_custom_call.1} parent=11 // pred_fallthru
        _
      // Predicated region
      $region49: #{tpu_custom_call.1} parent=11 // pred_check
        %p346 = pneg %p276
      $region50: #{tpu_custom_call.1} parent=11 // pred_check_branch
        %348 = sbr.rel (%p346) target = $region52
      $region51: #{tpu_custom_call.1} parent=11 // pred_region
        _
      $region52: #{tpu_custom_call.1} parent=11 // pred_fallthru
        _
    $region12: #{tpu_custom_call.1} parent=5 // pred_fallthru
      _
    %p349 = scmp.lt.s32.totalorder %s17, 2
    // Predicated region
    $region53: #{tpu_custom_call.1} parent=5 // pred_check
      %p350 = pneg %p349
    $region54: #{tpu_custom_call.1} parent=5 // pred_check_branch
      %352 = sbr.rel (%p350) target = $region56
    $region55: #{tpu_custom_call.1} parent=5 // pred_region
      // Predicated region
      $region57: #{tpu_custom_call.1} parent=55 // pred_check
        %p353 = pneg %p60
      $region58: #{tpu_custom_call.1} parent=55 // pred_check_branch
        %355 = sbr.rel (%p353) target = $region60
      $region59: #{tpu_custom_call.1} parent=55 // pred_region
        %s356 = sadd.s32 %s25, %s26
        %s357 = smul.u32 4, %s356
        %p358 = scmp.lt.s32.totalorder %s24, 1
        %s359 = scalar_select %p358, %s24, 1
        %p360 = scmp.lt.s32.totalorder %s357, 3
        %s361 = scalar_select %p360, %s357, 3
        %s362 = smul.addr %s359, 4
        %s363 = sadd.s32 %s361, %s362
        %s364 = smul.addr %s363, 4
        %s365 = scalar_lea.vmem %s0, %s364
        %s366 = sadd.s32 %s25, %s26
        %s367 = smul.u32 4, %s366
      $region60: #{tpu_custom_call.1} parent=55 // pred_fallthru
        _
    $region56: #{tpu_custom_call.1} parent=5 // pred_fallthru
      _
    %p368 = scmp.le.s32.totalorder 1, %s17
    %p369 = scmp.lt.s32.totalorder %s17, 3
    %p370 = pnand %p368, %p369
    %p371 = pneg %p370
    // Predicated region
    $region61: #{tpu_custom_call.1} parent=5 // pred_check
      _
    $region62: #{tpu_custom_call.1} parent=5 // pred_check_branch
      %373 = sbr.rel (%p370) target = $region64
    $region63: #{tpu_custom_call.1} parent=5 // pred_region
      %s374 = ssub.s32 %s17, 1
      %s375 = sadd.s32 %s28, %s29
      %s376 = smul.u32 4, %s375
      %p377 = scmp.lt.s32.totalorder %s27, 1
      %s378 = scalar_select %p377, %s27, 1
      %p379 = scmp.lt.s32.totalorder %s376, 3
      %s380 = scalar_select %p379, %s376, 3
      %s381 = smul.addr %s378, 4
      %s382 = sadd.s32 %s380, %s381
      %s383 = smul.addr %s382, 4
      %s384 = scalar_lea.vmem %s0, %s383
      %p385 = pneg %p66
      %p386 = pneg %p63
      %p387 = pneg %p87
      %p388 = pneg %p84
      %p389 = pneg %p108
      %p390 = pneg %p105
      %p391 = pneg %p129
      %p392 = pneg %p126
      %p393 = pneg %p150
      %p394 = pneg %p147
      %p395 = pneg %p171
      %p396 = pneg %p168
      %p397 = pneg %p192
      %p398 = pneg %p189
      %p399 = pneg %p213
      %p400 = pneg %p210
      %p401 = pneg %p234
      %p402 = pneg %p231
      %p403 = pneg %p255
      %p404 = pneg %p252
      %p405 = pneg %p276
      %p406 = pneg %p273
      %p407 = pneg %p304
      %p408 = pneg %p301
      %p409 = scmp.lt.s32.totalorder %s27, 1
      %s410 = scalar_select %p409, %s27, 1
      %p411 = scmp.lt.s32.totalorder %s28, 0
      %s412 = scalar_select %p411, %s28, 0
      %s413 = smul.addr %s412, 64
      %s414 = smul.addr %s410, 64
      %s415 = sadd.s32 %s413, %s414
      %s416 = smul.addr %s415, 8
      %s417 = scalar_lea.vmem %s11, %s416
      %s418 = sadd.s32 %s28, %s29
      %s419 = smul.u32 4, %s418
      %p420 = scmp.lt.s32.totalorder %s27, 1
      %s421 = scalar_select %p420, %s27, 1
      %p422 = scmp.lt.s32.totalorder %s419, 3
      %s423 = scalar_select %p422, %s419, 3
      %s424 = smul.addr %s421, 4
      %s425 = sadd.s32 %s423, %s424
      %s426 = smul.addr %s425, 4
      %s427 = scalar_lea.vmem %s0, %s426
      %s428 = sadd.s32 %s28, %s29
      %s429 = smul.u32 4, %s428
      %p430 = scmp.lt.s32.totalorder %s27, 1
      %s431 = scalar_select %p430, %s27, 1
      %p432 = scmp.lt.s32.totalorder %s28, 0
      %s433 = scalar_select %p432, %s28, 0
      %s434 = smul.addr %s433, 64
      %s435 = smul.addr %s431, 64
      %s436 = sadd.s32 %s434, %s435
      %s437 = smul.addr %s436, 8
      %s438 = scalar_lea.vmem %s11, %s437
      %p440 = scmp.eq.s32.totalorder %s29, 0
      // Predicated region
      $region65: #{tpu_custom_call.1} parent=63 // pred_check
        %p441 = pneg %p440
      $region66: #{tpu_custom_call.1} parent=63 // pred_check_branch
        %443 = sbr.rel (%p441) target = $region68
      $region67: #{tpu_custom_call.1} parent=63 // pred_region
        %vm444 = vcmask 7168
        %445 = vst.msk [vmem:[#allocation2] sm:$0xff] %vm444, -inf
        %446 = vst.msk [vmem:[#allocation2 + $0x8] sm:$0xff] %vm444, -inf
        %447 = vst.msk [vmem:[#allocation2 + $0x10] sm:$0xff] %vm444, -inf
        %448 = vst.msk [vmem:[#allocation2 + $0x18] sm:$0xff] %vm444, -inf
        %449 = vst.msk [vmem:[#allocation2 + $0x20] sm:$0xff] %vm444, -inf
        %450 = vst.msk [vmem:[#allocation2 + $0x28] sm:$0xff] %vm444, -inf
        %451 = vst.msk [vmem:[#allocation2 + $0x30] sm:$0xff] %vm444, -inf
        %452 = vst.msk [vmem:[#allocation2 + $0x38] sm:$0xff] %vm444, -inf
        %453 = vst.msk [vmem:[#allocation2 + $0x40] sm:$0xff] %vm444, -inf
        %454 = vst.msk [vmem:[#allocation2 + $0x48] sm:$0xff] %vm444, -inf
        %455 = vst.msk [vmem:[#allocation2 + $0x50] sm:$0xff] %vm444, -inf
        %456 = vst.msk [vmem:[#allocation2 + $0x58] sm:$0xff] %vm444, -inf
        %457 = vst.msk [vmem:[#allocation2 + $0x60] sm:$0xff] %vm444, -inf
        %458 = vst.msk [vmem:[#allocation2 + $0x68] sm:$0xff] %vm444, -inf
        %459 = vst.msk [vmem:[#allocation2 + $0x70] sm:$0xff] %vm444, -inf
        %460 = vst.msk [vmem:[#allocation2 + $0x78] sm:$0xff] %vm444, -inf
        %461 = vst.msk [vmem:[#allocation2 + $0x80] sm:$0xff] %vm444, -inf
        %462 = vst.msk [vmem:[#allocation2 + $0x88] sm:$0xff] %vm444, -inf
        %463 = vst.msk [vmem:[#allocation2 + $0x90] sm:$0xff] %vm444, -inf
        %464 = vst.msk [vmem:[#allocation2 + $0x98] sm:$0xff] %vm444, -inf
        %465 = vst.msk [vmem:[#allocation2 + $0xa0] sm:$0xff] %vm444, -inf
        %466 = vst.msk [vmem:[#allocation2 + $0xa8] sm:$0xff] %vm444, -inf
        %467 = vst.msk [vmem:[#allocation2 + $0xb0] sm:$0xff] %vm444, -inf
        %468 = vst.msk [vmem:[#allocation2 + $0xb8] sm:$0xff] %vm444, -inf
        %469 = vst.msk [vmem:[#allocation2 + $0xc0] sm:$0xff] %vm444, -inf
        %470 = vst.msk [vmem:[#allocation2 + $0xc8] sm:$0xff] %vm444, -inf
        %471 = vst.msk [vmem:[#allocation2 + $0xd0] sm:$0xff] %vm444, -inf
        %472 = vst.msk [vmem:[#allocation2 + $0xd8] sm:$0xff] %vm444, -inf
        %473 = vst.msk [vmem:[#allocation2 + $0xe0] sm:$0xff] %vm444, -inf
        %474 = vst.msk [vmem:[#allocation2 + $0xe8] sm:$0xff] %vm444, -inf
        %475 = vst.msk [vmem:[#allocation2 + $0xf0] sm:$0xff] %vm444, -inf
        %476 = vst.msk [vmem:[#allocation2 + $0xf8] sm:$0xff] %vm444, -inf
        %477 = vst.msk [vmem:[#allocation2 + $0x100] sm:$0xff] %vm444, -inf
        %478 = vst.msk [vmem:[#allocation2 + $0x108] sm:$0xff] %vm444, -inf
        %479 = vst.msk [vmem:[#allocation2 + $0x110] sm:$0xff] %vm444, -inf
        %480 = vst.msk [vmem:[#allocation2 + $0x118] sm:$0xff] %vm444, -inf
        %481 = vst.msk [vmem:[#allocation2 + $0x120] sm:$0xff] %vm444, -inf
        %482 = vst.msk [vmem:[#allocation2 + $0x128] sm:$0xff] %vm444, -inf
        %483 = vst.msk [vmem:[#allocation2 + $0x130] sm:$0xff] %vm444, -inf
        %484 = vst.msk [vmem:[#allocation2 + $0x138] sm:$0xff] %vm444, -inf
        %485 = vst.msk [vmem:[#allocation2 + $0x140] sm:$0xff] %vm444, -inf
        %486 = vst.msk [vmem:[#allocation2 + $0x148] sm:$0xff] %vm444, -inf
        %487 = vst.msk [vmem:[#allocation2 + $0x150] sm:$0xff] %vm444, -inf
        %488 = vst.msk [vmem:[#allocation2 + $0x158] sm:$0xff] %vm444, -inf
        %489 = vst.msk [vmem:[#allocation2 + $0x160] sm:$0xff] %vm444, -inf
        %490 = vst.msk [vmem:[#allocation2 + $0x168] sm:$0xff] %vm444, -inf
        %491 = vst.msk [vmem:[#allocation2 + $0x170] sm:$0xff] %vm444, -inf
        %492 = vst.msk [vmem:[#allocation2 + $0x178] sm:$0xff] %vm444, -inf
        %493 = vst.msk [vmem:[#allocation2 + $0x180] sm:$0xff] %vm444, -inf
        %494 = vst.msk [vmem:[#allocation2 + $0x188] sm:$0xff] %vm444, -inf
        %495 = vst.msk [vmem:[#allocation2 + $0x190] sm:$0xff] %vm444, -inf
        %496 = vst.msk [vmem:[#allocation2 + $0x198] sm:$0xff] %vm444, -inf
        %497 = vst.msk [vmem:[#allocation2 + $0x1a0] sm:$0xff] %vm444, -inf
        %498 = vst.msk [vmem:[#allocation2 + $0x1a8] sm:$0xff] %vm444, -inf
        %499 = vst.msk [vmem:[#allocation2 + $0x1b0] sm:$0xff] %vm444, -inf
        %500 = vst.msk [vmem:[#allocation2 + $0x1b8] sm:$0xff] %vm444, -inf
        %501 = vst.msk [vmem:[#allocation2 + $0x1c0] sm:$0xff] %vm444, -inf
        %502 = vst.msk [vmem:[#allocation2 + $0x1c8] sm:$0xff] %vm444, -inf
        %503 = vst.msk [vmem:[#allocation2 + $0x1d0] sm:$0xff] %vm444, -inf
        %504 = vst.msk [vmem:[#allocation2 + $0x1d8] sm:$0xff] %vm444, -inf
        %505 = vst.msk [vmem:[#allocation2 + $0x1e0] sm:$0xff] %vm444, -inf
        %506 = vst.msk [vmem:[#allocation2 + $0x1e8] sm:$0xff] %vm444, -inf
        %507 = vst.msk [vmem:[#allocation2 + $0x1f0] sm:$0xff] %vm444, -inf
        %508 = vst.msk [vmem:[#allocation2 + $0x1f8] sm:$0xff] %vm444, -inf
      $region68: #{tpu_custom_call.1} parent=63 // pred_fallthru
        _
      %v509 = vld [vmem:[%s427] sm:$0x77]
      %v510 = vld [vmem:[%s427 + $0x8] sm:$0x77]
      %v511 = vld [vmem:[%s1] sm:$0xff]
      %v512 = vld [vmem:[%s1 + $0x8] sm:$0xff]
      %v513 = vld [vmem:[%s1 + $0x10] sm:$0xff]
      %v514 = vld [vmem:[%s1 + $0x18] sm:$0xff]
      %v515 = vld [vmem:[%s1 + $0x20] sm:$0xff]
      %v516 = vld [vmem:[%s1 + $0x28] sm:$0xff]
      %v517 = vld [vmem:[%s1 + $0x30] sm:$0xff]
      %v518 = vld [vmem:[%s1 + $0x38] sm:$0xff]
      %520 = vset.pattern.permute.xlu0 0
      %521 = vperm.xlu0 %520, %v511
      %v522 = vpop.permute.xlu0 %521
      %525 = vset.pattern.permute.xlu0 0
      %526 = vperm.xlu0 %525, %v512
      %v527 = vpop.permute.xlu0 %526
      %530 = vset.pattern.permute.xlu0 0
      %531 = vperm.xlu0 %530, %v513
      %v532 = vpop.permute.xlu0 %531
      %535 = vset.pattern.permute.xlu0 0
      %536 = vperm.xlu0 %535, %v514
      %v537 = vpop.permute.xlu0 %536
      %540 = vset.pattern.permute.xlu0 0
      %541 = vperm.xlu0 %540, %v515
      %v542 = vpop.permute.xlu0 %541
      %545 = vset.pattern.permute.xlu0 0
      %546 = vperm.xlu0 %545, %v516
      %v547 = vpop.permute.xlu0 %546
      %550 = vset.pattern.permute.xlu0 0
      %551 = vperm.xlu0 %550, %v517
      %v552 = vpop.permute.xlu0 %551
      %555 = vset.pattern.permute.xlu0 0
      %556 = vperm.xlu0 %555, %v518
      %v557 = vpop.permute.xlu0 %556
      %v561 = vlaneseq
      %v562 = vshrl.u32 %v561, 7
      %v563 = vsub.s32 0, %v562
      %v564 = vrot.slane %v509, %v563
      %v565 = vlaneseq
      %v566 = vshrl.u32 %v565, 7
      %v567 = vsub.s32 4, %v566
      %v568 = vrot.slane %v509, %v567
      %v569 = vlaneseq
      %v570 = vshrl.u32 %v569, 7
      %v571 = vsub.s32 0, %v570
      %v572 = vrot.slane %v510, %v571
      %v573 = vlaneseq
      %v574 = vshrl.u32 %v573, 7
      %v575 = vsub.s32 4, %v574
      %v576 = vrot.slane %v510, %v575
      %v581 = vlaneseq
      %v582 = vshrl.u32 %v581, 7
      %v583 = vsub.s32 0, %v582
      %v584 = vrot.slane %v564, %v583
      %v585 = vlaneseq
      %v586 = vshrl.u32 %v585, 7
      %v587 = vsub.s32 0, %v586
      %v588 = vrot.slane %v568, %v587
      %v589 = vlaneseq
      %v590 = vshrl.u32 %v589, 7
      %v591 = vsub.s32 0, %v590
      %v592 = vrot.slane %v572, %v591
      %v593 = vlaneseq
      %v594 = vshrl.u32 %v593, 7
      %v595 = vsub.s32 0, %v594
      %v596 = vrot.slane %v576, %v595
      %v597 = vmul.f32 %v522, %v584
      %v598 = vmul.f32 %v522, %v588
      %v599 = vmul.f32 %v522, %v592
      %v600 = vmul.f32 %v522, %v596
      %v601 = vmul.f32 %v527, %v584
      %v602 = vmul.f32 %v527, %v588
      %v603 = vmul.f32 %v527, %v592
      %v604 = vmul.f32 %v527, %v596
      %v605 = vmul.f32 %v532, %v584
      %v606 = vmul.f32 %v532, %v588
      %v607 = vmul.f32 %v532, %v592
      %v608 = vmul.f32 %v532, %v596
      %v609 = vmul.f32 %v537, %v584
      %v610 = vmul.f32 %v537, %v588
      %v611 = vmul.f32 %v537, %v592
      %v612 = vmul.f32 %v537, %v596
      %v613 = vmul.f32 %v542, %v584
      %v614 = vmul.f32 %v542, %v588
      %v615 = vmul.f32 %v542, %v592
      %v616 = vmul.f32 %v542, %v596
      %v617 = vmul.f32 %v547, %v584
      %v618 = vmul.f32 %v547, %v588
      %v619 = vmul.f32 %v547, %v592
      %v620 = vmul.f32 %v547, %v596
      %v621 = vmul.f32 %v552, %v584
      %v622 = vmul.f32 %v552, %v588
      %v623 = vmul.f32 %v552, %v592
      %v624 = vmul.f32 %v552, %v596
      %v625 = vmul.f32 %v557, %v584
      %v626 = vmul.f32 %v557, %v588
      %v627 = vmul.f32 %v557, %v592
      %v628 = vmul.f32 %v557, %v596
      %629 = vset.pattern.permute.xlu0 1
      %630 = vperm.xlu0 %629, %v511
      %v631 = vpop.permute.xlu0 %630
      %633 = vset.pattern.permute.xlu0 1
      %634 = vperm.xlu0 %633, %v512
      %v635 = vpop.permute.xlu0 %634
      %637 = vset.pattern.permute.xlu0 1
      %638 = vperm.xlu0 %637, %v513
      %v639 = vpop.permute.xlu0 %638
      %641 = vset.pattern.permute.xlu0 1
      %642 = vperm.xlu0 %641, %v514
      %v643 = vpop.permute.xlu0 %642
      %645 = vset.pattern.permute.xlu0 1
      %646 = vperm.xlu0 %645, %v515
      %v647 = vpop.permute.xlu0 %646
      %649 = vset.pattern.permute.xlu0 1
      %650 = vperm.xlu0 %649, %v516
      %v651 = vpop.permute.xlu0 %650
      %653 = vset.pattern.permute.xlu0 1
      %654 = vperm.xlu0 %653, %v517
      %v655 = vpop.permute.xlu0 %654
      %657 = vset.pattern.permute.xlu0 1
      %658 = vperm.xlu0 %657, %v518
      %v659 = vpop.permute.xlu0 %658
      %v661 = vlaneseq
      %v662 = vshrl.u32 %v661, 7
      %v663 = vsub.s32 1, %v662
      %v664 = vrot.slane %v509, %v663
      %v665 = vlaneseq
      %v666 = vshrl.u32 %v665, 7
      %v667 = vsub.s32 5, %v666
      %v668 = vrot.slane %v509, %v667
      %v669 = vlaneseq
      %v670 = vshrl.u32 %v669, 7
      %v671 = vsub.s32 1, %v670
      %v672 = vrot.slane %v510, %v671
      %v673 = vlaneseq
      %v674 = vshrl.u32 %v673, 7
      %v675 = vsub.s32 5, %v674
      %v676 = vrot.slane %v510, %v675
      %v681 = vlaneseq
      %v682 = vshrl.u32 %v681, 7
      %v683 = vsub.s32 1, %v682
      %v684 = vrot.slane %v664, %v683
      %v685 = vlaneseq
      %v686 = vshrl.u32 %v685, 7
      %v687 = vsub.s32 1, %v686
      %v688 = vrot.slane %v668, %v687
      %v689 = vlaneseq
      %v690 = vshrl.u32 %v689, 7
      %v691 = vsub.s32 1, %v690
      %v692 = vrot.slane %v672, %v691
      %v693 = vlaneseq
      %v694 = vshrl.u32 %v693, 7
      %v695 = vsub.s32 1, %v694
      %v696 = vrot.slane %v676, %v695
      %v697 = vmul.f32 %v631, %v684
      %v698 = vmul.f32 %v631, %v688
      %v699 = vmul.f32 %v631, %v692
      %v700 = vmul.f32 %v631, %v696
      %v701 = vmul.f32 %v635, %v684
      %v702 = vmul.f32 %v635, %v688
      %v703 = vmul.f32 %v635, %v692
      %v704 = vmul.f32 %v635, %v696
      %v705 = vmul.f32 %v639, %v684
      %v706 = vmul.f32 %v639, %v688
      %v707 = vmul.f32 %v639, %v692
      %v708 = vmul.f32 %v639, %v696
      %v709 = vmul.f32 %v643, %v684
      %v710 = vmul.f32 %v643, %v688
      %v711 = vmul.f32 %v643, %v692
      %v712 = vmul.f32 %v643, %v696
      %v713 = vmul.f32 %v647, %v684
      %v714 = vmul.f32 %v647, %v688
      %v715 = vmul.f32 %v647, %v692
      %v716 = vmul.f32 %v647, %v696
      %v717 = vmul.f32 %v651, %v684
      %v718 = vmul.f32 %v651, %v688
      %v719 = vmul.f32 %v651, %v692
      %v720 = vmul.f32 %v651, %v696
      %v721 = vmul.f32 %v655, %v684
      %v722 = vmul.f32 %v655, %v688
      %v723 = vmul.f32 %v655, %v692
      %v724 = vmul.f32 %v655, %v696
      %v725 = vmul.f32 %v659, %v684
      %v726 = vmul.f32 %v659, %v688
      %v727 = vmul.f32 %v659, %v692
      %v728 = vmul.f32 %v659, %v696
      %v729 = vadd.f32 %v597, %v697
      %v730 = vadd.f32 %v598, %v698
      %v731 = vadd.f32 %v599, %v699
      %v732 = vadd.f32 %v600, %v700
      %v733 = vadd.f32 %v601, %v701
      %v734 = vadd.f32 %v602, %v702
      %v735 = vadd.f32 %v603, %v703
      %v736 = vadd.f32 %v604, %v704
      %v737 = vadd.f32 %v605, %v705
      %v738 = vadd.f32 %v606, %v706
      %v739 = vadd.f32 %v607, %v707
      %v740 = vadd.f32 %v608, %v708
      %v741 = vadd.f32 %v609, %v709
      %v742 = vadd.f32 %v610, %v710
      %v743 = vadd.f32 %v611, %v711
      %v744 = vadd.f32 %v612, %v712
      %v745 = vadd.f32 %v613, %v713
      %v746 = vadd.f32 %v614, %v714
      %v747 = vadd.f32 %v615, %v715
      %v748 = vadd.f32 %v616, %v716
      %v749 = vadd.f32 %v617, %v717
      %v750 = vadd.f32 %v618, %v718
      %v751 = vadd.f32 %v619, %v719
      %v752 = vadd.f32 %v620, %v720
      %v753 = vadd.f32 %v621, %v721
      %v754 = vadd.f32 %v622, %v722
      %v755 = vadd.f32 %v623, %v723
      %v756 = vadd.f32 %v624, %v724
      %v757 = vadd.f32 %v625, %v725
      %v758 = vadd.f32 %v626, %v726
      %v759 = vadd.f32 %v627, %v727
      %v760 = vadd.f32 %v628, %v728
      %761 = vset.pattern.permute.xlu0 2
      %762 = vperm.xlu0 %761, %v511
      %v763 = vpop.permute.xlu0 %762
      %765 = vset.pattern.permute.xlu0 2
      %766 = vperm.xlu0 %765, %v512
      %v767 = vpop.permute.xlu0 %766
      %769 = vset.pattern.permute.xlu0 2
      %770 = vperm.xlu0 %769, %v513
      %v771 = vpop.permute.xlu0 %770
      %773 = vset.pattern.permute.xlu0 2
      %774 = vperm.xlu0 %773, %v514
      %v775 = vpop.permute.xlu0 %774
      %777 = vset.pattern.permute.xlu0 2
      %778 = vperm.xlu0 %777, %v515
      %v779 = vpop.permute.xlu0 %778
      %781 = vset.pattern.permute.xlu0 2
      %782 = vperm.xlu0 %781, %v516
      %v783 = vpop.permute.xlu0 %782
      %785 = vset.pattern.permute.xlu0 2
      %786 = vperm.xlu0 %785, %v517
      %v787 = vpop.permute.xlu0 %786
      %789 = vset.pattern.permute.xlu0 2
      %790 = vperm.xlu0 %789, %v518
      %v791 = vpop.permute.xlu0 %790
      %v793 = vlaneseq
      %v794 = vshrl.u32 %v793, 7
      %v795 = vsub.s32 2, %v794
      %v796 = vrot.slane %v509, %v795
      %v797 = vlaneseq
      %v798 = vshrl.u32 %v797, 7
      %v799 = vsub.s32 6, %v798
      %v800 = vrot.slane %v509, %v799
      %v801 = vlaneseq
      %v802 = vshrl.u32 %v801, 7
      %v803 = vsub.s32 2, %v802
      %v804 = vrot.slane %v510, %v803
      %v805 = vlaneseq
      %v806 = vshrl.u32 %v805, 7
      %v807 = vsub.s32 6, %v806
      %v808 = vrot.slane %v510, %v807
      %v813 = vlaneseq
      %v814 = vshrl.u32 %v813, 7
      %v815 = vsub.s32 2, %v814
      %v816 = vrot.slane %v796, %v815
      %v817 = vlaneseq
      %v818 = vshrl.u32 %v817, 7
      %v819 = vsub.s32 2, %v818
      %v820 = vrot.slane %v800, %v819
      %v821 = vlaneseq
      %v822 = vshrl.u32 %v821, 7
      %v823 = vsub.s32 2, %v822
      %v824 = vrot.slane %v804, %v823
      %v825 = vlaneseq
      %v826 = vshrl.u32 %v825, 7
      %v827 = vsub.s32 2, %v826
      %v828 = vrot.slane %v808, %v827
      %v829 = vmul.f32 %v763, %v816
      %v830 = vmul.f32 %v763, %v820
      %v831 = vmul.f32 %v763, %v824
      %v832 = vmul.f32 %v763, %v828
      %v833 = vmul.f32 %v767, %v816
      %v834 = vmul.f32 %v767, %v820
      %v835 = vmul.f32 %v767, %v824
      %v836 = vmul.f32 %v767, %v828
      %v837 = vmul.f32 %v771, %v816
      %v838 = vmul.f32 %v771, %v820
      %v839 = vmul.f32 %v771, %v824
      %v840 = vmul.f32 %v771, %v828
      %v841 = vmul.f32 %v775, %v816
      %v842 = vmul.f32 %v775, %v820
      %v843 = vmul.f32 %v775, %v824
      %v844 = vmul.f32 %v775, %v828
      %v845 = vmul.f32 %v779, %v816
      %v846 = vmul.f32 %v779, %v820
      %v847 = vmul.f32 %v779, %v824
      %v848 = vmul.f32 %v779, %v828
      %v849 = vmul.f32 %v783, %v816
      %v850 = vmul.f32 %v783, %v820
      %v851 = vmul.f32 %v783, %v824
      %v852 = vmul.f32 %v783, %v828
      %v853 = vmul.f32 %v787, %v816
      %v854 = vmul.f32 %v787, %v820
      %v855 = vmul.f32 %v787, %v824
      %v856 = vmul.f32 %v787, %v828
      %v857 = vmul.f32 %v791, %v816
      %v858 = vmul.f32 %v791, %v820
      %v859 = vmul.f32 %v791, %v824
      %v860 = vmul.f32 %v791, %v828
      %v861 = vadd.f32 %v729, %v829
      %v862 = vadd.f32 %v730, %v830
      %v863 = vadd.f32 %v731, %v831
      %v864 = vadd.f32 %v732, %v832
      %v865 = vadd.f32 %v733, %v833
      %v866 = vadd.f32 %v734, %v834
      %v867 = vadd.f32 %v735, %v835
      %v868 = vadd.f32 %v736, %v836
      %v869 = vadd.f32 %v737, %v837
      %v870 = vadd.f32 %v738, %v838
      %v871 = vadd.f32 %v739, %v839
      %v872 = vadd.f32 %v740, %v840
      %v873 = vadd.f32 %v741, %v841
      %v874 = vadd.f32 %v742, %v842
      %v875 = vadd.f32 %v743, %v843
      %v876 = vadd.f32 %v744, %v844
      %v877 = vadd.f32 %v745, %v845
      %v878 = vadd.f32 %v746, %v846
      %v879 = vadd.f32 %v747, %v847
      %v880 = vadd.f32 %v748, %v848
      %v881 = vadd.f32 %v749, %v849
      %v882 = vadd.f32 %v750, %v850
      %v883 = vadd.f32 %v751, %v851
      %v884 = vadd.f32 %v752, %v852
      %v885 = vadd.f32 %v753, %v853
      %v886 = vadd.f32 %v754, %v854
      %v887 = vadd.f32 %v755, %v855
      %v888 = vadd.f32 %v756, %v856
      %v889 = vadd.f32 %v757, %v857
      %v890 = vadd.f32 %v758, %v858
      %v891 = vadd.f32 %v759, %v859
      %v892 = vadd.f32 %v760, %v860
      %v893 = vld [vmem:[%s2] sm:$0xff]
      %v894 = vld [vmem:[%s2 + $0x8] sm:$0xff]
      %v895 = vld [vmem:[%s2 + $0x10] sm:$0xff]
      %v896 = vld [vmem:[%s2 + $0x18] sm:$0xff]
      %v897 = vld [vmem:[%s2 + $0x20] sm:$0xff]
      %v898 = vld [vmem:[%s2 + $0x28] sm:$0xff]
      %v899 = vld [vmem:[%s2 + $0x30] sm:$0xff]
      %v900 = vld [vmem:[%s2 + $0x38] sm:$0xff]
      %902 = vset.pattern.permute.xlu0 0
      %903 = vperm.xlu0 %902, %v893
      %v904 = vpop.permute.xlu0 %903
      %907 = vset.pattern.permute.xlu0 0
      %908 = vperm.xlu0 %907, %v894
      %v909 = vpop.permute.xlu0 %908
      %912 = vset.pattern.permute.xlu0 0
      %913 = vperm.xlu0 %912, %v895
      %v914 = vpop.permute.xlu0 %913
      %917 = vset.pattern.permute.xlu0 0
      %918 = vperm.xlu0 %917, %v896
      %v919 = vpop.permute.xlu0 %918
      %922 = vset.pattern.permute.xlu0 0
      %923 = vperm.xlu0 %922, %v897
      %v924 = vpop.permute.xlu0 %923
      %927 = vset.pattern.permute.xlu0 0
      %928 = vperm.xlu0 %927, %v898
      %v929 = vpop.permute.xlu0 %928
      %932 = vset.pattern.permute.xlu0 0
      %933 = vperm.xlu0 %932, %v899
      %v934 = vpop.permute.xlu0 %933
      %937 = vset.pattern.permute.xlu0 0
      %938 = vperm.xlu0 %937, %v900
      %v939 = vpop.permute.xlu0 %938
      %v941 = vadd.f32 %v861, %v904
      %v942 = vadd.f32 %v862, %v904
      %v943 = vadd.f32 %v863, %v904
      %v944 = vadd.f32 %v864, %v904
      %v945 = vadd.f32 %v865, %v909
      %v946 = vadd.f32 %v866, %v909
      %v947 = vadd.f32 %v867, %v909
      %v948 = vadd.f32 %v868, %v909
      %v949 = vadd.f32 %v869, %v914
      %v950 = vadd.f32 %v870, %v914
      %v951 = vadd.f32 %v871, %v914
      %v952 = vadd.f32 %v872, %v914
      %v953 = vadd.f32 %v873, %v919
      %v954 = vadd.f32 %v874, %v919
      %v955 = vadd.f32 %v875, %v919
      %v956 = vadd.f32 %v876, %v919
      %v957 = vadd.f32 %v877, %v924
      %v958 = vadd.f32 %v878, %v924
      %v959 = vadd.f32 %v879, %v924
      %v960 = vadd.f32 %v880, %v924
      %v961 = vadd.f32 %v881, %v929
      %v962 = vadd.f32 %v882, %v929
      %v963 = vadd.f32 %v883, %v929
      %v964 = vadd.f32 %v884, %v929
      %v965 = vadd.f32 %v885, %v934
      %v966 = vadd.f32 %v886, %v934
      %v967 = vadd.f32 %v887, %v934
      %v968 = vadd.f32 %v888, %v934
      %v969 = vadd.f32 %v889, %v939
      %v970 = vadd.f32 %v890, %v939
      %v971 = vadd.f32 %v891, %v939
      %v972 = vadd.f32 %v892, %v939
      %v973 = vmax.f32 %v941, 0.0
      %v974 = vmax.f32 %v942, 0.0
      %v975 = vmax.f32 %v943, 0.0
      %v976 = vmax.f32 %v944, 0.0
      %v977 = vmax.f32 %v945, 0.0
      %v978 = vmax.f32 %v946, 0.0
      %v979 = vmax.f32 %v947, 0.0
      %v980 = vmax.f32 %v948, 0.0
      %v981 = vmax.f32 %v949, 0.0
      %v982 = vmax.f32 %v950, 0.0
      %v983 = vmax.f32 %v951, 0.0
      %v984 = vmax.f32 %v952, 0.0
      %v985 = vmax.f32 %v953, 0.0
      %v986 = vmax.f32 %v954, 0.0
      %v987 = vmax.f32 %v955, 0.0
      %v988 = vmax.f32 %v956, 0.0
      %v989 = vmax.f32 %v957, 0.0
      %v990 = vmax.f32 %v958, 0.0
      %v991 = vmax.f32 %v959, 0.0
      %v992 = vmax.f32 %v960, 0.0
      %v993 = vmax.f32 %v961, 0.0
      %v994 = vmax.f32 %v962, 0.0
      %v995 = vmax.f32 %v963, 0.0
      %v996 = vmax.f32 %v964, 0.0
      %v997 = vmax.f32 %v965, 0.0
      %v998 = vmax.f32 %v966, 0.0
      %v999 = vmax.f32 %v967, 0.0
      %v1000 = vmax.f32 %v968, 0.0
      %v1001 = vmax.f32 %v969, 0.0
      %v1002 = vmax.f32 %v970, 0.0
      %v1003 = vmax.f32 %v971, 0.0
      %v1004 = vmax.f32 %v972, 0.0
      %v1005 = vld [vmem:[%s3] sm:$0xf]
      %v1006 = vld [vmem:[%s3 + $0x4] sm:$0xf]
      %v1007 = vld [vmem:[%s3 + $0x8] sm:$0xf]
      %v1008 = vld [vmem:[%s3 + $0xc] sm:$0xf]
      %v1009 = vld [vmem:[%s3 + $0x10] sm:$0xf]
      %v1010 = vld [vmem:[%s3 + $0x14] sm:$0xf]
      %v1011 = vld [vmem:[%s3 + $0x18] sm:$0xf]
      %v1012 = vld [vmem:[%s3 + $0x1c] sm:$0xf]
      %v1013 = vld [vmem:[%s3 + $0x20] sm:$0xf]
      %v1014 = vld [vmem:[%s3 + $0x24] sm:$0xf]
      %v1015 = vld [vmem:[%s3 + $0x28] sm:$0xf]
      %v1016 = vld [vmem:[%s3 + $0x2c] sm:$0xf]
      %v1017 = vld [vmem:[%s3 + $0x30] sm:$0xf]
      %v1018 = vld [vmem:[%s3 + $0x34] sm:$0xf]
      %v1019 = vld [vmem:[%s3 + $0x38] sm:$0xf]
      %v1020 = vld [vmem:[%s3 + $0x3c] sm:$0xf]
      %v1021 = vpack.c.bf16 %v977, %v973
      %v1022 = vpack.c.bf16 %v978, %v974
      %v1023 = vpack.c.bf16 %v979, %v975
      %v1024 = vpack.c.bf16 %v980, %v976
      %v1025 = vpack.c.bf16 %v985, %v981
      %v1026 = vpack.c.bf16 %v986, %v982
      %v1027 = vpack.c.bf16 %v987, %v983
      %v1028 = vpack.c.bf16 %v988, %v984
      %v1029 = vpack.c.bf16 %v993, %v989
      %v1030 = vpack.c.bf16 %v994, %v990
      %v1031 = vpack.c.bf16 %v995, %v991
      %v1032 = vpack.c.bf16 %v996, %v992
      %v1033 = vpack.c.bf16 %v1001, %v997
      %v1034 = vpack.c.bf16 %v1002, %v998
      %v1035 = vpack.c.bf16 %v1003, %v999
      %v1036 = vpack.c.bf16 %v1004, %v1000
      %v1037 = vld [vmem:[%s4] sm:$0xff]
      %v1038 = vld [vmem:[%s4 + $0x8] sm:$0xff]
      %v1039 = vld [vmem:[%s4 + $0x10] sm:$0xff]
      %v1040 = vld [vmem:[%s4 + $0x18] sm:$0xff]
      %v1041 = vld [vmem:[%s4 + $0x20] sm:$0xff]
      %v1042 = vld [vmem:[%s4 + $0x28] sm:$0xff]
      %v1043 = vld [vmem:[%s4 + $0x30] sm:$0xff]
      %v1044 = vld [vmem:[%s4 + $0x38] sm:$0xff]
      %v1045 = vld [vmem:[%s4 + $0x40] sm:$0xff]
      %v1046 = vld [vmem:[%s4 + $0x48] sm:$0xff]
      %v1047 = vld [vmem:[%s4 + $0x50] sm:$0xff]
      %v1048 = vld [vmem:[%s4 + $0x58] sm:$0xff]
      %v1049 = vld [vmem:[%s4 + $0x60] sm:$0xff]
      %v1050 = vld [vmem:[%s4 + $0x68] sm:$0xff]
      %v1051 = vld [vmem:[%s4 + $0x70] sm:$0xff]
      %v1052 = vld [vmem:[%s4 + $0x78] sm:$0xff]
      %1054 = vset.pattern.permute.xlu0 0
      %1055 = vperm.xlu0 %1054, %v1037
      %v1056 = vpop.permute.xlu0 %1055
      %1059 = vset.pattern.permute.xlu0 0
      %1060 = vperm.xlu0 %1059, %v1038
      %v1061 = vpop.permute.xlu0 %1060
      %1064 = vset.pattern.permute.xlu0 0
      %1065 = vperm.xlu0 %1064, %v1039
      %v1066 = vpop.permute.xlu0 %1065
      %1069 = vset.pattern.permute.xlu0 0
      %1070 = vperm.xlu0 %1069, %v1040
      %v1071 = vpop.permute.xlu0 %1070
      %1074 = vset.pattern.permute.xlu0 0
      %1075 = vperm.xlu0 %1074, %v1041
      %v1076 = vpop.permute.xlu0 %1075
      %1079 = vset.pattern.permute.xlu0 0
      %1080 = vperm.xlu0 %1079, %v1042
      %v1081 = vpop.permute.xlu0 %1080
      %1084 = vset.pattern.permute.xlu0 0
      %1085 = vperm.xlu0 %1084, %v1043
      %v1086 = vpop.permute.xlu0 %1085
      %1089 = vset.pattern.permute.xlu0 0
      %1090 = vperm.xlu0 %1089, %v1044
      %v1091 = vpop.permute.xlu0 %1090
      %1094 = vset.pattern.permute.xlu0 0
      %1095 = vperm.xlu0 %1094, %v1045
      %v1096 = vpop.permute.xlu0 %1095
      %1099 = vset.pattern.permute.xlu0 0
      %1100 = vperm.xlu0 %1099, %v1046
      %v1101 = vpop.permute.xlu0 %1100
      %1104 = vset.pattern.permute.xlu0 0
      %1105 = vperm.xlu0 %1104, %v1047
      %v1106 = vpop.permute.xlu0 %1105
      %1109 = vset.pattern.permute.xlu0 0
      %1110 = vperm.xlu0 %1109, %v1048
      %v1111 = vpop.permute.xlu0 %1110
      %1114 = vset.pattern.permute.xlu0 0
      %1115 = vperm.xlu0 %1114, %v1049
      %v1116 = vpop.permute.xlu0 %1115
      %1119 = vset.pattern.permute.xlu0 0
      %1120 = vperm.xlu0 %1119, %v1050
      %v1121 = vpop.permute.xlu0 %1120
      %1124 = vset.pattern.permute.xlu0 0
      %1125 = vperm.xlu0 %1124, %v1051
      %v1126 = vpop.permute.xlu0 %1125
      %1129 = vset.pattern.permute.xlu0 0
      %1130 = vperm.xlu0 %1129, %v1052
      %v1131 = vpop.permute.xlu0 %1130
      %v1149 = vunpack.c.l.b16 %v1005
      %v1150 = vunpack.c.l.b16 %v1006
      %v1151 = vunpack.c.l.b16 %v1007
      %v1152 = vunpack.c.l.b16 %v1008
      %v1153 = vunpack.c.l.b16 %v1009
      %v1154 = vunpack.c.l.b16 %v1010
      %v1155 = vunpack.c.l.b16 %v1011
      %v1156 = vunpack.c.l.b16 %v1012
      %v1157 = vunpack.c.l.b16 %v1013
      %v1158 = vunpack.c.l.b16 %v1014
      %v1159 = vunpack.c.l.b16 %v1015
      %v1160 = vunpack.c.l.b16 %v1016
      %v1161 = vunpack.c.l.b16 %v1017
      %v1162 = vunpack.c.l.b16 %v1018
      %v1163 = vunpack.c.l.b16 %v1019
      %v1164 = vunpack.c.l.b16 %v1020
      %v1165 = vpack.c.b16 %v1150, %v1149
      %v1166 = vpack.c.b16 %v1152, %v1151
      %v1167 = vpack.c.b16 %v1154, %v1153
      %v1168 = vpack.c.b16 %v1156, %v1155
      %v1169 = vpack.c.b16 %v1158, %v1157
      %v1170 = vpack.c.b16 %v1160, %v1159
      %v1171 = vpack.c.b16 %v1162, %v1161
      %v1172 = vpack.c.b16 %v1164, %v1163
      %vm1173 = vcmask 523264
      %v1175 = vsel %vm1173, %v1165, 0
      %v1178 = vsel %vm1173, %v1166, 0
      %v1181 = vsel %vm1173, %v1167, 0
      %v1184 = vsel %vm1173, %v1168, 0
      %v1187 = vsel %vm1173, %v1169, 0
      %v1190 = vsel %vm1173, %v1170, 0
      %v1193 = vsel %vm1173, %v1171, 0
      %v1196 = vsel %vm1173, %v1172, 0
      %1198 = vmatprep.subr.bf16.mxu0 %v1022
      %1199 = vmatpush1.bf16.msra.mxu0 %v1021
      %1200 = vmatprep.subr.bf16.mxu0 %v1026
      %1201 = vmatpush1.bf16.msra.mxu0 %v1025
      %1202 = vmatprep.subr.bf16.mxu0 %v1030
      %1203 = vmatpush1.bf16.msra.mxu0 %v1029
      %1204 = vmatprep.subr.bf16.mxu0 %v1034
      %1205 = vmatpush1.bf16.msra.mxu0 %v1033
      %1206 = vmatprep.subr.bf16.mxu0 0
      %1207 = vmatpush1.bf16.msra.mxu0 0
      %1208 = vmatprep.subr.bf16.mxu0 0
      %1209 = vmatpush1.bf16.msra.mxu0 0
      %1210 = vmatprep.subr.bf16.mxu0 0
      %1211 = vmatpush1.bf16.msra.mxu0 0
      %1212 = vmatprep.subr.bf16.mxu0 0
      %1213 = vmatpush1.bf16.msra.mxu0 0
      %1214 = vmatprep.subr.bf16.mxu0 0
      %1215 = vmatpush1.bf16.msra.mxu0 0
      %1216 = vmatprep.subr.bf16.mxu0 0
      %1217 = vmatpush1.bf16.msra.mxu0 0
      %1218 = vmatprep.subr.bf16.mxu0 0
      %1219 = vmatpush1.bf16.msra.mxu0 0
      %1220 = vmatprep.subr.bf16.mxu0 0
      %1221 = vmatpush1.bf16.msra.mxu0 0
      %1222 = vmatprep.subr.bf16.mxu0 0
      %1223 = vmatpush1.bf16.msra.mxu0 0
      %1224 = vmatprep.subr.bf16.mxu0 0
      %1225 = vmatpush1.bf16.msra.mxu0 0
      %1226 = vmatprep.subr.bf16.mxu0 0
      %1227 = vmatpush1.bf16.msra.mxu0 0
      %1228 = vmatprep.subr.bf16.mxu0 0
      %1229 = vmatpush1.bf16.msra.mxu0 0
      %1230 = vmatprep.mubr.bf16.mxu0 0
      %1231 = vmatmul.mubr.bf16.gmra.mrb[0].mxu0 %v1175
      %v1232 = vpop.f32.mrb[0].mxu0
      %v1233 = vadd.f32 %v1056, %v1232
      %v1234 = vpop.f32.mrb[0].mxu0
      %v1235 = vadd.f32 %v1056, %v1234
      %v1236 = vpop.f32.mrb[0].mxu0
      %v1237 = vadd.f32 %v1061, %v1236
      %v1238 = vpop.f32.mrb[0].mxu0
      %v1239 = vadd.f32 %v1061, %v1238
      %1240 = vmatprep.mubr.bf16.mxu0 0
      %1241 = vmatmul.mubr.bf16.gmra.mrb[0].mxu0 %v1178
      %v1242 = vpop.f32.mrb[0].mxu0
      %v1243 = vadd.f32 %v1066, %v1242
      %v1244 = vpop.f32.mrb[0].mxu0
      %v1245 = vadd.f32 %v1066, %v1244
      %v1246 = vpop.f32.mrb[0].mxu0
      %v1247 = vadd.f32 %v1071, %v1246
      %v1248 = vpop.f32.mrb[0].mxu0
      %v1249 = vadd.f32 %v1071, %v1248
      %1250 = vmatprep.mubr.bf16.mxu0 0
      %1251 = vmatmul.mubr.bf16.gmra.mrb[0].mxu0 %v1181
      %v1252 = vpop.f32.mrb[0].mxu0
      %v1253 = vadd.f32 %v1076, %v1252
      %v1254 = vpop.f32.mrb[0].mxu0
      %v1255 = vadd.f32 %v1076, %v1254
      %v1256 = vpop.f32.mrb[0].mxu0
      %v1257 = vadd.f32 %v1081, %v1256
      %v1258 = vpop.f32.mrb[0].mxu0
      %v1259 = vadd.f32 %v1081, %v1258
      %1260 = vmatprep.mubr.bf16.mxu0 0
      %1261 = vmatmul.mubr.bf16.gmra.mrb[0].mxu0 %v1184
      %v1262 = vpop.f32.mrb[0].mxu0
      %v1263 = vadd.f32 %v1086, %v1262
      %v1264 = vpop.f32.mrb[0].mxu0
      %v1265 = vadd.f32 %v1086, %v1264
      %v1266 = vpop.f32.mrb[0].mxu0
      %v1267 = vadd.f32 %v1091, %v1266
      %v1268 = vpop.f32.mrb[0].mxu0
      %v1269 = vadd.f32 %v1091, %v1268
      %1270 = vmatprep.mubr.bf16.mxu0 0
      %1271 = vmatmul.mubr.bf16.gmra.mrb[0].mxu0 %v1187
      %v1272 = vpop.f32.mrb[0].mxu0
      %v1273 = vadd.f32 %v1096, %v1272
      %v1274 = vpop.f32.mrb[0].mxu0
      %v1275 = vadd.f32 %v1096, %v1274
      %v1276 = vpop.f32.mrb[0].mxu0
      %v1277 = vadd.f32 %v1101, %v1276
      %v1278 = vpop.f32.mrb[0].mxu0
      %v1279 = vadd.f32 %v1101, %v1278
      %1280 = vmatprep.mubr.bf16.mxu0 0
      %1281 = vmatmul.mubr.bf16.gmra.mrb[0].mxu0 %v1190
      %v1282 = vpop.f32.mrb[0].mxu0
      %v1283 = vadd.f32 %v1106, %v1282
      %v1284 = vpop.f32.mrb[0].mxu0
      %v1285 = vadd.f32 %v1106, %v1284
      %v1286 = vpop.f32.mrb[0].mxu0
      %v1287 = vadd.f32 %v1111, %v1286
      %v1288 = vpop.f32.mrb[0].mxu0
      %v1289 = vadd.f32 %v1111, %v1288
      %1290 = vmatprep.mubr.bf16.mxu0 0
      %1291 = vmatmul.mubr.bf16.gmra.mrb[0].mxu0 %v1193
      %v1292 = vpop.f32.mrb[0].mxu0
      %v1293 = vadd.f32 %v1116, %v1292
      %v1294 = vpop.f32.mrb[0].mxu0
      %v1295 = vadd.f32 %v1116, %v1294
      %v1296 = vpop.f32.mrb[0].mxu0
      %v1297 = vadd.f32 %v1121, %v1296
      %v1298 = vpop.f32.mrb[0].mxu0
      %v1299 = vadd.f32 %v1121, %v1298
      %1300 = vmatprep.mubr.bf16.mxu0 0
      %1301 = vmatmul.mubr.bf16.gmra.mrb[0].mxu0 %v1196
      %v1302 = vpop.f32.mrb[0].mxu0
      %v1303 = vadd.f32 %v1126, %v1302
      %v1304 = vpop.f32.mrb[0].mxu0
      %v1305 = vadd.f32 %v1126, %v1304
      %v1306 = vpop.f32.mrb[0].mxu0
      %v1307 = vadd.f32 %v1131, %v1306
      %v1308 = vpop.f32.mrb[0].mxu0
      %v1309 = vadd.f32 %v1131, %v1308
      %1310 = vdwg.mxu0
      %1311 = vmatprep.subr.bf16.mxu0 %v1024
      %1312 = vmatpush1.bf16.msra.mxu0 %v1023
      %1313 = vmatprep.subr.bf16.mxu0 %v1028
      %1314 = vmatpush1.bf16.msra.mxu0 %v1027
      %1315 = vmatprep.subr.bf16.mxu0 %v1032
      %1316 = vmatpush1.bf16.msra.mxu0 %v1031
      %1317 = vmatprep.subr.bf16.mxu0 %v1036
      %1318 = vmatpush1.bf16.msra.mxu0 %v1035
      %1319 = vmatprep.subr.bf16.mxu0 0
      %1320 = vmatpush1.bf16.msra.mxu0 0
      %1321 = vmatprep.subr.bf16.mxu0 0
      %1322 = vmatpush1.bf16.msra.mxu0 0
      %1323 = vmatprep.subr.bf16.mxu0 0
      %1324 = vmatpush1.bf16.msra.mxu0 0
      %1325 = vmatprep.subr.bf16.mxu0 0
      %1326 = vmatpush1.bf16.msra.mxu0 0
      %1327 = vmatprep.subr.bf16.mxu0 0
      %1328 = vmatpush1.bf16.msra.mxu0 0
      %1329 = vmatprep.subr.bf16.mxu0 0
      %1330 = vmatpush1.bf16.msra.mxu0 0
      %1331 = vmatprep.subr.bf16.mxu0 0
      %1332 = vmatpush1.bf16.msra.mxu0 0
      %1333 = vmatprep.subr.bf16.mxu0 0
      %1334 = vmatpush1.bf16.msra.mxu0 0
      %1335 = vmatprep.subr.bf16.mxu0 0
      %1336 = vmatpush1.bf16.msra.mxu0 0
      %1337 = vmatprep.subr.bf16.mxu0 0
      %1338 = vmatpush1.bf16.msra.mxu0 0
      %1339 = vmatprep.subr.bf16.mxu0 0
      %1340 = vmatpush1.bf16.msra.mxu0 0
      %1341 = vmatprep.subr.bf16.mxu0 0
      %1342 = vmatpush1.bf16.msra.mxu0 0
      %1343 = vmatprep.mubr.bf16.mxu0 0
      %1344 = vmatmul.mubr.bf16.gmra.mrb[0].mxu0 %v1175
      %v1345 = vpop.f32.mrb[0].mxu0
      %v1346 = vadd.f32 %v1056, %v1345
      %v1347 = vpop.f32.mrb[0].mxu0
      %v1348 = vadd.f32 %v1056, %v1347
      %v1349 = vpop.f32.mrb[0].mxu0
      %v1350 = vadd.f32 %v1061, %v1349
      %v1351 = vpop.f32.mrb[0].mxu0
      %v1352 = vadd.f32 %v1061, %v1351
      %1353 = vmatprep.mubr.bf16.mxu0 0
      %1354 = vmatmul.mubr.bf16.gmra.mrb[0].mxu0 %v1178
      %v1355 = vpop.f32.mrb[0].mxu0
      %v1356 = vadd.f32 %v1066, %v1355
      %v1357 = vpop.f32.mrb[0].mxu0
      %v1358 = vadd.f32 %v1066, %v1357
      %v1359 = vpop.f32.mrb[0].mxu0
      %v1360 = vadd.f32 %v1071, %v1359
      %v1361 = vpop.f32.mrb[0].mxu0
      %v1362 = vadd.f32 %v1071, %v1361
      %1363 = vmatprep.mubr.bf16.mxu0 0
      %1364 = vmatmul.mubr.bf16.gmra.mrb[0].mxu0 %v1181
      %v1365 = vpop.f32.mrb[0].mxu0
      %v1366 = vadd.f32 %v1076, %v1365
      %v1367 = vpop.f32.mrb[0].mxu0
      %v1368 = vadd.f32 %v1076, %v1367
      %v1369 = vpop.f32.mrb[0].mxu0
      %v1370 = vadd.f32 %v1081, %v1369
      %v1371 = vpop.f32.mrb[0].mxu0
      %v1372 = vadd.f32 %v1081, %v1371
      %1373 = vmatprep.mubr.bf16.mxu0 0
      %1374 = vmatmul.mubr.bf16.gmra.mrb[0].mxu0 %v1184
      %v1375 = vpop.f32.mrb[0].mxu0
      %v1376 = vadd.f32 %v1086, %v1375
      %v1377 = vpop.f32.mrb[0].mxu0
      %v1378 = vadd.f32 %v1086, %v1377
      %v1379 = vpop.f32.mrb[0].mxu0
      %v1380 = vadd.f32 %v1091, %v1379
      %v1381 = vpop.f32.mrb[0].mxu0
      %v1382 = vadd.f32 %v1091, %v1381
      %1383 = vmatprep.mubr.bf16.mxu0 0
      %1384 = vmatmul.mubr.bf16.gmra.mrb[0].mxu0 %v1187
      %v1385 = vpop.f32.mrb[0].mxu0
      %v1386 = vadd.f32 %v1096, %v1385
      %v1387 = vpop.f32.mrb[0].mxu0
      %v1388 = vadd.f32 %v1096, %v1387
      %v1389 = vpop.f32.mrb[0].mxu0
      %v1390 = vadd.f32 %v1101, %v1389
      %v1391 = vpop.f32.mrb[0].mxu0
      %v1392 = vadd.f32 %v1101, %v1391
      %1393 = vmatprep.mubr.bf16.mxu0 0
      %1394 = vmatmul.mubr.bf16.gmra.mrb[0].mxu0 %v1190
      %v1395 = vpop.f32.mrb[0].mxu0
      %v1396 = vadd.f32 %v1106, %v1395
      %v1397 = vpop.f32.mrb[0].mxu0
      %v1398 = vadd.f32 %v1106, %v1397
      %v1399 = vpop.f32.mrb[0].mxu0
      %v1400 = vadd.f32 %v1111, %v1399
      %v1401 = vpop.f32.mrb[0].mxu0
      %v1402 = vadd.f32 %v1111, %v1401
      %1403 = vmatprep.mubr.bf16.mxu0 0
      %1404 = vmatmul.mubr.bf16.gmra.mrb[0].mxu0 %v1193
      %v1405 = vpop.f32.mrb[0].mxu0
      %v1406 = vadd.f32 %v1116, %v1405
      %v1407 = vpop.f32.mrb[0].mxu0
      %v1408 = vadd.f32 %v1116, %v1407
      %v1409 = vpop.f32.mrb[0].mxu0
      %v1410 = vadd.f32 %v1121, %v1409
      %v1411 = vpop.f32.mrb[0].mxu0
      %v1412 = vadd.f32 %v1121, %v1411
      %1413 = vmatprep.mubr.bf16.mxu0 0
      %1414 = vmatmul.mubr.bf16.gmra.mrb[0].mxu0 %v1196
      %v1415 = vpop.f32.mrb[0].mxu0
      %v1416 = vadd.f32 %v1126, %v1415
      %v1417 = vpop.f32.mrb[0].mxu0
      %v1418 = vadd.f32 %v1126, %v1417
      %v1419 = vpop.f32.mrb[0].mxu0
      %v1420 = vadd.f32 %v1131, %v1419
      %v1421 = vpop.f32.mrb[0].mxu0
      %v1422 = vadd.f32 %v1131, %v1421
      %1423 = vdwg.mxu0
      %v1424 = vmax.f32 %v1233, 0.0
      %v1425 = vmax.f32 %v1235, 0.0
      %v1426 = vmax.f32 %v1346, 0.0
      %v1427 = vmax.f32 %v1348, 0.0
      %v1428 = vmax.f32 %v1237, 0.0
      %v1429 = vmax.f32 %v1239, 0.0
      %v1430 = vmax.f32 %v1350, 0.0
      %v1431 = vmax.f32 %v1352, 0.0
      %v1432 = vmax.f32 %v1243, 0.0
      %v1433 = vmax.f32 %v1245, 0.0
      %v1434 = vmax.f32 %v1356, 0.0
      %v1435 = vmax.f32 %v1358, 0.0
      %v1436 = vmax.f32 %v1247, 0.0
      %v1437 = vmax.f32 %v1249, 0.0
      %v1438 = vmax.f32 %v1360, 0.0
      %v1439 = vmax.f32 %v1362, 0.0
      %v1440 = vmax.f32 %v1253, 0.0
      %v1441 = vmax.f32 %v1255, 0.0
      %v1442 = vmax.f32 %v1366, 0.0
      %v1443 = vmax.f32 %v1368, 0.0
      %v1444 = vmax.f32 %v1257, 0.0
      %v1445 = vmax.f32 %v1259, 0.0
      %v1446 = vmax.f32 %v1370, 0.0
      %v1447 = vmax.f32 %v1372, 0.0
      %v1448 = vmax.f32 %v1263, 0.0
      %v1449 = vmax.f32 %v1265, 0.0
      %v1450 = vmax.f32 %v1376, 0.0
      %v1451 = vmax.f32 %v1378, 0.0
      %v1452 = vmax.f32 %v1267, 0.0
      %v1453 = vmax.f32 %v1269, 0.0
      %v1454 = vmax.f32 %v1380, 0.0
      %v1455 = vmax.f32 %v1382, 0.0
      %v1456 = vmax.f32 %v1273, 0.0
      %v1457 = vmax.f32 %v1275, 0.0
      %v1458 = vmax.f32 %v1386, 0.0
      %v1459 = vmax.f32 %v1388, 0.0
      %v1460 = vmax.f32 %v1277, 0.0
      %v1461 = vmax.f32 %v1279, 0.0
      %v1462 = vmax.f32 %v1390, 0.0
      %v1463 = vmax.f32 %v1392, 0.0
      %v1464 = vmax.f32 %v1283, 0.0
      %v1465 = vmax.f32 %v1285, 0.0
      %v1466 = vmax.f32 %v1396, 0.0
      %v1467 = vmax.f32 %v1398, 0.0
      %v1468 = vmax.f32 %v1287, 0.0
      %v1469 = vmax.f32 %v1289, 0.0
      %v1470 = vmax.f32 %v1400, 0.0
      %v1471 = vmax.f32 %v1402, 0.0
      %v1472 = vmax.f32 %v1293, 0.0
      %v1473 = vmax.f32 %v1295, 0.0
      %v1474 = vmax.f32 %v1406, 0.0
      %v1475 = vmax.f32 %v1408, 0.0
      %v1476 = vmax.f32 %v1297, 0.0
      %v1477 = vmax.f32 %v1299, 0.0
      %v1478 = vmax.f32 %v1410, 0.0
      %v1479 = vmax.f32 %v1412, 0.0
      %v1480 = vmax.f32 %v1303, 0.0
      %v1481 = vmax.f32 %v1305, 0.0
      %v1482 = vmax.f32 %v1416, 0.0
      %v1483 = vmax.f32 %v1418, 0.0
      %v1484 = vmax.f32 %v1307, 0.0
      %v1485 = vmax.f32 %v1309, 0.0
      %v1486 = vmax.f32 %v1420, 0.0
      %v1487 = vmax.f32 %v1422, 0.0
      %v1488 = vld [vmem:[%s5] sm:$0xf]
      %v1489 = vld [vmem:[%s5 + $0x4] sm:$0xf]
      %v1490 = vld [vmem:[%s5 + $0x8] sm:$0xf]
      %v1491 = vld [vmem:[%s5 + $0xc] sm:$0xf]
      %v1492 = vld [vmem:[%s5 + $0x10] sm:$0xf]
      %v1493 = vld [vmem:[%s5 + $0x14] sm:$0xf]
      %v1494 = vld [vmem:[%s5 + $0x18] sm:$0xf]
      %v1495 = vld [vmem:[%s5 + $0x1c] sm:$0xf]
      %v1496 = vld [vmem:[%s5 + $0x20] sm:$0xf]
      %v1497 = vld [vmem:[%s5 + $0x24] sm:$0xf]
      %v1498 = vld [vmem:[%s5 + $0x28] sm:$0xf]
      %v1499 = vld [vmem:[%s5 + $0x2c] sm:$0xf]
      %v1500 = vld [vmem:[%s5 + $0x30] sm:$0xf]
      %v1501 = vld [vmem:[%s5 + $0x34] sm:$0xf]
      %v1502 = vld [vmem:[%s5 + $0x38] sm:$0xf]
      %v1503 = vld [vmem:[%s5 + $0x3c] sm:$0xf]
      %v1504 = vpack.c.bf16 %v1428, %v1424
      %v1505 = vpack.c.bf16 %v1429, %v1425
      %v1506 = vpack.c.bf16 %v1430, %v1426
      %v1507 = vpack.c.bf16 %v1431, %v1427
      %v1508 = vpack.c.bf16 %v1436, %v1432
      %v1509 = vpack.c.bf16 %v1437, %v1433
      %v1510 = vpack.c.bf16 %v1438, %v1434
      %v1511 = vpack.c.bf16 %v1439, %v1435
      %v1512 = vpack.c.bf16 %v1444, %v1440
      %v1513 = vpack.c.bf16 %v1445, %v1441
      %v1514 = vpack.c.bf16 %v1446, %v1442
      %v1515 = vpack.c.bf16 %v1447, %v1443
      %v1516 = vpack.c.bf16 %v1452, %v1448
      %v1517 = vpack.c.bf16 %v1453, %v1449
      %v1518 = vpack.c.bf16 %v1454, %v1450
      %v1519 = vpack.c.bf16 %v1455, %v1451
      %v1520 = vpack.c.bf16 %v1460, %v1456
      %v1521 = vpack.c.bf16 %v1461, %v1457
      %v1522 = vpack.c.bf16 %v1462, %v1458
      %v1523 = vpack.c.bf16 %v1463, %v1459
      %v1524 = vpack.c.bf16 %v1468, %v1464
      %v1525 = vpack.c.bf16 %v1469, %v1465
      %v1526 = vpack.c.bf16 %v1470, %v1466
      %v1527 = vpack.c.bf16 %v1471, %v1467
      %v1528 = vpack.c.bf16 %v1476, %v1472
      %v1529 = vpack.c.bf16 %v1477, %v1473
      %v1530 = vpack.c.bf16 %v1478, %v1474
      %v1531 = vpack.c.bf16 %v1479, %v1475
      %v1532 = vpack.c.bf16 %v1484, %v1480
      %v1533 = vpack.c.bf16 %v1485, %v1481
      %v1534 = vpack.c.bf16 %v1486, %v1482
      %v1535 = vpack.c.bf16 %v1487, %v1483
      %v1536 = vld [vmem:[%s6] sm:$0xff]
      %v1537 = vld [vmem:[%s6 + $0x8] sm:$0xff]
      %v1538 = vld [vmem:[%s6 + $0x10] sm:$0xff]
      %v1539 = vld [vmem:[%s6 + $0x18] sm:$0xff]
      %v1540 = vld [vmem:[%s6 + $0x20] sm:$0xff]
      %v1541 = vld [vmem:[%s6 + $0x28] sm:$0xff]
      %v1542 = vld [vmem:[%s6 + $0x30] sm:$0xff]
      %v1543 = vld [vmem:[%s6 + $0x38] sm:$0xff]
      %v1544 = vld [vmem:[%s6 + $0x40] sm:$0xff]
      %v1545 = vld [vmem:[%s6 + $0x48] sm:$0xff]
      %v1546 = vld [vmem:[%s6 + $0x50] sm:$0xff]
      %v1547 = vld [vmem:[%s6 + $0x58] sm:$0xff]
      %v1548 = vld [vmem:[%s6 + $0x60] sm:$0xff]
      %v1549 = vld [vmem:[%s6 + $0x68] sm:$0xff]
      %v1550 = vld [vmem:[%s6 + $0x70] sm:$0xff]
      %v1551 = vld [vmem:[%s6 + $0x78] sm:$0xff]
      %1553 = vset.pattern.permute.xlu0 0
      %1554 = vperm.xlu0 %1553, %v1536
      %v1555 = vpop.permute.xlu0 %1554
      %1558 = vset.pattern.permute.xlu0 0
      %1559 = vperm.xlu0 %1558, %v1537
      %v1560 = vpop.permute.xlu0 %1559
      %1563 = vset.pattern.permute.xlu0 0
      %1564 = vperm.xlu0 %1563, %v1538
      %v1565 = vpop.permute.xlu0 %1564
      %1568 = vset.pattern.permute.xlu0 0
      %1569 = vperm.xlu0 %1568, %v1539
      %v1570 = vpop.permute.xlu0 %1569
      %1573 = vset.pattern.permute.xlu0 0
      %1574 = vperm.xlu0 %1573, %v1540
      %v1575 = vpop.permute.xlu0 %1574
      %1578 = vset.pattern.permute.xlu0 0
      %1579 = vperm.xlu0 %1578, %v1541
      %v1580 = vpop.permute.xlu0 %1579
      %1583 = vset.pattern.permute.xlu0 0
      %1584 = vperm.xlu0 %1583, %v1542
      %v1585 = vpop.permute.xlu0 %1584
      %1588 = vset.pattern.permute.xlu0 0
      %1589 = vperm.xlu0 %1588, %v1543
      %v1590 = vpop.permute.xlu0 %1589
      %1593 = vset.pattern.permute.xlu0 0
      %1594 = vperm.xlu0 %1593, %v1544
      %v1595 = vpop.permute.xlu0 %1594
      %1598 = vset.pattern.permute.xlu0 0
      %1599 = vperm.xlu0 %1598, %v1545
      %v1600 = vpop.permute.xlu0 %1599
      %1603 = vset.pattern.permute.xlu0 0
      %1604 = vperm.xlu0 %1603, %v1546
      %v1605 = vpop.permute.xlu0 %1604
      %1608 = vset.pattern.permute.xlu0 0
      %1609 = vperm.xlu0 %1608, %v1547
      %v1610 = vpop.permute.xlu0 %1609
      %1613 = vset.pattern.permute.xlu0 0
      %1614 = vperm.xlu0 %1613, %v1548
      %v1615 = vpop.permute.xlu0 %1614
      %1618 = vset.pattern.permute.xlu0 0
      %1619 = vperm.xlu0 %1618, %v1549
      %v1620 = vpop.permute.xlu0 %1619
      %1623 = vset.pattern.permute.xlu0 0
      %1624 = vperm.xlu0 %1623, %v1550
      %v1625 = vpop.permute.xlu0 %1624
      %1628 = vset.pattern.permute.xlu0 0
      %1629 = vperm.xlu0 %1628, %v1551
      %v1630 = vpop.permute.xlu0 %1629
      %v1648 = vunpack.c.l.b16 %v1488
      %v1649 = vunpack.c.l.b16 %v1489
      %v1650 = vunpack.c.l.b16 %v1490
      %v1651 = vunpack.c.l.b16 %v1491
      %v1652 = vunpack.c.l.b16 %v1492
      %v1653 = vunpack.c.l.b16 %v1493
      %v1654 = vunpack.c.l.b16 %v1494
      %v1655 = vunpack.c.l.b16 %v1495
      %v1656 = vunpack.c.l.b16 %v1496
      %v1657 = vunpack.c.l.b16 %v1497
      %v1658 = vunpack.c.l.b16 %v1498
      %v1659 = vunpack.c.l.b16 %v1499
      %v1660 = vunpack.c.l.b16 %v1500
      %v1661 = vunpack.c.l.b16 %v1501
      %v1662 = vunpack.c.l.b16 %v1502
      %v1663 = vunpack.c.l.b16 %v1503
      %v1664 = vpack.c.b16 %v1649, %v1648
      %v1665 = vpack.c.b16 %v1651, %v1650
      %v1666 = vpack.c.b16 %v1653, %v1652
      %v1667 = vpack.c.b16 %v1655, %v1654
      %v1668 = vpack.c.b16 %v1657, %v1656
      %v1669 = vpack.c.b16 %v1659, %v1658
      %v1670 = vpack.c.b16 %v1661, %v1660
      %v1671 = vpack.c.b16 %v1663, %v1662
      %1680 = vmatprep.subr.bf16.mxu0 %v1505
      %1681 = vmatpush1.bf16.msra.mxu0 %v1504
      %1682 = vmatprep.subr.bf16.mxu0 %v1509
      %1683 = vmatpush1.bf16.msra.mxu0 %v1508
      %1684 = vmatprep.subr.bf16.mxu0 %v1513
      %1685 = vmatpush1.bf16.msra.mxu0 %v1512
      %1686 = vmatprep.subr.bf16.mxu0 %v1517
      %1687 = vmatpush1.bf16.msra.mxu0 %v1516
      %1688 = vmatprep.subr.bf16.mxu0 %v1521
      %1689 = vmatpush1.bf16.msra.mxu0 %v1520
      %1690 = vmatprep.subr.bf16.mxu0 %v1525
      %1691 = vmatpush1.bf16.msra.mxu0 %v1524
      %1692 = vmatprep.subr.bf16.mxu0 %v1529
      %1693 = vmatpush1.bf16.msra.mxu0 %v1528
      %1694 = vmatprep.subr.bf16.mxu0 %v1533
      %1695 = vmatpush1.bf16.msra.mxu0 %v1532
      %1696 = vmatprep.subr.bf16.mxu0 0
      %1697 = vmatpush1.bf16.msra.mxu0 0
      %1698 = vmatprep.subr.bf16.mxu0 0
      %1699 = vmatpush1.bf16.msra.mxu0 0
      %1700 = vmatprep.subr.bf16.mxu0 0
      %1701 = vmatpush1.bf16.msra.mxu0 0
      %1702 = vmatprep.subr.bf16.mxu0 0
      %1703 = vmatpush1.bf16.msra.mxu0 0
      %1704 = vmatprep.subr.bf16.mxu0 0
      %1705 = vmatpush1.bf16.msra.mxu0 0
      %1706 = vmatprep.subr.bf16.mxu0 0
      %1707 = vmatpush1.bf16.msra.mxu0 0
      %1708 = vmatprep.subr.bf16.mxu0 0
      %1709 = vmatpush1.bf16.msra.mxu0 0
      %1710 = vmatprep.subr.bf16.mxu0 0
      %1711 = vmatpush1.bf16.msra.mxu0 0
      %1712 = vmatprep.mubr.bf16.mxu0 0
      %1713 = vmatmul.mubr.bf16.gmra.mrb[0].mxu0 %v1664
      %v1714 = vpop.f32.mrb[0].mxu0
      %v1715 = vadd.f32 %v1555, %v1714
      %v1716 = vpop.f32.mrb[0].mxu0
      %v1717 = vadd.f32 %v1555, %v1716
      %v1718 = vpop.f32.mrb[0].mxu0
      %v1719 = vadd.f32 %v1560, %v1718
      %v1720 = vpop.f32.mrb[0].mxu0
      %v1721 = vadd.f32 %v1560, %v1720
      %1722 = vmatprep.mubr.bf16.mxu0 0
      %1723 = vmatmul.mubr.bf16.gmra.mrb[0].mxu0 %v1665
      %v1724 = vpop.f32.mrb[0].mxu0
      %v1725 = vadd.f32 %v1565, %v1724
      %v1726 = vpop.f32.mrb[0].mxu0
      %v1727 = vadd.f32 %v1565, %v1726
      %v1728 = vpop.f32.mrb[0].mxu0
      %v1729 = vadd.f32 %v1570, %v1728
      %v1730 = vpop.f32.mrb[0].mxu0
      %v1731 = vadd.f32 %v1570, %v1730
      %1732 = vmatprep.mubr.bf16.mxu0 0
      %1733 = vmatmul.mubr.bf16.gmra.mrb[0].mxu0 %v1666
      %v1734 = vpop.f32.mrb[0].mxu0
      %v1735 = vadd.f32 %v1575, %v1734
      %v1736 = vpop.f32.mrb[0].mxu0
      %v1737 = vadd.f32 %v1575, %v1736
      %v1738 = vpop.f32.mrb[0].mxu0
      %v1739 = vadd.f32 %v1580, %v1738
      %v1740 = vpop.f32.mrb[0].mxu0
      %v1741 = vadd.f32 %v1580, %v1740
      %1742 = vmatprep.mubr.bf16.mxu0 0
      %1743 = vmatmul.mubr.bf16.gmra.mrb[0].mxu0 %v1667
      %v1744 = vpop.f32.mrb[0].mxu0
      %v1745 = vadd.f32 %v1585, %v1744
      %v1746 = vpop.f32.mrb[0].mxu0
      %v1747 = vadd.f32 %v1585, %v1746
      %v1748 = vpop.f32.mrb[0].mxu0
      %v1749 = vadd.f32 %v1590, %v1748
      %v1750 = vpop.f32.mrb[0].mxu0
      %v1751 = vadd.f32 %v1590, %v1750
      %1752 = vmatprep.mubr.bf16.mxu0 0
      %1753 = vmatmul.mubr.bf16.gmra.mrb[0].mxu0 %v1668
      %v1754 = vpop.f32.mrb[0].mxu0
      %v1755 = vadd.f32 %v1595, %v1754
      %v1756 = vpop.f32.mrb[0].mxu0
      %v1757 = vadd.f32 %v1595, %v1756
      %v1758 = vpop.f32.mrb[0].mxu0
      %v1759 = vadd.f32 %v1600, %v1758
      %v1760 = vpop.f32.mrb[0].mxu0
      %v1761 = vadd.f32 %v1600, %v1760
      %1762 = vmatprep.mubr.bf16.mxu0 0
      %1763 = vmatmul.mubr.bf16.gmra.mrb[0].mxu0 %v1669
      %v1764 = vpop.f32.mrb[0].mxu0
      %v1765 = vadd.f32 %v1605, %v1764
      %v1766 = vpop.f32.mrb[0].mxu0
      %v1767 = vadd.f32 %v1605, %v1766
      %v1768 = vpop.f32.mrb[0].mxu0
      %v1769 = vadd.f32 %v1610, %v1768
      %v1770 = vpop.f32.mrb[0].mxu0
      %v1771 = vadd.f32 %v1610, %v1770
      %1772 = vmatprep.mubr.bf16.mxu0 0
      %1773 = vmatmul.mubr.bf16.gmra.mrb[0].mxu0 %v1670
      %v1774 = vpop.f32.mrb[0].mxu0
      %v1775 = vadd.f32 %v1615, %v1774
      %v1776 = vpop.f32.mrb[0].mxu0
      %v1777 = vadd.f32 %v1615, %v1776
      %v1778 = vpop.f32.mrb[0].mxu0
      %v1779 = vadd.f32 %v1620, %v1778
      %v1780 = vpop.f32.mrb[0].mxu0
      %v1781 = vadd.f32 %v1620, %v1780
      %1782 = vmatprep.mubr.bf16.mxu0 0
      %1783 = vmatmul.mubr.bf16.gmra.mrb[0].mxu0 %v1671
      %v1784 = vpop.f32.mrb[0].mxu0
      %v1785 = vadd.f32 %v1625, %v1784
      %v1786 = vpop.f32.mrb[0].mxu0
      %v1787 = vadd.f32 %v1625, %v1786
      %v1788 = vpop.f32.mrb[0].mxu0
      %v1789 = vadd.f32 %v1630, %v1788
      %v1790 = vpop.f32.mrb[0].mxu0
      %v1791 = vadd.f32 %v1630, %v1790
      %1792 = vdwg.mxu0
      %1793 = vmatprep.subr.bf16.mxu0 %v1507
      %1794 = vmatpush1.bf16.msra.mxu0 %v1506
      %1795 = vmatprep.subr.bf16.mxu0 %v1511
      %1796 = vmatpush1.bf16.msra.mxu0 %v1510
      %1797 = vmatprep.subr.bf16.mxu0 %v1515
      %1798 = vmatpush1.bf16.msra.mxu0 %v1514
      %1799 = vmatprep.subr.bf16.mxu0 %v1519
      %1800 = vmatpush1.bf16.msra.mxu0 %v1518
      %1801 = vmatprep.subr.bf16.mxu0 %v1523
      %1802 = vmatpush1.bf16.msra.mxu0 %v1522
      %1803 = vmatprep.subr.bf16.mxu0 %v1527
      %1804 = vmatpush1.bf16.msra.mxu0 %v1526
      %1805 = vmatprep.subr.bf16.mxu0 %v1531
      %1806 = vmatpush1.bf16.msra.mxu0 %v1530
      %1807 = vmatprep.subr.bf16.mxu0 %v1535
      %1808 = vmatpush1.bf16.msra.mxu0 %v1534
      %1809 = vmatprep.subr.bf16.mxu0 0
      %1810 = vmatpush1.bf16.msra.mxu0 0
      %1811 = vmatprep.subr.bf16.mxu0 0
      %1812 = vmatpush1.bf16.msra.mxu0 0
      %1813 = vmatprep.subr.bf16.mxu0 0
      %1814 = vmatpush1.bf16.msra.mxu0 0
      %1815 = vmatprep.subr.bf16.mxu0 0
      %1816 = vmatpush1.bf16.msra.mxu0 0
      %1817 = vmatprep.subr.bf16.mxu0 0
      %1818 = vmatpush1.bf16.msra.mxu0 0
      %1819 = vmatprep.subr.bf16.mxu0 0
      %1820 = vmatpush1.bf16.msra.mxu0 0
      %1821 = vmatprep.subr.bf16.mxu0 0
      %1822 = vmatpush1.bf16.msra.mxu0 0
      %1823 = vmatprep.subr.bf16.mxu0 0
      %1824 = vmatpush1.bf16.msra.mxu0 0
      %1825 = vmatprep.mubr.bf16.mxu0 0
      %1826 = vmatmul.mubr.bf16.gmra.mrb[0].mxu0 %v1664
      %v1827 = vpop.f32.mrb[0].mxu0
      %v1828 = vadd.f32 %v1555, %v1827
      %v1829 = vpop.f32.mrb[0].mxu0
      %v1830 = vadd.f32 %v1555, %v1829
      %v1831 = vpop.f32.mrb[0].mxu0
      %v1832 = vadd.f32 %v1560, %v1831
      %v1833 = vpop.f32.mrb[0].mxu0
      %v1834 = vadd.f32 %v1560, %v1833
      %1835 = vmatprep.mubr.bf16.mxu0 0
      %1836 = vmatmul.mubr.bf16.gmra.mrb[0].mxu0 %v1665
      %v1837 = vpop.f32.mrb[0].mxu0
      %v1838 = vadd.f32 %v1565, %v1837
      %v1839 = vpop.f32.mrb[0].mxu0
      %v1840 = vadd.f32 %v1565, %v1839
      %v1841 = vpop.f32.mrb[0].mxu0
      %v1842 = vadd.f32 %v1570, %v1841
      %v1843 = vpop.f32.mrb[0].mxu0
      %v1844 = vadd.f32 %v1570, %v1843
      %1845 = vmatprep.mubr.bf16.mxu0 0
      %1846 = vmatmul.mubr.bf16.gmra.mrb[0].mxu0 %v1666
      %v1847 = vpop.f32.mrb[0].mxu0
      %v1848 = vadd.f32 %v1575, %v1847
      %v1849 = vpop.f32.mrb[0].mxu0
      %v1850 = vadd.f32 %v1575, %v1849
      %v1851 = vpop.f32.mrb[0].mxu0
      %v1852 = vadd.f32 %v1580, %v1851
      %v1853 = vpop.f32.mrb[0].mxu0
      %v1854 = vadd.f32 %v1580, %v1853
      %1855 = vmatprep.mubr.bf16.mxu0 0
      %1856 = vmatmul.mubr.bf16.gmra.mrb[0].mxu0 %v1667
      %v1857 = vpop.f32.mrb[0].mxu0
      %v1858 = vadd.f32 %v1585, %v1857
      %v1859 = vpop.f32.mrb[0].mxu0
      %v1860 = vadd.f32 %v1585, %v1859
      %v1861 = vpop.f32.mrb[0].mxu0
      %v1862 = vadd.f32 %v1590, %v1861
      %v1863 = vpop.f32.mrb[0].mxu0
      %v1864 = vadd.f32 %v1590, %v1863
      %1865 = vmatprep.mubr.bf16.mxu0 0
      %1866 = vmatmul.mubr.bf16.gmra.mrb[0].mxu0 %v1668
      %v1867 = vpop.f32.mrb[0].mxu0
      %v1868 = vadd.f32 %v1595, %v1867
      %v1869 = vpop.f32.mrb[0].mxu0
      %v1870 = vadd.f32 %v1595, %v1869
      %v1871 = vpop.f32.mrb[0].mxu0
      %v1872 = vadd.f32 %v1600, %v1871
      %v1873 = vpop.f32.mrb[0].mxu0
      %v1874 = vadd.f32 %v1600, %v1873
      %1875 = vmatprep.mubr.bf16.mxu0 0
      %1876 = vmatmul.mubr.bf16.gmra.mrb[0].mxu0 %v1669
      %v1877 = vpop.f32.mrb[0].mxu0
      %v1878 = vadd.f32 %v1605, %v1877
      %v1879 = vpop.f32.mrb[0].mxu0
      %v1880 = vadd.f32 %v1605, %v1879
      %v1881 = vpop.f32.mrb[0].mxu0
      %v1882 = vadd.f32 %v1610, %v1881
      %v1883 = vpop.f32.mrb[0].mxu0
      %v1884 = vadd.f32 %v1610, %v1883
      %1885 = vmatprep.mubr.bf16.mxu0 0
      %1886 = vmatmul.mubr.bf16.gmra.mrb[0].mxu0 %v1670
      %v1887 = vpop.f32.mrb[0].mxu0
      %v1888 = vadd.f32 %v1615, %v1887
      %v1889 = vpop.f32.mrb[0].mxu0
      %v1890 = vadd.f32 %v1615, %v1889
      %v1891 = vpop.f32.mrb[0].mxu0
      %v1892 = vadd.f32 %v1620, %v1891
      %v1893 = vpop.f32.mrb[0].mxu0
      %v1894 = vadd.f32 %v1620, %v1893
      %1895 = vmatprep.mubr.bf16.mxu0 0
      %1896 = vmatmul.mubr.bf16.gmra.mrb[0].mxu0 %v1671
      %v1897 = vpop.f32.mrb[0].mxu0
      %v1898 = vadd.f32 %v1625, %v1897
      %v1899 = vpop.f32.mrb[0].mxu0
      %v1900 = vadd.f32 %v1625, %v1899
      %v1901 = vpop.f32.mrb[0].mxu0
      %v1902 = vadd.f32 %v1630, %v1901
      %v1903 = vpop.f32.mrb[0].mxu0
      %v1904 = vadd.f32 %v1630, %v1903
      %1905 = vdwg.mxu0
      %v1906 = vmax.f32 %v1715, 0.0
      %v1907 = vmax.f32 %v1717, 0.0
      %v1908 = vmax.f32 %v1828, 0.0
      %v1909 = vmax.f32 %v1830, 0.0
      %v1910 = vmax.f32 %v1719, 0.0
      %v1911 = vmax.f32 %v1721, 0.0
      %v1912 = vmax.f32 %v1832, 0.0
      %v1913 = vmax.f32 %v1834, 0.0
      %v1914 = vmax.f32 %v1725, 0.0
      %v1915 = vmax.f32 %v1727, 0.0
      %v1916 = vmax.f32 %v1838, 0.0
      %v1917 = vmax.f32 %v1840, 0.0
      %v1918 = vmax.f32 %v1729, 0.0
      %v1919 = vmax.f32 %v1731, 0.0
      %v1920 = vmax.f32 %v1842, 0.0
      %v1921 = vmax.f32 %v1844, 0.0
      %v1922 = vmax.f32 %v1735, 0.0
      %v1923 = vmax.f32 %v1737, 0.0
      %v1924 = vmax.f32 %v1848, 0.0
      %v1925 = vmax.f32 %v1850, 0.0
      %v1926 = vmax.f32 %v1739, 0.0
      %v1927 = vmax.f32 %v1741, 0.0
      %v1928 = vmax.f32 %v1852, 0.0
      %v1929 = vmax.f32 %v1854, 0.0
      %v1930 = vmax.f32 %v1745, 0.0
      %v1931 = vmax.f32 %v1747, 0.0
      %v1932 = vmax.f32 %v1858, 0.0
      %v1933 = vmax.f32 %v1860, 0.0
      %v1934 = vmax.f32 %v1749, 0.0
      %v1935 = vmax.f32 %v1751, 0.0
      %v1936 = vmax.f32 %v1862, 0.0
      %v1937 = vmax.f32 %v1864, 0.0
      %v1938 = vmax.f32 %v1755, 0.0
      %v1939 = vmax.f32 %v1757, 0.0
      %v1940 = vmax.f32 %v1868, 0.0
      %v1941 = vmax.f32 %v1870, 0.0
      %v1942 = vmax.f32 %v1759, 0.0
      %v1943 = vmax.f32 %v1761, 0.0
      %v1944 = vmax.f32 %v1872, 0.0
      %v1945 = vmax.f32 %v1874, 0.0
      %v1946 = vmax.f32 %v1765, 0.0
      %v1947 = vmax.f32 %v1767, 0.0
      %v1948 = vmax.f32 %v1878, 0.0
      %v1949 = vmax.f32 %v1880, 0.0
      %v1950 = vmax.f32 %v1769, 0.0
      %v1951 = vmax.f32 %v1771, 0.0
      %v1952 = vmax.f32 %v1882, 0.0
      %v1953 = vmax.f32 %v1884, 0.0
      %v1954 = vmax.f32 %v1775, 0.0
      %v1955 = vmax.f32 %v1777, 0.0
      %v1956 = vmax.f32 %v1888, 0.0
      %v1957 = vmax.f32 %v1890, 0.0
      %v1958 = vmax.f32 %v1779, 0.0
      %v1959 = vmax.f32 %v1781, 0.0
      %v1960 = vmax.f32 %v1892, 0.0
      %v1961 = vmax.f32 %v1894, 0.0
      %v1962 = vmax.f32 %v1785, 0.0
      %v1963 = vmax.f32 %v1787, 0.0
      %v1964 = vmax.f32 %v1898, 0.0
      %v1965 = vmax.f32 %v1900, 0.0
      %v1966 = vmax.f32 %v1789, 0.0
      %v1967 = vmax.f32 %v1791, 0.0
      %v1968 = vmax.f32 %v1902, 0.0
      %v1969 = vmax.f32 %v1904, 0.0
      %v1970 = vld [vmem:[%s7] sm:$0xf]
      %v1971 = vld [vmem:[%s7 + $0x4] sm:$0xf]
      %v1972 = vld [vmem:[%s7 + $0x8] sm:$0xf]
      %v1973 = vld [vmem:[%s7 + $0xc] sm:$0xf]
      %v1974 = vld [vmem:[%s7 + $0x10] sm:$0xf]
      %v1975 = vld [vmem:[%s7 + $0x14] sm:$0xf]
      %v1976 = vld [vmem:[%s7 + $0x18] sm:$0xf]
      %v1977 = vld [vmem:[%s7 + $0x1c] sm:$0xf]
      %v1978 = vld [vmem:[%s7 + $0x20] sm:$0xf]
      %v1979 = vld [vmem:[%s7 + $0x24] sm:$0xf]
      %v1980 = vld [vmem:[%s7 + $0x28] sm:$0xf]
      %v1981 = vld [vmem:[%s7 + $0x2c] sm:$0xf]
      %v1982 = vld [vmem:[%s7 + $0x30] sm:$0xf]
      %v1983 = vld [vmem:[%s7 + $0x34] sm:$0xf]
      %v1984 = vld [vmem:[%s7 + $0x38] sm:$0xf]
      %v1985 = vld [vmem:[%s7 + $0x3c] sm:$0xf]
      %v1986 = vld [vmem:[%s7 + $0x40] sm:$0xf]
      %v1987 = vld [vmem:[%s7 + $0x44] sm:$0xf]
      %v1988 = vld [vmem:[%s7 + $0x48] sm:$0xf]
      %v1989 = vld [vmem:[%s7 + $0x4c] sm:$0xf]
      %v1990 = vld [vmem:[%s7 + $0x50] sm:$0xf]
      %v1991 = vld [vmem:[%s7 + $0x54] sm:$0xf]
      %v1992 = vld [vmem:[%s7 + $0x58] sm:$0xf]
      %v1993 = vld [vmem:[%s7 + $0x5c] sm:$0xf]
      %v1994 = vld [vmem:[%s7 + $0x60] sm:$0xf]
      %v1995 = vld [vmem:[%s7 + $0x64] sm:$0xf]
      %v1996 = vld [vmem:[%s7 + $0x68] sm:$0xf]
      %v1997 = vld [vmem:[%s7 + $0x6c] sm:$0xf]
      %v1998 = vld [vmem:[%s7 + $0x70] sm:$0xf]
      %v1999 = vld [vmem:[%s7 + $0x74] sm:$0xf]
      %v2000 = vld [vmem:[%s7 + $0x78] sm:$0xf]
      %v2001 = vld [vmem:[%s7 + $0x7c] sm:$0xf]
      %v2002 = vpack.c.bf16 %v1910, %v1906
      %v2003 = vpack.c.bf16 %v1911, %v1907
      %v2004 = vpack.c.bf16 %v1912, %v1908
      %v2005 = vpack.c.bf16 %v1913, %v1909
      %v2006 = vpack.c.bf16 %v1918, %v1914
      %v2007 = vpack.c.bf16 %v1919, %v1915
      %v2008 = vpack.c.bf16 %v1920, %v1916
      %v2009 = vpack.c.bf16 %v1921, %v1917
      %v2010 = vpack.c.bf16 %v1926, %v1922
      %v2011 = vpack.c.bf16 %v1927, %v1923
      %v2012 = vpack.c.bf16 %v1928, %v1924
      %v2013 = vpack.c.bf16 %v1929, %v1925
      %v2014 = vpack.c.bf16 %v1934, %v1930
      %v2015 = vpack.c.bf16 %v1935, %v1931
      %v2016 = vpack.c.bf16 %v1936, %v1932
      %v2017 = vpack.c.bf16 %v1937, %v1933
      %v2018 = vpack.c.bf16 %v1942, %v1938
      %v2019 = vpack.c.bf16 %v1943, %v1939
      %v2020 = vpack.c.bf16 %v1944, %v1940
      %v2021 = vpack.c.bf16 %v1945, %v1941
      %v2022 = vpack.c.bf16 %v1950, %v1946
      %v2023 = vpack.c.bf16 %v1951, %v1947
      %v2024 = vpack.c.bf16 %v1952, %v1948
      %v2025 = vpack.c.bf16 %v1953, %v1949
      %v2026 = vpack.c.bf16 %v1958, %v1954
      %v2027 = vpack.c.bf16 %v1959, %v1955
      %v2028 = vpack.c.bf16 %v1960, %v1956
      %v2029 = vpack.c.bf16 %v1961, %v1957
      %v2030 = vpack.c.bf16 %v1966, %v1962
      %v2031 = vpack.c.bf16 %v1967, %v1963
      %v2032 = vpack.c.bf16 %v1968, %v1964
      %v2033 = vpack.c.bf16 %v1969, %v1965
      %v2034 = vld [vmem:[%s8] sm:$0xff]
      %v2035 = vld [vmem:[%s8 + $0x8] sm:$0xff]
      %v2036 = vld [vmem:[%s8 + $0x10] sm:$0xff]
      %v2037 = vld [vmem:[%s8 + $0x18] sm:$0xff]
      %v2038 = vld [vmem:[%s8 + $0x20] sm:$0xff]
      %v2039 = vld [vmem:[%s8 + $0x28] sm:$0xff]
      %v2040 = vld [vmem:[%s8 + $0x30] sm:$0xff]
      %v2041 = vld [vmem:[%s8 + $0x38] sm:$0xff]
      %v2042 = vld [vmem:[%s8 + $0x40] sm:$0xff]
      %v2043 = vld [vmem:[%s8 + $0x48] sm:$0xff]
      %v2044 = vld [vmem:[%s8 + $0x50] sm:$0xff]
      %v2045 = vld [vmem:[%s8 + $0x58] sm:$0xff]
      %v2046 = vld [vmem:[%s8 + $0x60] sm:$0xff]
      %v2047 = vld [vmem:[%s8 + $0x68] sm:$0xff]
      %v2048 = vld [vmem:[%s8 + $0x70] sm:$0xff]
      %v2049 = vld [vmem:[%s8 + $0x78] sm:$0xff]
      %v2050 = vld [vmem:[%s8 + $0x80] sm:$0xff]
      %v2051 = vld [vmem:[%s8 + $0x88] sm:$0xff]
      %v2052 = vld [vmem:[%s8 + $0x90] sm:$0xff]
      %v2053 = vld [vmem:[%s8 + $0x98] sm:$0xff]
      %v2054 = vld [vmem:[%s8 + $0xa0] sm:$0xff]
      %v2055 = vld [vmem:[%s8 + $0xa8] sm:$0xff]
      %v2056 = vld [vmem:[%s8 + $0xb0] sm:$0xff]
      %v2057 = vld [vmem:[%s8 + $0xb8] sm:$0xff]
      %v2058 = vld [vmem:[%s8 + $0xc0] sm:$0xff]
      %v2059 = vld [vmem:[%s8 + $0xc8] sm:$0xff]
      %v2060 = vld [vmem:[%s8 + $0xd0] sm:$0xff]
      %v2061 = vld [vmem:[%s8 + $0xd8] sm:$0xff]
      %v2062 = vld [vmem:[%s8 + $0xe0] sm:$0xff]
      %v2063 = vld [vmem:[%s8 + $0xe8] sm:$0xff]
      %v2064 = vld [vmem:[%s8 + $0xf0] sm:$0xff]
      %v2065 = vld [vmem:[%s8 + $0xf8] sm:$0xff]
      %2067 = vset.pattern.permute.xlu0 0
      %2068 = vperm.xlu0 %2067, %v2034
      %v2069 = vpop.permute.xlu0 %2068
      %2072 = vset.pattern.permute.xlu0 0
      %2073 = vperm.xlu0 %2072, %v2035
      %v2074 = vpop.permute.xlu0 %2073
      %2077 = vset.pattern.permute.xlu0 0
      %2078 = vperm.xlu0 %2077, %v2036
      %v2079 = vpop.permute.xlu0 %2078
      %2082 = vset.pattern.permute.xlu0 0
      %2083 = vperm.xlu0 %2082, %v2037
      %v2084 = vpop.permute.xlu0 %2083
      %2087 = vset.pattern.permute.xlu0 0
      %2088 = vperm.xlu0 %2087, %v2038
      %v2089 = vpop.permute.xlu0 %2088
      %2092 = vset.pattern.permute.xlu0 0
      %2093 = vperm.xlu0 %2092, %v2039
      %v2094 = vpop.permute.xlu0 %2093
      %2097 = vset.pattern.permute.xlu0 0
      %2098 = vperm.xlu0 %2097, %v2040
      %v2099 = vpop.permute.xlu0 %2098
      %2102 = vset.pattern.permute.xlu0 0
      %2103 = vperm.xlu0 %2102, %v2041
      %v2104 = vpop.permute.xlu0 %2103
      %2107 = vset.pattern.permute.xlu0 0
      %2108 = vperm.xlu0 %2107, %v2042
      %v2109 = vpop.permute.xlu0 %2108
      %2112 = vset.pattern.permute.xlu0 0
      %2113 = vperm.xlu0 %2112, %v2043
      %v2114 = vpop.permute.xlu0 %2113
      %2117 = vset.pattern.permute.xlu0 0
      %2118 = vperm.xlu0 %2117, %v2044
      %v2119 = vpop.permute.xlu0 %2118
      %2122 = vset.pattern.permute.xlu0 0
      %2123 = vperm.xlu0 %2122, %v2045
      %v2124 = vpop.permute.xlu0 %2123
      %2127 = vset.pattern.permute.xlu0 0
      %2128 = vperm.xlu0 %2127, %v2046
      %v2129 = vpop.permute.xlu0 %2128
      %2132 = vset.pattern.permute.xlu0 0
      %2133 = vperm.xlu0 %2132, %v2047
      %v2134 = vpop.permute.xlu0 %2133
      %2137 = vset.pattern.permute.xlu0 0
      %2138 = vperm.xlu0 %2137, %v2048
      %v2139 = vpop.permute.xlu0 %2138
      %2142 = vset.pattern.permute.xlu0 0
      %2143 = vperm.xlu0 %2142, %v2049
      %v2144 = vpop.permute.xlu0 %2143
      %2147 = vset.pattern.permute.xlu0 0
      %2148 = vperm.xlu0 %2147, %v2050
      %v2149 = vpop.permute.xlu0 %2148
      %2152 = vset.pattern.permute.xlu0 0
      %2153 = vperm.xlu0 %2152, %v2051
      %v2154 = vpop.permute.xlu0 %2153
      %2157 = vset.pattern.permute.xlu0 0
      %2158 = vperm.xlu0 %2157, %v2052
      %v2159 = vpop.permute.xlu0 %2158
      %2162 = vset.pattern.permute.xlu0 0
      %2163 = vperm.xlu0 %2162, %v2053
      %v2164 = vpop.permute.xlu0 %2163
      %2167 = vset.pattern.permute.xlu0 0
      %2168 = vperm.xlu0 %2167, %v2054
      %v2169 = vpop.permute.xlu0 %2168
      %2172 = vset.pattern.permute.xlu0 0
      %2173 = vperm.xlu0 %2172, %v2055
      %v2174 = vpop.permute.xlu0 %2173
      %2177 = vset.pattern.permute.xlu0 0
      %2178 = vperm.xlu0 %2177, %v2056
      %v2179 = vpop.permute.xlu0 %2178
      %2182 = vset.pattern.permute.xlu0 0
      %2183 = vperm.xlu0 %2182, %v2057
      %v2184 = vpop.permute.xlu0 %2183
      %2187 = vset.pattern.permute.xlu0 0
      %2188 = vperm.xlu0 %2187, %v2058
      %v2189 = vpop.permute.xlu0 %2188
      %2192 = vset.pattern.permute.xlu0 0
      %2193 = vperm.xlu0 %2192, %v2059
      %v2194 = vpop.permute.xlu0 %2193
      %2197 = vset.pattern.permute.xlu0 0
      %2198 = vperm.xlu0 %2197, %v2060
      %v2199 = vpop.permute.xlu0 %2198
      %2202 = vset.pattern.permute.xlu0 0
      %2203 = vperm.xlu0 %2202, %v2061
      %v2204 = vpop.permute.xlu0 %2203
      %2207 = vset.pattern.permute.xlu0 0
      %2208 = vperm.xlu0 %2207, %v2062
      %v2209 = vpop.permute.xlu0 %2208
      %2212 = vset.pattern.permute.xlu0 0
      %2213 = vperm.xlu0 %2212, %v2063
      %v2214 = vpop.permute.xlu0 %2213
      %2217 = vset.pattern.permute.xlu0 0
      %2218 = vperm.xlu0 %2217, %v2064
      %v2219 = vpop.permute.xlu0 %2218
      %2222 = vset.pattern.permute.xlu0 0
      %2223 = vperm.xlu0 %2222, %v2065
      %v2224 = vpop.permute.xlu0 %2223
      %v2258 = vunpack.c.l.b16 %v1970
      %v2259 = vunpack.c.l.b16 %v1971
      %v2260 = vunpack.c.l.b16 %v1972
      %v2261 = vunpack.c.l.b16 %v1973
      %v2262 = vunpack.c.l.b16 %v1974
      %v2263 = vunpack.c.l.b16 %v1975
      %v2264 = vunpack.c.l.b16 %v1976
      %v2265 = vunpack.c.l.b16 %v1977
      %v2266 = vunpack.c.l.b16 %v1978
      %v2267 = vunpack.c.l.b16 %v1979
      %v2268 = vunpack.c.l.b16 %v1980
      %v2269 = vunpack.c.l.b16 %v1981
      %v2270 = vunpack.c.l.b16 %v1982
      %v2271 = vunpack.c.l.b16 %v1983
      %v2272 = vunpack.c.l.b16 %v1984
      %v2273 = vunpack.c.l.b16 %v1985
      %v2274 = vunpack.c.l.b16 %v1986
      %v2275 = vunpack.c.l.b16 %v1987
      %v2276 = vunpack.c.l.b16 %v1988
      %v2277 = vunpack.c.l.b16 %v1989
      %v2278 = vunpack.c.l.b16 %v1990
      %v2279 = vunpack.c.l.b16 %v1991
      %v2280 = vunpack.c.l.b16 %v1992
      %v2281 = vunpack.c.l.b16 %v1993
      %v2282 = vunpack.c.l.b16 %v1994
      %v2283 = vunpack.c.l.b16 %v1995
      %v2284 = vunpack.c.l.b16 %v1996
      %v2285 = vunpack.c.l.b16 %v1997
      %v2286 = vunpack.c.l.b16 %v1998
      %v2287 = vunpack.c.l.b16 %v1999
      %v2288 = vunpack.c.l.b16 %v2000
      %v2289 = vunpack.c.l.b16 %v2001
      %v2290 = vpack.c.b16 %v2259, %v2258
      %v2291 = vpack.c.b16 %v2261, %v2260
      %v2292 = vpack.c.b16 %v2263, %v2262
      %v2293 = vpack.c.b16 %v2265, %v2264
      %v2294 = vpack.c.b16 %v2267, %v2266
      %v2295 = vpack.c.b16 %v2269, %v2268
      %v2296 = vpack.c.b16 %v2271, %v2270
      %v2297 = vpack.c.b16 %v2273, %v2272
      %v2298 = vpack.c.b16 %v2275, %v2274
      %v2299 = vpack.c.b16 %v2277, %v2276
      %v2300 = vpack.c.b16 %v2279, %v2278
      %v2301 = vpack.c.b16 %v2281, %v2280
      %v2302 = vpack.c.b16 %v2283, %v2282
      %v2303 = vpack.c.b16 %v2285, %v2284
      %v2304 = vpack.c.b16 %v2287, %v2286
      %v2305 = vpack.c.b16 %v2289, %v2288
      %2322 = vmatprep.subr.bf16.mxu0 %v2003
      %2323 = vmatpush1.bf16.msra.mxu0 %v2002
      %2324 = vmatprep.subr.bf16.mxu0 %v2007
      %2325 = vmatpush1.bf16.msra.mxu0 %v2006
      %2326 = vmatprep.subr.bf16.mxu0 %v2011
      %2327 = vmatpush1.bf16.msra.mxu0 %v2010
      %2328 = vmatprep.subr.bf16.mxu0 %v2015
      %2329 = vmatpush1.bf16.msra.mxu0 %v2014
      %2330 = vmatprep.subr.bf16.mxu0 %v2019
      %2331 = vmatpush1.bf16.msra.mxu0 %v2018
      %2332 = vmatprep.subr.bf16.mxu0 %v2023
      %2333 = vmatpush1.bf16.msra.mxu0 %v2022
      %2334 = vmatprep.subr.bf16.mxu0 %v2027
      %2335 = vmatpush1.bf16.msra.mxu0 %v2026
      %2336 = vmatprep.subr.bf16.mxu0 %v2031
      %2337 = vmatpush1.bf16.msra.mxu0 %v2030
      %2338 = vmatprep.subr.bf16.mxu0 0
      %2339 = vmatpush1.bf16.msra.mxu0 0
      %2340 = vmatprep.subr.bf16.mxu0 0
      %2341 = vmatpush1.bf16.msra.mxu0 0
      %2342 = vmatprep.subr.bf16.mxu0 0
      %2343 = vmatpush1.bf16.msra.mxu0 0
      %2344 = vmatprep.subr.bf16.mxu0 0
      %2345 = vmatpush1.bf16.msra.mxu0 0
      %2346 = vmatprep.subr.bf16.mxu0 0
      %2347 = vmatpush1.bf16.msra.mxu0 0
      %2348 = vmatprep.subr.bf16.mxu0 0
      %2349 = vmatpush1.bf16.msra.mxu0 0
      %2350 = vmatprep.subr.bf16.mxu0 0
      %2351 = vmatpush1.bf16.msra.mxu0 0
      %2352 = vmatprep.subr.bf16.mxu0 0
      %2353 = vmatpush1.bf16.msra.mxu0 0
      %2354 = vmatprep.mubr.bf16.mxu0 0
      %2355 = vmatmul.mubr.bf16.gmra.mrb[0].mxu0 %v2290
      %v2356 = vpop.f32.mrb[0].mxu0
      %v2357 = vadd.f32 %v2069, %v2356
      %v2358 = vpop.f32.mrb[0].mxu0
      %v2359 = vadd.f32 %v2069, %v2358
      %v2360 = vpop.f32.mrb[0].mxu0
      %v2361 = vadd.f32 %v2074, %v2360
      %v2362 = vpop.f32.mrb[0].mxu0
      %v2363 = vadd.f32 %v2074, %v2362
      %2364 = vmatprep.mubr.bf16.mxu0 0
      %2365 = vmatmul.mubr.bf16.gmra.mrb[0].mxu0 %v2291
      %v2366 = vpop.f32.mrb[0].mxu0
      %v2367 = vadd.f32 %v2079, %v2366
      %v2368 = vpop.f32.mrb[0].mxu0
      %v2369 = vadd.f32 %v2079, %v2368
      %v2370 = vpop.f32.mrb[0].mxu0
      %v2371 = vadd.f32 %v2084, %v2370
      %v2372 = vpop.f32.mrb[0].mxu0
      %v2373 = vadd.f32 %v2084, %v2372
      %2374 = vmatprep.mubr.bf16.mxu0 0
      %2375 = vmatmul.mubr.bf16.gmra.mrb[0].mxu0 %v2292
      %v2376 = vpop.f32.mrb[0].mxu0
      %v2377 = vadd.f32 %v2089, %v2376
      %v2378 = vpop.f32.mrb[0].mxu0
      %v2379 = vadd.f32 %v2089, %v2378
      %v2380 = vpop.f32.mrb[0].mxu0
      %v2381 = vadd.f32 %v2094, %v2380
      %v2382 = vpop.f32.mrb[0].mxu0
      %v2383 = vadd.f32 %v2094, %v2382
      %2384 = vmatprep.mubr.bf16.mxu0 0
      %2385 = vmatmul.mubr.bf16.gmra.mrb[0].mxu0 %v2293
      %v2386 = vpop.f32.mrb[0].mxu0
      %v2387 = vadd.f32 %v2099, %v2386
      %v2388 = vpop.f32.mrb[0].mxu0
      %v2389 = vadd.f32 %v2099, %v2388
      %v2390 = vpop.f32.mrb[0].mxu0
      %v2391 = vadd.f32 %v2104, %v2390
      %v2392 = vpop.f32.mrb[0].mxu0
      %v2393 = vadd.f32 %v2104, %v2392
      %2394 = vmatprep.mubr.bf16.mxu0 0
      %2395 = vmatmul.mubr.bf16.gmra.mrb[0].mxu0 %v2294
      %v2396 = vpop.f32.mrb[0].mxu0
      %v2397 = vadd.f32 %v2109, %v2396
      %v2398 = vpop.f32.mrb[0].mxu0
      %v2399 = vadd.f32 %v2109, %v2398
      %v2400 = vpop.f32.mrb[0].mxu0
      %v2401 = vadd.f32 %v2114, %v2400
      %v2402 = vpop.f32.mrb[0].mxu0
      %v2403 = vadd.f32 %v2114, %v2402
      %2404 = vmatprep.mubr.bf16.mxu0 0
      %2405 = vmatmul.mubr.bf16.gmra.mrb[0].mxu0 %v2295
      %v2406 = vpop.f32.mrb[0].mxu0
      %v2407 = vadd.f32 %v2119, %v2406
      %v2408 = vpop.f32.mrb[0].mxu0
      %v2409 = vadd.f32 %v2119, %v2408
      %v2410 = vpop.f32.mrb[0].mxu0
      %v2411 = vadd.f32 %v2124, %v2410
      %v2412 = vpop.f32.mrb[0].mxu0
      %v2413 = vadd.f32 %v2124, %v2412
      %2414 = vmatprep.mubr.bf16.mxu0 0
      %2415 = vmatmul.mubr.bf16.gmra.mrb[0].mxu0 %v2296
      %v2416 = vpop.f32.mrb[0].mxu0
      %v2417 = vadd.f32 %v2129, %v2416
      %v2418 = vpop.f32.mrb[0].mxu0
      %v2419 = vadd.f32 %v2129, %v2418
      %v2420 = vpop.f32.mrb[0].mxu0
      %v2421 = vadd.f32 %v2134, %v2420
      %v2422 = vpop.f32.mrb[0].mxu0
      %v2423 = vadd.f32 %v2134, %v2422
      %2424 = vmatprep.mubr.bf16.mxu0 0
      %2425 = vmatmul.mubr.bf16.gmra.mrb[0].mxu0 %v2297
      %v2426 = vpop.f32.mrb[0].mxu0
      %v2427 = vadd.f32 %v2139, %v2426
      %v2428 = vpop.f32.mrb[0].mxu0
      %v2429 = vadd.f32 %v2139, %v2428
      %v2430 = vpop.f32.mrb[0].mxu0
      %v2431 = vadd.f32 %v2144, %v2430
      %v2432 = vpop.f32.mrb[0].mxu0
      %v2433 = vadd.f32 %v2144, %v2432
      %2434 = vmatprep.mubr.bf16.mxu0 0
      %2435 = vmatmul.mubr.bf16.gmra.mrb[0].mxu0 %v2298
      %v2436 = vpop.f32.mrb[0].mxu0
      %v2437 = vadd.f32 %v2149, %v2436
      %v2438 = vpop.f32.mrb[0].mxu0
      %v2439 = vadd.f32 %v2149, %v2438
      %v2440 = vpop.f32.mrb[0].mxu0
      %v2441 = vadd.f32 %v2154, %v2440
      %v2442 = vpop.f32.mrb[0].mxu0
      %v2443 = vadd.f32 %v2154, %v2442
      %2444 = vmatprep.mubr.bf16.mxu0 0
      %2445 = vmatmul.mubr.bf16.gmra.mrb[0].mxu0 %v2299
      %v2446 = vpop.f32.mrb[0].mxu0
      %v2447 = vadd.f32 %v2159, %v2446
      %v2448 = vpop.f32.mrb[0].mxu0
      %v2449 = vadd.f32 %v2159, %v2448
      %v2450 = vpop.f32.mrb[0].mxu0
      %v2451 = vadd.f32 %v2164, %v2450
      %v2452 = vpop.f32.mrb[0].mxu0
      %v2453 = vadd.f32 %v2164, %v2452
      %2454 = vmatprep.mubr.bf16.mxu0 0
      %2455 = vmatmul.mubr.bf16.gmra.mrb[0].mxu0 %v2300
      %v2456 = vpop.f32.mrb[0].mxu0
      %v2457 = vadd.f32 %v2169, %v2456
      %v2458 = vpop.f32.mrb[0].mxu0
      %v2459 = vadd.f32 %v2169, %v2458
      %v2460 = vpop.f32.mrb[0].mxu0
      %v2461 = vadd.f32 %v2174, %v2460
      %v2462 = vpop.f32.mrb[0].mxu0
      %v2463 = vadd.f32 %v2174, %v2462
      %2464 = vmatprep.mubr.bf16.mxu0 0
      %2465 = vmatmul.mubr.bf16.gmra.mrb[0].mxu0 %v2301
      %v2466 = vpop.f32.mrb[0].mxu0
      %v2467 = vadd.f32 %v2179, %v2466
      %v2468 = vpop.f32.mrb[0].mxu0
      %v2469 = vadd.f32 %v2179, %v2468
      %v2470 = vpop.f32.mrb[0].mxu0
      %v2471 = vadd.f32 %v2184, %v2470
      %v2472 = vpop.f32.mrb[0].mxu0
      %v2473 = vadd.f32 %v2184, %v2472
      %2474 = vmatprep.mubr.bf16.mxu0 0
      %2475 = vmatmul.mubr.bf16.gmra.mrb[0].mxu0 %v2302
      %v2476 = vpop.f32.mrb[0].mxu0
      %v2477 = vadd.f32 %v2189, %v2476
      %v2478 = vpop.f32.mrb[0].mxu0
      %v2479 = vadd.f32 %v2189, %v2478
      %v2480 = vpop.f32.mrb[0].mxu0
      %v2481 = vadd.f32 %v2194, %v2480
      %v2482 = vpop.f32.mrb[0].mxu0
      %v2483 = vadd.f32 %v2194, %v2482
      %2484 = vmatprep.mubr.bf16.mxu0 0
      %2485 = vmatmul.mubr.bf16.gmra.mrb[0].mxu0 %v2303
      %v2486 = vpop.f32.mrb[0].mxu0
      %v2487 = vadd.f32 %v2199, %v2486
      %v2488 = vpop.f32.mrb[0].mxu0
      %v2489 = vadd.f32 %v2199, %v2488
      %v2490 = vpop.f32.mrb[0].mxu0
      %v2491 = vadd.f32 %v2204, %v2490
      %v2492 = vpop.f32.mrb[0].mxu0
      %v2493 = vadd.f32 %v2204, %v2492
      %2494 = vmatprep.mubr.bf16.mxu0 0
      %2495 = vmatmul.mubr.bf16.gmra.mrb[0].mxu0 %v2304
      %v2496 = vpop.f32.mrb[0].mxu0
      %v2497 = vadd.f32 %v2209, %v2496
      %v2498 = vpop.f32.mrb[0].mxu0
      %v2499 = vadd.f32 %v2209, %v2498
      %v2500 = vpop.f32.mrb[0].mxu0
      %v2501 = vadd.f32 %v2214, %v2500
      %v2502 = vpop.f32.mrb[0].mxu0
      %v2503 = vadd.f32 %v2214, %v2502
      %2504 = vmatprep.mubr.bf16.mxu0 0
      %2505 = vmatmul.mubr.bf16.gmra.mrb[0].mxu0 %v2305
      %v2506 = vpop.f32.mrb[0].mxu0
      %v2507 = vadd.f32 %v2219, %v2506
      %v2508 = vpop.f32.mrb[0].mxu0
      %v2509 = vadd.f32 %v2219, %v2508
      %v2510 = vpop.f32.mrb[0].mxu0
      %v2511 = vadd.f32 %v2224, %v2510
      %v2512 = vpop.f32.mrb[0].mxu0
      %v2513 = vadd.f32 %v2224, %v2512
      %2514 = vdwg.mxu0
      %2515 = vmatprep.subr.bf16.mxu0 %v2005
      %2516 = vmatpush1.bf16.msra.mxu0 %v2004
      %2517 = vmatprep.subr.bf16.mxu0 %v2009
      %2518 = vmatpush1.bf16.msra.mxu0 %v2008
      %2519 = vmatprep.subr.bf16.mxu0 %v2013
      %2520 = vmatpush1.bf16.msra.mxu0 %v2012
      %2521 = vmatprep.subr.bf16.mxu0 %v2017
      %2522 = vmatpush1.bf16.msra.mxu0 %v2016
      %2523 = vmatprep.subr.bf16.mxu0 %v2021
      %2524 = vmatpush1.bf16.msra.mxu0 %v2020
      %2525 = vmatprep.subr.bf16.mxu0 %v2025
      %2526 = vmatpush1.bf16.msra.mxu0 %v2024
      %2527 = vmatprep.subr.bf16.mxu0 %v2029
      %2528 = vmatpush1.bf16.msra.mxu0 %v2028
      %2529 = vmatprep.subr.bf16.mxu0 %v2033
      %2530 = vmatpush1.bf16.msra.mxu0 %v2032
      %2531 = vmatprep.subr.bf16.mxu0 0
      %2532 = vmatpush1.bf16.msra.mxu0 0
      %2533 = vmatprep.subr.bf16.mxu0 0
      %2534 = vmatpush1.bf16.msra.mxu0 0
      %2535 = vmatprep.subr.bf16.mxu0 0
      %2536 = vmatpush1.bf16.msra.mxu0 0
      %2537 = vmatprep.subr.bf16.mxu0 0
      %2538 = vmatpush1.bf16.msra.mxu0 0
      %2539 = vmatprep.subr.bf16.mxu0 0
      %2540 = vmatpush1.bf16.msra.mxu0 0
      %2541 = vmatprep.subr.bf16.mxu0 0
      %2542 = vmatpush1.bf16.msra.mxu0 0
      %2543 = vmatprep.subr.bf16.mxu0 0
      %2544 = vmatpush1.bf16.msra.mxu0 0
      %2545 = vmatprep.subr.bf16.mxu0 0
      %2546 = vmatpush1.bf16.msra.mxu0 0
      %2547 = vmatprep.mubr.bf16.mxu0 0
      %2548 = vmatmul.mubr.bf16.gmra.mrb[0].mxu0 %v2290
      %v2549 = vpop.f32.mrb[0].mxu0
      %v2550 = vadd.f32 %v2069, %v2549
      %v2551 = vpop.f32.mrb[0].mxu0
      %v2552 = vadd.f32 %v2069, %v2551
      %v2553 = vpop.f32.mrb[0].mxu0
      %v2554 = vadd.f32 %v2074, %v2553
      %v2555 = vpop.f32.mrb[0].mxu0
      %v2556 = vadd.f32 %v2074, %v2555
      %2557 = vmatprep.mubr.bf16.mxu0 0
      %2558 = vmatmul.mubr.bf16.gmra.mrb[0].mxu0 %v2291
      %v2559 = vpop.f32.mrb[0].mxu0
      %v2560 = vadd.f32 %v2079, %v2559
      %v2561 = vpop.f32.mrb[0].mxu0
      %v2562 = vadd.f32 %v2079, %v2561
      %v2563 = vpop.f32.mrb[0].mxu0
      %v2564 = vadd.f32 %v2084, %v2563
      %v2565 = vpop.f32.mrb[0].mxu0
      %v2566 = vadd.f32 %v2084, %v2565
      %2567 = vmatprep.mubr.bf16.mxu0 0
      %2568 = vmatmul.mubr.bf16.gmra.mrb[0].mxu0 %v2292
      %v2569 = vpop.f32.mrb[0].mxu0
      %v2570 = vadd.f32 %v2089, %v2569
      %v2571 = vpop.f32.mrb[0].mxu0
      %v2572 = vadd.f32 %v2089, %v2571
      %v2573 = vpop.f32.mrb[0].mxu0
      %v2574 = vadd.f32 %v2094, %v2573
      %v2575 = vpop.f32.mrb[0].mxu0
      %v2576 = vadd.f32 %v2094, %v2575
      %2577 = vmatprep.mubr.bf16.mxu0 0
      %2578 = vmatmul.mubr.bf16.gmra.mrb[0].mxu0 %v2293
      %v2579 = vpop.f32.mrb[0].mxu0
      %v2580 = vadd.f32 %v2099, %v2579
      %v2581 = vpop.f32.mrb[0].mxu0
      %v2582 = vadd.f32 %v2099, %v2581
      %v2583 = vpop.f32.mrb[0].mxu0
      %v2584 = vadd.f32 %v2104, %v2583
      %v2585 = vpop.f32.mrb[0].mxu0
      %v2586 = vadd.f32 %v2104, %v2585
      %2587 = vmatprep.mubr.bf16.mxu0 0
      %2588 = vmatmul.mubr.bf16.gmra.mrb[0].mxu0 %v2294
      %v2589 = vpop.f32.mrb[0].mxu0
      %v2590 = vadd.f32 %v2109, %v2589
      %v2591 = vpop.f32.mrb[0].mxu0
      %v2592 = vadd.f32 %v2109, %v2591
      %v2593 = vpop.f32.mrb[0].mxu0
      %v2594 = vadd.f32 %v2114, %v2593
      %v2595 = vpop.f32.mrb[0].mxu0
      %v2596 = vadd.f32 %v2114, %v2595
      %2597 = vmatprep.mubr.bf16.mxu0 0
      %2598 = vmatmul.mubr.bf16.gmra.mrb[0].mxu0 %v2295
      %v2599 = vpop.f32.mrb[0].mxu0
      %v2600 = vadd.f32 %v2119, %v2599
      %v2601 = vpop.f32.mrb[0].mxu0
      %v2602 = vadd.f32 %v2119, %v2601
      %v2603 = vpop.f32.mrb[0].mxu0
      %v2604 = vadd.f32 %v2124, %v2603
      %v2605 = vpop.f32.mrb[0].mxu0
      %v2606 = vadd.f32 %v2124, %v2605
      %2607 = vmatprep.mubr.bf16.mxu0 0
      %2608 = vmatmul.mubr.bf16.gmra.mrb[0].mxu0 %v2296
      %v2609 = vpop.f32.mrb[0].mxu0
      %v2610 = vadd.f32 %v2129, %v2609
      %v2611 = vpop.f32.mrb[0].mxu0
      %v2612 = vadd.f32 %v2129, %v2611
      %v2613 = vpop.f32.mrb[0].mxu0
      %v2614 = vadd.f32 %v2134, %v2613
      %v2615 = vpop.f32.mrb[0].mxu0
      %v2616 = vadd.f32 %v2134, %v2615
      %2617 = vmatprep.mubr.bf16.mxu0 0
      %2618 = vmatmul.mubr.bf16.gmra.mrb[0].mxu0 %v2297
      %v2619 = vpop.f32.mrb[0].mxu0
      %v2620 = vadd.f32 %v2139, %v2619
      %v2621 = vpop.f32.mrb[0].mxu0
      %v2622 = vadd.f32 %v2139, %v2621
      %v2623 = vpop.f32.mrb[0].mxu0
      %v2624 = vadd.f32 %v2144, %v2623
      %v2625 = vpop.f32.mrb[0].mxu0
      %v2626 = vadd.f32 %v2144, %v2625
      %2627 = vmatprep.mubr.bf16.mxu0 0
      %2628 = vmatmul.mubr.bf16.gmra.mrb[0].mxu0 %v2298
      %v2629 = vpop.f32.mrb[0].mxu0
      %v2630 = vadd.f32 %v2149, %v2629
      %v2631 = vpop.f32.mrb[0].mxu0
      %v2632 = vadd.f32 %v2149, %v2631
      %v2633 = vpop.f32.mrb[0].mxu0
      %v2634 = vadd.f32 %v2154, %v2633
      %v2635 = vpop.f32.mrb[0].mxu0
      %v2636 = vadd.f32 %v2154, %v2635
      %2637 = vmatprep.mubr.bf16.mxu0 0
      %2638 = vmatmul.mubr.bf16.gmra.mrb[0].mxu0 %v2299
      %v2639 = vpop.f32.mrb[0].mxu0
      %v2640 = vadd.f32 %v2159, %v2639
      %v2641 = vpop.f32.mrb[0].mxu0
      %v2642 = vadd.f32 %v2159, %v2641
      %v2643 = vpop.f32.mrb[0].mxu0
      %v2644 = vadd.f32 %v2164, %v2643
      %v2645 = vpop.f32.mrb[0].mxu0
      %v2646 = vadd.f32 %v2164, %v2645
      %2647 = vmatprep.mubr.bf16.mxu0 0
      %2648 = vmatmul.mubr.bf16.gmra.mrb[0].mxu0 %v2300
      %v2649 = vpop.f32.mrb[0].mxu0
      %v2650 = vadd.f32 %v2169, %v2649
      %v2651 = vpop.f32.mrb[0].mxu0
      %v2652 = vadd.f32 %v2169, %v2651
      %v2653 = vpop.f32.mrb[0].mxu0
      %v2654 = vadd.f32 %v2174, %v2653
      %v2655 = vpop.f32.mrb[0].mxu0
      %v2656 = vadd.f32 %v2174, %v2655
      %2657 = vmatprep.mubr.bf16.mxu0 0
      %2658 = vmatmul.mubr.bf16.gmra.mrb[0].mxu0 %v2301
      %v2659 = vpop.f32.mrb[0].mxu0
      %v2660 = vadd.f32 %v2179, %v2659
      %v2661 = vpop.f32.mrb[0].mxu0
      %v2662 = vadd.f32 %v2179, %v2661
      %v2663 = vpop.f32.mrb[0].mxu0
      %v2664 = vadd.f32 %v2184, %v2663
      %v2665 = vpop.f32.mrb[0].mxu0
      %v2666 = vadd.f32 %v2184, %v2665
      %2667 = vmatprep.mubr.bf16.mxu0 0
      %2668 = vmatmul.mubr.bf16.gmra.mrb[0].mxu0 %v2302
      %v2669 = vpop.f32.mrb[0].mxu0
      %v2670 = vadd.f32 %v2189, %v2669
      %v2671 = vpop.f32.mrb[0].mxu0
      %v2672 = vadd.f32 %v2189, %v2671
      %v2673 = vpop.f32.mrb[0].mxu0
      %v2674 = vadd.f32 %v2194, %v2673
      %v2675 = vpop.f32.mrb[0].mxu0
      %v2676 = vadd.f32 %v2194, %v2675
      %2677 = vmatprep.mubr.bf16.mxu0 0
      %2678 = vmatmul.mubr.bf16.gmra.mrb[0].mxu0 %v2303
      %v2679 = vpop.f32.mrb[0].mxu0
      %v2680 = vadd.f32 %v2199, %v2679
      %v2681 = vpop.f32.mrb[0].mxu0
      %v2682 = vadd.f32 %v2199, %v2681
      %v2683 = vpop.f32.mrb[0].mxu0
      %v2684 = vadd.f32 %v2204, %v2683
      %v2685 = vpop.f32.mrb[0].mxu0
      %v2686 = vadd.f32 %v2204, %v2685
      %2687 = vmatprep.mubr.bf16.mxu0 0
      %2688 = vmatmul.mubr.bf16.gmra.mrb[0].mxu0 %v2304
      %v2689 = vpop.f32.mrb[0].mxu0
      %v2690 = vadd.f32 %v2209, %v2689
      %v2691 = vpop.f32.mrb[0].mxu0
      %v2692 = vadd.f32 %v2209, %v2691
      %v2693 = vpop.f32.mrb[0].mxu0
      %v2694 = vadd.f32 %v2214, %v2693
      %v2695 = vpop.f32.mrb[0].mxu0
      %v2696 = vadd.f32 %v2214, %v2695
      %2697 = vmatprep.mubr.bf16.mxu0 0
      %2698 = vmatmul.mubr.bf16.gmra.mrb[0].mxu0 %v2305
      %v2699 = vpop.f32.mrb[0].mxu0
      %v2700 = vadd.f32 %v2219, %v2699
      %v2701 = vpop.f32.mrb[0].mxu0
      %v2702 = vadd.f32 %v2219, %v2701
      %v2703 = vpop.f32.mrb[0].mxu0
      %v2704 = vadd.f32 %v2224, %v2703
      %v2705 = vpop.f32.mrb[0].mxu0
      %v2706 = vadd.f32 %v2224, %v2705
      %2707 = vdwg.mxu0
      %v2708 = vmax.f32 %v2357, 0.0
      %v2709 = vmax.f32 %v2359, 0.0
      %v2710 = vmax.f32 %v2550, 0.0
      %v2711 = vmax.f32 %v2552, 0.0
      %v2712 = vmax.f32 %v2361, 0.0
      %v2713 = vmax.f32 %v2363, 0.0
      %v2714 = vmax.f32 %v2554, 0.0
      %v2715 = vmax.f32 %v2556, 0.0
      %v2716 = vmax.f32 %v2367, 0.0
      %v2717 = vmax.f32 %v2369, 0.0
      %v2718 = vmax.f32 %v2560, 0.0
      %v2719 = vmax.f32 %v2562, 0.0
      %v2720 = vmax.f32 %v2371, 0.0
      %v2721 = vmax.f32 %v2373, 0.0
      %v2722 = vmax.f32 %v2564, 0.0
      %v2723 = vmax.f32 %v2566, 0.0
      %v2724 = vmax.f32 %v2377, 0.0
      %v2725 = vmax.f32 %v2379, 0.0
      %v2726 = vmax.f32 %v2570, 0.0
      %v2727 = vmax.f32 %v2572, 0.0
      %v2728 = vmax.f32 %v2381, 0.0
      %v2729 = vmax.f32 %v2383, 0.0
      %v2730 = vmax.f32 %v2574, 0.0
      %v2731 = vmax.f32 %v2576, 0.0
      %v2732 = vmax.f32 %v2387, 0.0
      %v2733 = vmax.f32 %v2389, 0.0
      %v2734 = vmax.f32 %v2580, 0.0
      %v2735 = vmax.f32 %v2582, 0.0
      %v2736 = vmax.f32 %v2391, 0.0
      %v2737 = vmax.f32 %v2393, 0.0
      %v2738 = vmax.f32 %v2584, 0.0
      %v2739 = vmax.f32 %v2586, 0.0
      %v2740 = vmax.f32 %v2397, 0.0
      %v2741 = vmax.f32 %v2399, 0.0
      %v2742 = vmax.f32 %v2590, 0.0
      %v2743 = vmax.f32 %v2592, 0.0
      %v2744 = vmax.f32 %v2401, 0.0
      %v2745 = vmax.f32 %v2403, 0.0
      %v2746 = vmax.f32 %v2594, 0.0
      %v2747 = vmax.f32 %v2596, 0.0
      %v2748 = vmax.f32 %v2407, 0.0
      %v2749 = vmax.f32 %v2409, 0.0
      %v2750 = vmax.f32 %v2600, 0.0
      %v2751 = vmax.f32 %v2602, 0.0
      %v2752 = vmax.f32 %v2411, 0.0
      %v2753 = vmax.f32 %v2413, 0.0
      %v2754 = vmax.f32 %v2604, 0.0
      %v2755 = vmax.f32 %v2606, 0.0
      %v2756 = vmax.f32 %v2417, 0.0
      %v2757 = vmax.f32 %v2419, 0.0
      %v2758 = vmax.f32 %v2610, 0.0
      %v2759 = vmax.f32 %v2612, 0.0
      %v2760 = vmax.f32 %v2421, 0.0
      %v2761 = vmax.f32 %v2423, 0.0
      %v2762 = vmax.f32 %v2614, 0.0
      %v2763 = vmax.f32 %v2616, 0.0
      %v2764 = vmax.f32 %v2427, 0.0
      %v2765 = vmax.f32 %v2429, 0.0
      %v2766 = vmax.f32 %v2620, 0.0
      %v2767 = vmax.f32 %v2622, 0.0
      %v2768 = vmax.f32 %v2431, 0.0
      %v2769 = vmax.f32 %v2433, 0.0
      %v2770 = vmax.f32 %v2624, 0.0
      %v2771 = vmax.f32 %v2626, 0.0
      %v2772 = vmax.f32 %v2437, 0.0
      %v2773 = vmax.f32 %v2439, 0.0
      %v2774 = vmax.f32 %v2630, 0.0
      %v2775 = vmax.f32 %v2632, 0.0
      %v2776 = vmax.f32 %v2441, 0.0
      %v2777 = vmax.f32 %v2443, 0.0
      %v2778 = vmax.f32 %v2634, 0.0
      %v2779 = vmax.f32 %v2636, 0.0
      %v2780 = vmax.f32 %v2447, 0.0
      %v2781 = vmax.f32 %v2449, 0.0
      %v2782 = vmax.f32 %v2640, 0.0
      %v2783 = vmax.f32 %v2642, 0.0
      %v2784 = vmax.f32 %v2451, 0.0
      %v2785 = vmax.f32 %v2453, 0.0
      %v2786 = vmax.f32 %v2644, 0.0
      %v2787 = vmax.f32 %v2646, 0.0
      %v2788 = vmax.f32 %v2457, 0.0
      %v2789 = vmax.f32 %v2459, 0.0
      %v2790 = vmax.f32 %v2650, 0.0
      %v2791 = vmax.f32 %v2652, 0.0
      %v2792 = vmax.f32 %v2461, 0.0
      %v2793 = vmax.f32 %v2463, 0.0
      %v2794 = vmax.f32 %v2654, 0.0
      %v2795 = vmax.f32 %v2656, 0.0
      %v2796 = vmax.f32 %v2467, 0.0
      %v2797 = vmax.f32 %v2469, 0.0
      %v2798 = vmax.f32 %v2660, 0.0
      %v2799 = vmax.f32 %v2662, 0.0
      %v2800 = vmax.f32 %v2471, 0.0
      %v2801 = vmax.f32 %v2473, 0.0
      %v2802 = vmax.f32 %v2664, 0.0
      %v2803 = vmax.f32 %v2666, 0.0
      %v2804 = vmax.f32 %v2477, 0.0
      %v2805 = vmax.f32 %v2479, 0.0
      %v2806 = vmax.f32 %v2670, 0.0
      %v2807 = vmax.f32 %v2672, 0.0
      %v2808 = vmax.f32 %v2481, 0.0
      %v2809 = vmax.f32 %v2483, 0.0
      %v2810 = vmax.f32 %v2674, 0.0
      %v2811 = vmax.f32 %v2676, 0.0
      %v2812 = vmax.f32 %v2487, 0.0
      %v2813 = vmax.f32 %v2489, 0.0
      %v2814 = vmax.f32 %v2680, 0.0
      %v2815 = vmax.f32 %v2682, 0.0
      %v2816 = vmax.f32 %v2491, 0.0
      %v2817 = vmax.f32 %v2493, 0.0
      %v2818 = vmax.f32 %v2684, 0.0
      %v2819 = vmax.f32 %v2686, 0.0
      %v2820 = vmax.f32 %v2497, 0.0
      %v2821 = vmax.f32 %v2499, 0.0
      %v2822 = vmax.f32 %v2690, 0.0
      %v2823 = vmax.f32 %v2692, 0.0
      %v2824 = vmax.f32 %v2501, 0.0
      %v2825 = vmax.f32 %v2503, 0.0
      %v2826 = vmax.f32 %v2694, 0.0
      %v2827 = vmax.f32 %v2696, 0.0
      %v2828 = vmax.f32 %v2507, 0.0
      %v2829 = vmax.f32 %v2509, 0.0
      %v2830 = vmax.f32 %v2700, 0.0
      %v2831 = vmax.f32 %v2702, 0.0
      %v2832 = vmax.f32 %v2511, 0.0
      %v2833 = vmax.f32 %v2513, 0.0
      %v2834 = vmax.f32 %v2704, 0.0
      %v2835 = vmax.f32 %v2706, 0.0
      %v2836 = vld [vmem:[%s9] sm:$0xff]
      %v2837 = vld [vmem:[%s9 + $0x8] sm:$0xff]
      %v2838 = vld [vmem:[%s9 + $0x10] sm:$0xff]
      %v2839 = vld [vmem:[%s9 + $0x18] sm:$0xff]
      %v2840 = vld [vmem:[%s9 + $0x20] sm:$0xff]
      %v2841 = vld [vmem:[%s9 + $0x28] sm:$0xff]
      %v2842 = vld [vmem:[%s9 + $0x30] sm:$0xff]
      %v2843 = vld [vmem:[%s9 + $0x38] sm:$0xff]
      %v2844 = vld [vmem:[%s9 + $0x40] sm:$0xff]
      %v2845 = vld [vmem:[%s9 + $0x48] sm:$0xff]
      %v2846 = vld [vmem:[%s9 + $0x50] sm:$0xff]
      %v2847 = vld [vmem:[%s9 + $0x58] sm:$0xff]
      %v2848 = vld [vmem:[%s9 + $0x60] sm:$0xff]
      %v2849 = vld [vmem:[%s9 + $0x68] sm:$0xff]
      %v2850 = vld [vmem:[%s9 + $0x70] sm:$0xff]
      %v2851 = vld [vmem:[%s9 + $0x78] sm:$0xff]
      %v2852 = vld [vmem:[%s9 + $0x80] sm:$0xff]
      %v2853 = vld [vmem:[%s9 + $0x88] sm:$0xff]
      %v2854 = vld [vmem:[%s9 + $0x90] sm:$0xff]
      %v2855 = vld [vmem:[%s9 + $0x98] sm:$0xff]
      %v2856 = vld [vmem:[%s9 + $0xa0] sm:$0xff]
      %v2857 = vld [vmem:[%s9 + $0xa8] sm:$0xff]
      %v2858 = vld [vmem:[%s9 + $0xb0] sm:$0xff]
      %v2859 = vld [vmem:[%s9 + $0xb8] sm:$0xff]
      %v2860 = vld [vmem:[%s9 + $0xc0] sm:$0xff]
      %v2861 = vld [vmem:[%s9 + $0xc8] sm:$0xff]
      %v2862 = vld [vmem:[%s9 + $0xd0] sm:$0xff]
      %v2863 = vld [vmem:[%s9 + $0xd8] sm:$0xff]
      %v2864 = vld [vmem:[%s9 + $0xe0] sm:$0xff]
      %v2865 = vld [vmem:[%s9 + $0xe8] sm:$0xff]
      %v2866 = vld [vmem:[%s9 + $0xf0] sm:$0xff]
      %v2867 = vld [vmem:[%s9 + $0xf8] sm:$0xff]
      %v2868 = vld [vmem:[%s9 + $0x100] sm:$0xff]
      %v2869 = vld [vmem:[%s9 + $0x108] sm:$0xff]
      %v2870 = vld [vmem:[%s9 + $0x110] sm:$0xff]
      %v2871 = vld [vmem:[%s9 + $0x118] sm:$0xff]
      %v2872 = vld [vmem:[%s9 + $0x120] sm:$0xff]
      %v2873 = vld [vmem:[%s9 + $0x128] sm:$0xff]
      %v2874 = vld [vmem:[%s9 + $0x130] sm:$0xff]
      %v2875 = vld [vmem:[%s9 + $0x138] sm:$0xff]
      %v2876 = vld [vmem:[%s9 + $0x140] sm:$0xff]
      %v2877 = vld [vmem:[%s9 + $0x148] sm:$0xff]
      %v2878 = vld [vmem:[%s9 + $0x150] sm:$0xff]
      %v2879 = vld [vmem:[%s9 + $0x158] sm:$0xff]
      %v2880 = vld [vmem:[%s9 + $0x160] sm:$0xff]
      %v2881 = vld [vmem:[%s9 + $0x168] sm:$0xff]
      %v2882 = vld [vmem:[%s9 + $0x170] sm:$0xff]
      %v2883 = vld [vmem:[%s9 + $0x178] sm:$0xff]
      %v2884 = vld [vmem:[%s9 + $0x180] sm:$0xff]
      %v2885 = vld [vmem:[%s9 + $0x188] sm:$0xff]
      %v2886 = vld [vmem:[%s9 + $0x190] sm:$0xff]
      %v2887 = vld [vmem:[%s9 + $0x198] sm:$0xff]
      %v2888 = vld [vmem:[%s9 + $0x1a0] sm:$0xff]
      %v2889 = vld [vmem:[%s9 + $0x1a8] sm:$0xff]
      %v2890 = vld [vmem:[%s9 + $0x1b0] sm:$0xff]
      %v2891 = vld [vmem:[%s9 + $0x1b8] sm:$0xff]
      %v2892 = vld [vmem:[%s9 + $0x1c0] sm:$0xff]
      %v2893 = vld [vmem:[%s9 + $0x1c8] sm:$0xff]
      %v2894 = vld [vmem:[%s9 + $0x1d0] sm:$0xff]
      %v2895 = vld [vmem:[%s9 + $0x1d8] sm:$0xff]
      %v2896 = vld [vmem:[%s9 + $0x1e0] sm:$0xff]
      %v2897 = vld [vmem:[%s9 + $0x1e8] sm:$0xff]
      %v2898 = vld [vmem:[%s9 + $0x1f0] sm:$0xff]
      %v2899 = vld [vmem:[%s9 + $0x1f8] sm:$0xff]
      %v2900 = vpack.c.bf16 %v2712, %v2708
      %v2901 = vpack.c.bf16 %v2713, %v2709
      %v2902 = vpack.c.bf16 %v2714, %v2710
      %v2903 = vpack.c.bf16 %v2715, %v2711
      %v2904 = vpack.c.bf16 %v2720, %v2716
      %v2905 = vpack.c.bf16 %v2721, %v2717
      %v2906 = vpack.c.bf16 %v2722, %v2718
      %v2907 = vpack.c.bf16 %v2723, %v2719
      %v2908 = vpack.c.bf16 %v2728, %v2724
      %v2909 = vpack.c.bf16 %v2729, %v2725
      %v2910 = vpack.c.bf16 %v2730, %v2726
      %v2911 = vpack.c.bf16 %v2731, %v2727
      %v2912 = vpack.c.bf16 %v2736, %v2732
      %v2913 = vpack.c.bf16 %v2737, %v2733
      %v2914 = vpack.c.bf16 %v2738, %v2734
      %v2915 = vpack.c.bf16 %v2739, %v2735
      %v2916 = vpack.c.bf16 %v2744, %v2740
      %v2917 = vpack.c.bf16 %v2745, %v2741
      %v2918 = vpack.c.bf16 %v2746, %v2742
      %v2919 = vpack.c.bf16 %v2747, %v2743
      %v2920 = vpack.c.bf16 %v2752, %v2748
      %v2921 = vpack.c.bf16 %v2753, %v2749
      %v2922 = vpack.c.bf16 %v2754, %v2750
      %v2923 = vpack.c.bf16 %v2755, %v2751
      %v2924 = vpack.c.bf16 %v2760, %v2756
      %v2925 = vpack.c.bf16 %v2761, %v2757
      %v2926 = vpack.c.bf16 %v2762, %v2758
      %v2927 = vpack.c.bf16 %v2763, %v2759
      %v2928 = vpack.c.bf16 %v2768, %v2764
      %v2929 = vpack.c.bf16 %v2769, %v2765
      %v2930 = vpack.c.bf16 %v2770, %v2766
      %v2931 = vpack.c.bf16 %v2771, %v2767
      %v2932 = vpack.c.bf16 %v2776, %v2772
      %v2933 = vpack.c.bf16 %v2777, %v2773
      %v2934 = vpack.c.bf16 %v2778, %v2774
      %v2935 = vpack.c.bf16 %v2779, %v2775
      %v2936 = vpack.c.bf16 %v2784, %v2780
      %v2937 = vpack.c.bf16 %v2785, %v2781
      %v2938 = vpack.c.bf16 %v2786, %v2782
      %v2939 = vpack.c.bf16 %v2787, %v2783
      %v2940 = vpack.c.bf16 %v2792, %v2788
      %v2941 = vpack.c.bf16 %v2793, %v2789
      %v2942 = vpack.c.bf16 %v2794, %v2790
      %v2943 = vpack.c.bf16 %v2795, %v2791
      %v2944 = vpack.c.bf16 %v2800, %v2796
      %v2945 = vpack.c.bf16 %v2801, %v2797
      %v2946 = vpack.c.bf16 %v2802, %v2798
      %v2947 = vpack.c.bf16 %v2803, %v2799
      %v2948 = vpack.c.bf16 %v2808, %v2804
      %v2949 = vpack.c.bf16 %v2809, %v2805
      %v2950 = vpack.c.bf16 %v2810, %v2806
      %v2951 = vpack.c.bf16 %v2811, %v2807
      %v2952 = vpack.c.bf16 %v2816, %v2812
      %v2953 = vpack.c.bf16 %v2817, %v2813
      %v2954 = vpack.c.bf16 %v2818, %v2814
      %v2955 = vpack.c.bf16 %v2819, %v2815
      %v2956 = vpack.c.bf16 %v2824, %v2820
      %v2957 = vpack.c.bf16 %v2825, %v2821
      %v2958 = vpack.c.bf16 %v2826, %v2822
      %v2959 = vpack.c.bf16 %v2827, %v2823
      %v2960 = vpack.c.bf16 %v2832, %v2828
      %v2961 = vpack.c.bf16 %v2833, %v2829
      %v2962 = vpack.c.bf16 %v2834, %v2830
      %v2963 = vpack.c.bf16 %v2835, %v2831
      %v2964 = vld [vmem:[%s10] sm:$0xff]
      %v2965 = vld [vmem:[%s10 + $0x8] sm:$0xff]
      %v2966 = vld [vmem:[%s10 + $0x10] sm:$0xff]
      %v2967 = vld [vmem:[%s10 + $0x18] sm:$0xff]
      %v2968 = vld [vmem:[%s10 + $0x20] sm:$0xff]
      %v2969 = vld [vmem:[%s10 + $0x28] sm:$0xff]
      %v2970 = vld [vmem:[%s10 + $0x30] sm:$0xff]
      %v2971 = vld [vmem:[%s10 + $0x38] sm:$0xff]
      %v2972 = vld [vmem:[%s10 + $0x40] sm:$0xff]
      %v2973 = vld [vmem:[%s10 + $0x48] sm:$0xff]
      %v2974 = vld [vmem:[%s10 + $0x50] sm:$0xff]
      %v2975 = vld [vmem:[%s10 + $0x58] sm:$0xff]
      %v2976 = vld [vmem:[%s10 + $0x60] sm:$0xff]
      %v2977 = vld [vmem:[%s10 + $0x68] sm:$0xff]
      %v2978 = vld [vmem:[%s10 + $0x70] sm:$0xff]
      %v2979 = vld [vmem:[%s10 + $0x78] sm:$0xff]
      %v2980 = vld [vmem:[%s10 + $0x80] sm:$0xff]
      %v2981 = vld [vmem:[%s10 + $0x88] sm:$0xff]
      %v2982 = vld [vmem:[%s10 + $0x90] sm:$0xff]
      %v2983 = vld [vmem:[%s10 + $0x98] sm:$0xff]
      %v2984 = vld [vmem:[%s10 + $0xa0] sm:$0xff]
      %v2985 = vld [vmem:[%s10 + $0xa8] sm:$0xff]
      %v2986 = vld [vmem:[%s10 + $0xb0] sm:$0xff]
      %v2987 = vld [vmem:[%s10 + $0xb8] sm:$0xff]
      %v2988 = vld [vmem:[%s10 + $0xc0] sm:$0xff]
      %v2989 = vld [vmem:[%s10 + $0xc8] sm:$0xff]
      %v2990 = vld [vmem:[%s10 + $0xd0] sm:$0xff]
      %v2991 = vld [vmem:[%s10 + $0xd8] sm:$0xff]
      %v2992 = vld [vmem:[%s10 + $0xe0] sm:$0xff]
      %v2993 = vld [vmem:[%s10 + $0xe8] sm:$0xff]
      %v2994 = vld [vmem:[%s10 + $0xf0] sm:$0xff]
      %v2995 = vld [vmem:[%s10 + $0xf8] sm:$0xff]
      %v2996 = vld [vmem:[%s10 + $0x100] sm:$0xff]
      %v2997 = vld [vmem:[%s10 + $0x108] sm:$0xff]
      %v2998 = vld [vmem:[%s10 + $0x110] sm:$0xff]
      %v2999 = vld [vmem:[%s10 + $0x118] sm:$0xff]
      %v3000 = vld [vmem:[%s10 + $0x120] sm:$0xff]
      %v3001 = vld [vmem:[%s10 + $0x128] sm:$0xff]
      %v3002 = vld [vmem:[%s10 + $0x130] sm:$0xff]
      %v3003 = vld [vmem:[%s10 + $0x138] sm:$0xff]
      %v3004 = vld [vmem:[%s10 + $0x140] sm:$0xff]
      %v3005 = vld [vmem:[%s10 + $0x148] sm:$0xff]
      %v3006 = vld [vmem:[%s10 + $0x150] sm:$0xff]
      %v3007 = vld [vmem:[%s10 + $0x158] sm:$0xff]
      %v3008 = vld [vmem:[%s10 + $0x160] sm:$0xff]
      %v3009 = vld [vmem:[%s10 + $0x168] sm:$0xff]
      %v3010 = vld [vmem:[%s10 + $0x170] sm:$0xff]
      %v3011 = vld [vmem:[%s10 + $0x178] sm:$0xff]
      %v3012 = vld [vmem:[%s10 + $0x180] sm:$0xff]
      %v3013 = vld [vmem:[%s10 + $0x188] sm:$0xff]
      %v3014 = vld [vmem:[%s10 + $0x190] sm:$0xff]
      %v3015 = vld [vmem:[%s10 + $0x198] sm:$0xff]
      %v3016 = vld [vmem:[%s10 + $0x1a0] sm:$0xff]
      %v3017 = vld [vmem:[%s10 + $0x1a8] sm:$0xff]
      %v3018 = vld [vmem:[%s10 + $0x1b0] sm:$0xff]
      %v3019 = vld [vmem:[%s10 + $0x1b8] sm:$0xff]
      %v3020 = vld [vmem:[%s10 + $0x1c0] sm:$0xff]
      %v3021 = vld [vmem:[%s10 + $0x1c8] sm:$0xff]
      %v3022 = vld [vmem:[%s10 + $0x1d0] sm:$0xff]
      %v3023 = vld [vmem:[%s10 + $0x1d8] sm:$0xff]
      %v3024 = vld [vmem:[%s10 + $0x1e0] sm:$0xff]
      %v3025 = vld [vmem:[%s10 + $0x1e8] sm:$0xff]
      %v3026 = vld [vmem:[%s10 + $0x1f0] sm:$0xff]
      %v3027 = vld [vmem:[%s10 + $0x1f8] sm:$0xff]
      %3029 = vset.pattern.permute.xlu0 0
      %3030 = vperm.xlu0 %3029, %v2964
      %v3031 = vpop.permute.xlu0 %3030
      %3034 = vset.pattern.permute.xlu0 0
      %3035 = vperm.xlu0 %3034, %v2965
      %v3036 = vpop.permute.xlu0 %3035
      %3039 = vset.pattern.permute.xlu0 0
      %3040 = vperm.xlu0 %3039, %v2966
      %v3041 = vpop.permute.xlu0 %3040
      %3044 = vset.pattern.permute.xlu0 0
      %3045 = vperm.xlu0 %3044, %v2967
      %v3046 = vpop.permute.xlu0 %3045
      %3049 = vset.pattern.permute.xlu0 0
      %3050 = vperm.xlu0 %3049, %v2968
      %v3051 = vpop.permute.xlu0 %3050
      %3054 = vset.pattern.permute.xlu0 0
      %3055 = vperm.xlu0 %3054, %v2969
      %v3056 = vpop.permute.xlu0 %3055
      %3059 = vset.pattern.permute.xlu0 0
      %3060 = vperm.xlu0 %3059, %v2970
      %v3061 = vpop.permute.xlu0 %3060
      %3064 = vset.pattern.permute.xlu0 0
      %3065 = vperm.xlu0 %3064, %v2971
      %v3066 = vpop.permute.xlu0 %3065
      %3069 = vset.pattern.permute.xlu0 0
      %3070 = vperm.xlu0 %3069, %v2972
      %v3071 = vpop.permute.xlu0 %3070
      %3074 = vset.pattern.permute.xlu0 0
      %3075 = vperm.xlu0 %3074, %v2973
      %v3076 = vpop.permute.xlu0 %3075
      %3079 = vset.pattern.permute.xlu0 0
      %3080 = vperm.xlu0 %3079, %v2974
      %v3081 = vpop.permute.xlu0 %3080
      %3084 = vset.pattern.permute.xlu0 0
      %3085 = vperm.xlu0 %3084, %v2975
      %v3086 = vpop.permute.xlu0 %3085
      %3089 = vset.pattern.permute.xlu0 0
      %3090 = vperm.xlu0 %3089, %v2976
      %v3091 = vpop.permute.xlu0 %3090
      %3094 = vset.pattern.permute.xlu0 0
      %3095 = vperm.xlu0 %3094, %v2977
      %v3096 = vpop.permute.xlu0 %3095
      %3099 = vset.pattern.permute.xlu0 0
      %3100 = vperm.xlu0 %3099, %v2978
      %v3101 = vpop.permute.xlu0 %3100
      %3104 = vset.pattern.permute.xlu0 0
      %3105 = vperm.xlu0 %3104, %v2979
      %v3106 = vpop.permute.xlu0 %3105
      %3109 = vset.pattern.permute.xlu0 0
      %3110 = vperm.xlu0 %3109, %v2980
      %v3111 = vpop.permute.xlu0 %3110
      %3114 = vset.pattern.permute.xlu0 0
      %3115 = vperm.xlu0 %3114, %v2981
      %v3116 = vpop.permute.xlu0 %3115
      %3119 = vset.pattern.permute.xlu0 0
      %3120 = vperm.xlu0 %3119, %v2982
      %v3121 = vpop.permute.xlu0 %3120
      %3124 = vset.pattern.permute.xlu0 0
      %3125 = vperm.xlu0 %3124, %v2983
      %v3126 = vpop.permute.xlu0 %3125
      %3129 = vset.pattern.permute.xlu0 0
      %3130 = vperm.xlu0 %3129, %v2984
      %v3131 = vpop.permute.xlu0 %3130
      %3134 = vset.pattern.permute.xlu0 0
      %3135 = vperm.xlu0 %3134, %v2985
      %v3136 = vpop.permute.xlu0 %3135
      %3139 = vset.pattern.permute.xlu0 0
      %3140 = vperm.xlu0 %3139, %v2986
      %v3141 = vpop.permute.xlu0 %3140
      %3144 = vset.pattern.permute.xlu0 0
      %3145 = vperm.xlu0 %3144, %v2987
      %v3146 = vpop.permute.xlu0 %3145
      %3149 = vset.pattern.permute.xlu0 0
      %3150 = vperm.xlu0 %3149, %v2988
      %v3151 = vpop.permute.xlu0 %3150
      %3154 = vset.pattern.permute.xlu0 0
      %3155 = vperm.xlu0 %3154, %v2989
      %v3156 = vpop.permute.xlu0 %3155
      %3159 = vset.pattern.permute.xlu0 0
      %3160 = vperm.xlu0 %3159, %v2990
      %v3161 = vpop.permute.xlu0 %3160
      %3164 = vset.pattern.permute.xlu0 0
      %3165 = vperm.xlu0 %3164, %v2991
      %v3166 = vpop.permute.xlu0 %3165
      %3169 = vset.pattern.permute.xlu0 0
      %3170 = vperm.xlu0 %3169, %v2992
      %v3171 = vpop.permute.xlu0 %3170
      %3174 = vset.pattern.permute.xlu0 0
      %3175 = vperm.xlu0 %3174, %v2993
      %v3176 = vpop.permute.xlu0 %3175
      %3179 = vset.pattern.permute.xlu0 0
      %3180 = vperm.xlu0 %3179, %v2994
      %v3181 = vpop.permute.xlu0 %3180
      %3184 = vset.pattern.permute.xlu0 0
      %3185 = vperm.xlu0 %3184, %v2995
      %v3186 = vpop.permute.xlu0 %3185
      %3189 = vset.pattern.permute.xlu0 0
      %3190 = vperm.xlu0 %3189, %v2996
      %v3191 = vpop.permute.xlu0 %3190
      %3194 = vset.pattern.permute.xlu0 0
      %3195 = vperm.xlu0 %3194, %v2997
      %v3196 = vpop.permute.xlu0 %3195
      %3199 = vset.pattern.permute.xlu0 0
      %3200 = vperm.xlu0 %3199, %v2998
      %v3201 = vpop.permute.xlu0 %3200
      %3204 = vset.pattern.permute.xlu0 0
      %3205 = vperm.xlu0 %3204, %v2999
      %v3206 = vpop.permute.xlu0 %3205
      %3209 = vset.pattern.permute.xlu0 0
      %3210 = vperm.xlu0 %3209, %v3000
      %v3211 = vpop.permute.xlu0 %3210
      %3214 = vset.pattern.permute.xlu0 0
      %3215 = vperm.xlu0 %3214, %v3001
      %v3216 = vpop.permute.xlu0 %3215
      %3219 = vset.pattern.permute.xlu0 0
      %3220 = vperm.xlu0 %3219, %v3002
      %v3221 = vpop.permute.xlu0 %3220
      %3224 = vset.pattern.permute.xlu0 0
      %3225 = vperm.xlu0 %3224, %v3003
      %v3226 = vpop.permute.xlu0 %3225
      %3229 = vset.pattern.permute.xlu0 0
      %3230 = vperm.xlu0 %3229, %v3004
      %v3231 = vpop.permute.xlu0 %3230
      %3234 = vset.pattern.permute.xlu0 0
      %3235 = vperm.xlu0 %3234, %v3005
      %v3236 = vpop.permute.xlu0 %3235
      %3239 = vset.pattern.permute.xlu0 0
      %3240 = vperm.xlu0 %3239, %v3006
      %v3241 = vpop.permute.xlu0 %3240
      %3244 = vset.pattern.permute.xlu0 0
      %3245 = vperm.xlu0 %3244, %v3007
      %v3246 = vpop.permute.xlu0 %3245
      %3249 = vset.pattern.permute.xlu0 0
      %3250 = vperm.xlu0 %3249, %v3008
      %v3251 = vpop.permute.xlu0 %3250
      %3254 = vset.pattern.permute.xlu0 0
      %3255 = vperm.xlu0 %3254, %v3009
      %v3256 = vpop.permute.xlu0 %3255
      %3259 = vset.pattern.permute.xlu0 0
      %3260 = vperm.xlu0 %3259, %v3010
      %v3261 = vpop.permute.xlu0 %3260
      %3264 = vset.pattern.permute.xlu0 0
      %3265 = vperm.xlu0 %3264, %v3011
      %v3266 = vpop.permute.xlu0 %3265
      %3269 = vset.pattern.permute.xlu0 0
      %3270 = vperm.xlu0 %3269, %v3012
      %v3271 = vpop.permute.xlu0 %3270
      %3274 = vset.pattern.permute.xlu0 0
      %3275 = vperm.xlu0 %3274, %v3013
      %v3276 = vpop.permute.xlu0 %3275
      %3279 = vset.pattern.permute.xlu0 0
      %3280 = vperm.xlu0 %3279, %v3014
      %v3281 = vpop.permute.xlu0 %3280
      %3284 = vset.pattern.permute.xlu0 0
      %3285 = vperm.xlu0 %3284, %v3015
      %v3286 = vpop.permute.xlu0 %3285
      %3289 = vset.pattern.permute.xlu0 0
      %3290 = vperm.xlu0 %3289, %v3016
      %v3291 = vpop.permute.xlu0 %3290
      %3294 = vset.pattern.permute.xlu0 0
      %3295 = vperm.xlu0 %3294, %v3017
      %v3296 = vpop.permute.xlu0 %3295
      %3299 = vset.pattern.permute.xlu0 0
      %3300 = vperm.xlu0 %3299, %v3018
      %v3301 = vpop.permute.xlu0 %3300
      %3304 = vset.pattern.permute.xlu0 0
      %3305 = vperm.xlu0 %3304, %v3019
      %v3306 = vpop.permute.xlu0 %3305
      %3309 = vset.pattern.permute.xlu0 0
      %3310 = vperm.xlu0 %3309, %v3020
      %v3311 = vpop.permute.xlu0 %3310
      %3314 = vset.pattern.permute.xlu0 0
      %3315 = vperm.xlu0 %3314, %v3021
      %v3316 = vpop.permute.xlu0 %3315
      %3319 = vset.pattern.permute.xlu0 0
      %3320 = vperm.xlu0 %3319, %v3022
      %v3321 = vpop.permute.xlu0 %3320
      %3324 = vset.pattern.permute.xlu0 0
      %3325 = vperm.xlu0 %3324, %v3023
      %v3326 = vpop.permute.xlu0 %3325
      %3329 = vset.pattern.permute.xlu0 0
      %3330 = vperm.xlu0 %3329, %v3024
      %v3331 = vpop.permute.xlu0 %3330
      %3334 = vset.pattern.permute.xlu0 0
      %3335 = vperm.xlu0 %3334, %v3025
      %v3336 = vpop.permute.xlu0 %3335
      %3339 = vset.pattern.permute.xlu0 0
      %3340 = vperm.xlu0 %3339, %v3026
      %v3341 = vpop.permute.xlu0 %3340
      %3344 = vset.pattern.permute.xlu0 0
      %3345 = vperm.xlu0 %3344, %v3027
      %v3346 = vpop.permute.xlu0 %3345
      %v3412 = vunpack.c.l.b16 %v2836
      %v3413 = vunpack.c.h.b16 %v2836
      %v3414 = vunpack.c.l.b16 %v2837
      %v3415 = vunpack.c.h.b16 %v2837
      %v3416 = vunpack.c.l.b16 %v2838
      %v3417 = vunpack.c.h.b16 %v2838
      %v3418 = vunpack.c.l.b16 %v2839
      %v3419 = vunpack.c.h.b16 %v2839
      %v3420 = vunpack.c.l.b16 %v2840
      %v3421 = vunpack.c.h.b16 %v2840
      %v3422 = vunpack.c.l.b16 %v2841
      %v3423 = vunpack.c.h.b16 %v2841
      %v3424 = vunpack.c.l.b16 %v2842
      %v3425 = vunpack.c.h.b16 %v2842
      %v3426 = vunpack.c.l.b16 %v2843
      %v3427 = vunpack.c.h.b16 %v2843
      %v3428 = vunpack.c.l.b16 %v2844
      %v3429 = vunpack.c.h.b16 %v2844
      %v3430 = vunpack.c.l.b16 %v2845
      %v3431 = vunpack.c.h.b16 %v2845
      %v3432 = vunpack.c.l.b16 %v2846
      %v3433 = vunpack.c.h.b16 %v2846
      %v3434 = vunpack.c.l.b16 %v2847
      %v3435 = vunpack.c.h.b16 %v2847
      %v3436 = vunpack.c.l.b16 %v2848
      %v3437 = vunpack.c.h.b16 %v2848
      %v3438 = vunpack.c.l.b16 %v2849
      %v3439 = vunpack.c.h.b16 %v2849
      %v3440 = vunpack.c.l.b16 %v2850
      %v3441 = vunpack.c.h.b16 %v2850
      %v3442 = vunpack.c.l.b16 %v2851
      %v3443 = vunpack.c.h.b16 %v2851
      %v3444 = vunpack.c.l.b16 %v2852
      %v3445 = vunpack.c.h.b16 %v2852
      %v3446 = vunpack.c.l.b16 %v2853
      %v3447 = vunpack.c.h.b16 %v2853
      %v3448 = vunpack.c.l.b16 %v2854
      %v3449 = vunpack.c.h.b16 %v2854
      %v3450 = vunpack.c.l.b16 %v2855
      %v3451 = vunpack.c.h.b16 %v2855
      %v3452 = vunpack.c.l.b16 %v2856
      %v3453 = vunpack.c.h.b16 %v2856
      %v3454 = vunpack.c.l.b16 %v2857
      %v3455 = vunpack.c.h.b16 %v2857
      %v3456 = vunpack.c.l.b16 %v2858
      %v3457 = vunpack.c.h.b16 %v2858
      %v3458 = vunpack.c.l.b16 %v2859
      %v3459 = vunpack.c.h.b16 %v2859
      %v3460 = vunpack.c.l.b16 %v2860
      %v3461 = vunpack.c.h.b16 %v2860
      %v3462 = vunpack.c.l.b16 %v2861
      %v3463 = vunpack.c.h.b16 %v2861
      %v3464 = vunpack.c.l.b16 %v2862
      %v3465 = vunpack.c.h.b16 %v2862
      %v3466 = vunpack.c.l.b16 %v2863
      %v3467 = vunpack.c.h.b16 %v2863
      %v3468 = vunpack.c.l.b16 %v2864
      %v3469 = vunpack.c.h.b16 %v2864
      %v3470 = vunpack.c.l.b16 %v2865
      %v3471 = vunpack.c.h.b16 %v2865
      %v3472 = vunpack.c.l.b16 %v2866
      %v3473 = vunpack.c.h.b16 %v2866
      %v3474 = vunpack.c.l.b16 %v2867
      %v3475 = vunpack.c.h.b16 %v2867
      %v3476 = vunpack.c.l.b16 %v2868
      %v3477 = vunpack.c.h.b16 %v2868
      %v3478 = vunpack.c.l.b16 %v2869
      %v3479 = vunpack.c.h.b16 %v2869
      %v3480 = vunpack.c.l.b16 %v2870
      %v3481 = vunpack.c.h.b16 %v2870
      %v3482 = vunpack.c.l.b16 %v2871
      %v3483 = vunpack.c.h.b16 %v2871
      %v3484 = vunpack.c.l.b16 %v2872
      %v3485 = vunpack.c.h.b16 %v2872
      %v3486 = vunpack.c.l.b16 %v2873
      %v3487 = vunpack.c.h.b16 %v2873
      %v3488 = vunpack.c.l.b16 %v2874
      %v3489 = vunpack.c.h.b16 %v2874
      %v3490 = vunpack.c.l.b16 %v2875
      %v3491 = vunpack.c.h.b16 %v2875
      %v3492 = vunpack.c.l.b16 %v2876
      %v3493 = vunpack.c.h.b16 %v2876
      %v3494 = vunpack.c.l.b16 %v2877
      %v3495 = vunpack.c.h.b16 %v2877
      %v3496 = vunpack.c.l.b16 %v2878
      %v3497 = vunpack.c.h.b16 %v2878
      %v3498 = vunpack.c.l.b16 %v2879
      %v3499 = vunpack.c.h.b16 %v2879
      %v3500 = vunpack.c.l.b16 %v2880
      %v3501 = vunpack.c.h.b16 %v2880
      %v3502 = vunpack.c.l.b16 %v2881
      %v3503 = vunpack.c.h.b16 %v2881
      %v3504 = vunpack.c.l.b16 %v2882
      %v3505 = vunpack.c.h.b16 %v2882
      %v3506 = vunpack.c.l.b16 %v2883
      %v3507 = vunpack.c.h.b16 %v2883
      %v3508 = vunpack.c.l.b16 %v2884
      %v3509 = vunpack.c.h.b16 %v2884
      %v3510 = vunpack.c.l.b16 %v2885
      %v3511 = vunpack.c.h.b16 %v2885
      %v3512 = vunpack.c.l.b16 %v2886
      %v3513 = vunpack.c.h.b16 %v2886
      %v3514 = vunpack.c.l.b16 %v2887
      %v3515 = vunpack.c.h.b16 %v2887
      %v3516 = vunpack.c.l.b16 %v2888
      %v3517 = vunpack.c.h.b16 %v2888
      %v3518 = vunpack.c.l.b16 %v2889
      %v3519 = vunpack.c.h.b16 %v2889
      %v3520 = vunpack.c.l.b16 %v2890
      %v3521 = vunpack.c.h.b16 %v2890
      %v3522 = vunpack.c.l.b16 %v2891
      %v3523 = vunpack.c.h.b16 %v2891
      %v3524 = vunpack.c.l.b16 %v2892
      %v3525 = vunpack.c.h.b16 %v2892
      %v3526 = vunpack.c.l.b16 %v2893
      %v3527 = vunpack.c.h.b16 %v2893
      %v3528 = vunpack.c.l.b16 %v2894
      %v3529 = vunpack.c.h.b16 %v2894
      %v3530 = vunpack.c.l.b16 %v2895
      %v3531 = vunpack.c.h.b16 %v2895
      %v3532 = vunpack.c.l.b16 %v2896
      %v3533 = vunpack.c.h.b16 %v2896
      %v3534 = vunpack.c.l.b16 %v2897
      %v3535 = vunpack.c.h.b16 %v2897
      %v3536 = vunpack.c.l.b16 %v2898
      %v3537 = vunpack.c.h.b16 %v2898
      %v3538 = vunpack.c.l.b16 %v2899
      %v3539 = vunpack.c.h.b16 %v2899
      %v3540 = vpack.c.b16 %v3414, %v3412
      %v3541 = vpack.c.b16 %v3415, %v3413
      %v3542 = vpack.c.b16 %v3418, %v3416
      %v3543 = vpack.c.b16 %v3419, %v3417
      %v3544 = vpack.c.b16 %v3422, %v3420
      %v3545 = vpack.c.b16 %v3423, %v3421
      %v3546 = vpack.c.b16 %v3426, %v3424
      %v3547 = vpack.c.b16 %v3427, %v3425
      %v3548 = vpack.c.b16 %v3430, %v3428
      %v3549 = vpack.c.b16 %v3431, %v3429
      %v3550 = vpack.c.b16 %v3434, %v3432
      %v3551 = vpack.c.b16 %v3435, %v3433
      %v3552 = vpack.c.b16 %v3438, %v3436
      %v3553 = vpack.c.b16 %v3439, %v3437
      %v3554 = vpack.c.b16 %v3442, %v3440
      %v3555 = vpack.c.b16 %v3443, %v3441
      %v3556 = vpack.c.b16 %v3446, %v3444
      %v3557 = vpack.c.b16 %v3447, %v3445
      %v3558 = vpack.c.b16 %v3450, %v3448
      %v3559 = vpack.c.b16 %v3451, %v3449
      %v3560 = vpack.c.b16 %v3454, %v3452
      %v3561 = vpack.c.b16 %v3455, %v3453
      %v3562 = vpack.c.b16 %v3458, %v3456
      %v3563 = vpack.c.b16 %v3459, %v3457
      %v3564 = vpack.c.b16 %v3462, %v3460
      %v3565 = vpack.c.b16 %v3463, %v3461
      %v3566 = vpack.c.b16 %v3466, %v3464
      %v3567 = vpack.c.b16 %v3467, %v3465
      %v3568 = vpack.c.b16 %v3470, %v3468
      %v3569 = vpack.c.b16 %v3471, %v3469
      %v3570 = vpack.c.b16 %v3474, %v3472
      %v3571 = vpack.c.b16 %v3475, %v3473
      %v3572 = vpack.c.b16 %v3478, %v3476
      %v3573 = vpack.c.b16 %v3479, %v3477
      %v3574 = vpack.c.b16 %v3482, %v3480
      %v3575 = vpack.c.b16 %v3483, %v3481
      %v3576 = vpack.c.b16 %v3486, %v3484
      %v3577 = vpack.c.b16 %v3487, %v3485
      %v3578 = vpack.c.b16 %v3490, %v3488
      %v3579 = vpack.c.b16 %v3491, %v3489
      %v3580 = vpack.c.b16 %v3494, %v3492
      %v3581 = vpack.c.b16 %v3495, %v3493
      %v3582 = vpack.c.b16 %v3498, %v3496
      %v3583 = vpack.c.b16 %v3499, %v3497
      %v3584 = vpack.c.b16 %v3502, %v3500
      %v3585 = vpack.c.b16 %v3503, %v3501
      %v3586 = vpack.c.b16 %v3506, %v3504
      %v3587 = vpack.c.b16 %v3507, %v3505
      %v3588 = vpack.c.b16 %v3510, %v3508
      %v3589 = vpack.c.b16 %v3511, %v3509
      %v3590 = vpack.c.b16 %v3514, %v3512
      %v3591 = vpack.c.b16 %v3515, %v3513
      %v3592 = vpack.c.b16 %v3518, %v3516
      %v3593 = vpack.c.b16 %v3519, %v3517
      %v3594 = vpack.c.b16 %v3522, %v3520
      %v3595 = vpack.c.b16 %v3523, %v3521
      %v3596 = vpack.c.b16 %v3526, %v3524
      %v3597 = vpack.c.b16 %v3527, %v3525
      %v3598 = vpack.c.b16 %v3530, %v3528
      %v3599 = vpack.c.b16 %v3531, %v3529
      %v3600 = vpack.c.b16 %v3534, %v3532
      %v3601 = vpack.c.b16 %v3535, %v3533
      %v3602 = vpack.c.b16 %v3538, %v3536
      %v3603 = vpack.c.b16 %v3539, %v3537
      %3668 = vmatprep.subr.bf16.mxu0 %v2901
      %3669 = vmatpush1.bf16.msra.mxu0 %v2900
      %3670 = vmatprep.subr.bf16.mxu0 %v2905
      %3671 = vmatpush1.bf16.msra.mxu0 %v2904
      %3672 = vmatprep.subr.bf16.mxu0 %v2909
      %3673 = vmatpush1.bf16.msra.mxu0 %v2908
      %3674 = vmatprep.subr.bf16.mxu0 %v2913
      %3675 = vmatpush1.bf16.msra.mxu0 %v2912
      %3676 = vmatprep.subr.bf16.mxu0 %v2917
      %3677 = vmatpush1.bf16.msra.mxu0 %v2916
      %3678 = vmatprep.subr.bf16.mxu0 %v2921
      %3679 = vmatpush1.bf16.msra.mxu0 %v2920
      %3680 = vmatprep.subr.bf16.mxu0 %v2925
      %3681 = vmatpush1.bf16.msra.mxu0 %v2924
      %3682 = vmatprep.subr.bf16.mxu0 %v2929
      %3683 = vmatpush1.bf16.msra.mxu0 %v2928
      %3684 = vmatprep.subr.bf16.mxu0 %v2933
      %3685 = vmatpush1.bf16.msra.mxu0 %v2932
      %3686 = vmatprep.subr.bf16.mxu0 %v2937
      %3687 = vmatpush1.bf16.msra.mxu0 %v2936
      %3688 = vmatprep.subr.bf16.mxu0 %v2941
      %3689 = vmatpush1.bf16.msra.mxu0 %v2940
      %3690 = vmatprep.subr.bf16.mxu0 %v2945
      %3691 = vmatpush1.bf16.msra.mxu0 %v2944
      %3692 = vmatprep.subr.bf16.mxu0 %v2949
      %3693 = vmatpush1.bf16.msra.mxu0 %v2948
      %3694 = vmatprep.subr.bf16.mxu0 %v2953
      %3695 = vmatpush1.bf16.msra.mxu0 %v2952
      %3696 = vmatprep.subr.bf16.mxu0 %v2957
      %3697 = vmatpush1.bf16.msra.mxu0 %v2956
      %3698 = vmatprep.subr.bf16.mxu0 %v2961
      %3699 = vmatpush1.bf16.msra.mxu0 %v2960
      %3700 = vmatprep.mubr.bf16.mxu0 %v3541
      %3701 = vmatmul.mubr.bf16.gmra.mrb[0].mxu0 %v3540
      %v3702 = vpop.f32.mrb[0].mxu0
      %v3703 = vadd.f32 %v3031, %v3702
      %v3704 = vpop.f32.mrb[0].mxu0
      %v3705 = vadd.f32 %v3031, %v3704
      %v3706 = vpop.f32.mrb[0].mxu0
      %v3707 = vadd.f32 %v3036, %v3706
      %v3708 = vpop.f32.mrb[0].mxu0
      %v3709 = vadd.f32 %v3036, %v3708
      %3710 = vmatprep.mubr.bf16.mxu0 %v3543
      %3711 = vmatmul.mubr.bf16.gmra.mrb[0].mxu0 %v3542
      %v3712 = vpop.f32.mrb[0].mxu0
      %v3713 = vadd.f32 %v3041, %v3712
      %v3714 = vpop.f32.mrb[0].mxu0
      %v3715 = vadd.f32 %v3041, %v3714
      %v3716 = vpop.f32.mrb[0].mxu0
      %v3717 = vadd.f32 %v3046, %v3716
      %v3718 = vpop.f32.mrb[0].mxu0
      %v3719 = vadd.f32 %v3046, %v3718
      %3720 = vmatprep.mubr.bf16.mxu0 %v3545
      %3721 = vmatmul.mubr.bf16.gmra.mrb[0].mxu0 %v3544
      %v3722 = vpop.f32.mrb[0].mxu0
      %v3723 = vadd.f32 %v3051, %v3722
      %v3724 = vpop.f32.mrb[0].mxu0
      %v3725 = vadd.f32 %v3051, %v3724
      %v3726 = vpop.f32.mrb[0].mxu0
      %v3727 = vadd.f32 %v3056, %v3726
      %v3728 = vpop.f32.mrb[0].mxu0
      %v3729 = vadd.f32 %v3056, %v3728
      %3730 = vmatprep.mubr.bf16.mxu0 %v3547
      %3731 = vmatmul.mubr.bf16.gmra.mrb[0].mxu0 %v3546
      %v3732 = vpop.f32.mrb[0].mxu0
      %v3733 = vadd.f32 %v3061, %v3732
      %v3734 = vpop.f32.mrb[0].mxu0
      %v3735 = vadd.f32 %v3061, %v3734
      %v3736 = vpop.f32.mrb[0].mxu0
      %v3737 = vadd.f32 %v3066, %v3736
      %v3738 = vpop.f32.mrb[0].mxu0
      %v3739 = vadd.f32 %v3066, %v3738
      %3740 = vmatprep.mubr.bf16.mxu0 %v3549
      %3741 = vmatmul.mubr.bf16.gmra.mrb[0].mxu0 %v3548
      %v3742 = vpop.f32.mrb[0].mxu0
      %v3743 = vadd.f32 %v3071, %v3742
      %v3744 = vpop.f32.mrb[0].mxu0
      %v3745 = vadd.f32 %v3071, %v3744
      %v3746 = vpop.f32.mrb[0].mxu0
      %v3747 = vadd.f32 %v3076, %v3746
      %v3748 = vpop.f32.mrb[0].mxu0
      %v3749 = vadd.f32 %v3076, %v3748
      %3750 = vmatprep.mubr.bf16.mxu0 %v3551
      %3751 = vmatmul.mubr.bf16.gmra.mrb[0].mxu0 %v3550
      %v3752 = vpop.f32.mrb[0].mxu0
      %v3753 = vadd.f32 %v3081, %v3752
      %v3754 = vpop.f32.mrb[0].mxu0
      %v3755 = vadd.f32 %v3081, %v3754
      %v3756 = vpop.f32.mrb[0].mxu0
      %v3757 = vadd.f32 %v3086, %v3756
      %v3758 = vpop.f32.mrb[0].mxu0
      %v3759 = vadd.f32 %v3086, %v3758
      %3760 = vmatprep.mubr.bf16.mxu0 %v3553
      %3761 = vmatmul.mubr.bf16.gmra.mrb[0].mxu0 %v3552
      %v3762 = vpop.f32.mrb[0].mxu0
      %v3763 = vadd.f32 %v3091, %v3762
      %v3764 = vpop.f32.mrb[0].mxu0
      %v3765 = vadd.f32 %v3091, %v3764
      %v3766 = vpop.f32.mrb[0].mxu0
      %v3767 = vadd.f32 %v3096, %v3766
      %v3768 = vpop.f32.mrb[0].mxu0
      %v3769 = vadd.f32 %v3096, %v3768
      %3770 = vmatprep.mubr.bf16.mxu0 %v3555
      %3771 = vmatmul.mubr.bf16.gmra.mrb[0].mxu0 %v3554
      %v3772 = vpop.f32.mrb[0].mxu0
      %v3773 = vadd.f32 %v3101, %v3772
      %v3774 = vpop.f32.mrb[0].mxu0
      %v3775 = vadd.f32 %v3101, %v3774
      %v3776 = vpop.f32.mrb[0].mxu0
      %v3777 = vadd.f32 %v3106, %v3776
      %v3778 = vpop.f32.mrb[0].mxu0
      %v3779 = vadd.f32 %v3106, %v3778
      %3780 = vmatprep.mubr.bf16.mxu0 %v3557
      %3781 = vmatmul.mubr.bf16.gmra.mrb[0].mxu0 %v3556
      %v3782 = vpop.f32.mrb[0].mxu0
      %v3783 = vadd.f32 %v3111, %v3782
      %v3784 = vpop.f32.mrb[0].mxu0
      %v3785 = vadd.f32 %v3111, %v3784
      %v3786 = vpop.f32.mrb[0].mxu0
      %v3787 = vadd.f32 %v3116, %v3786
      %v3788 = vpop.f32.mrb[0].mxu0
      %v3789 = vadd.f32 %v3116, %v3788
      %3790 = vmatprep.mubr.bf16.mxu0 %v3559
      %3791 = vmatmul.mubr.bf16.gmra.mrb[0].mxu0 %v3558
      %v3792 = vpop.f32.mrb[0].mxu0
      %v3793 = vadd.f32 %v3121, %v3792
      %v3794 = vpop.f32.mrb[0].mxu0
      %v3795 = vadd.f32 %v3121, %v3794
      %v3796 = vpop.f32.mrb[0].mxu0
      %v3797 = vadd.f32 %v3126, %v3796
      %v3798 = vpop.f32.mrb[0].mxu0
      %v3799 = vadd.f32 %v3126, %v3798
      %3800 = vmatprep.mubr.bf16.mxu0 %v3561
      %3801 = vmatmul.mubr.bf16.gmra.mrb[0].mxu0 %v3560
      %v3802 = vpop.f32.mrb[0].mxu0
      %v3803 = vadd.f32 %v3131, %v3802
      %v3804 = vpop.f32.mrb[0].mxu0
      %v3805 = vadd.f32 %v3131, %v3804
      %v3806 = vpop.f32.mrb[0].mxu0
      %v3807 = vadd.f32 %v3136, %v3806
      %v3808 = vpop.f32.mrb[0].mxu0
      %v3809 = vadd.f32 %v3136, %v3808
      %3810 = vmatprep.mubr.bf16.mxu0 %v3563
      %3811 = vmatmul.mubr.bf16.gmra.mrb[0].mxu0 %v3562
      %v3812 = vpop.f32.mrb[0].mxu0
      %v3813 = vadd.f32 %v3141, %v3812
      %v3814 = vpop.f32.mrb[0].mxu0
      %v3815 = vadd.f32 %v3141, %v3814
      %v3816 = vpop.f32.mrb[0].mxu0
      %v3817 = vadd.f32 %v3146, %v3816
      %v3818 = vpop.f32.mrb[0].mxu0
      %v3819 = vadd.f32 %v3146, %v3818
      %3820 = vmatprep.mubr.bf16.mxu0 %v3565
      %3821 = vmatmul.mubr.bf16.gmra.mrb[0].mxu0 %v3564
      %v3822 = vpop.f32.mrb[0].mxu0
      %v3823 = vadd.f32 %v3151, %v3822
      %v3824 = vpop.f32.mrb[0].mxu0
      %v3825 = vadd.f32 %v3151, %v3824
      %v3826 = vpop.f32.mrb[0].mxu0
      %v3827 = vadd.f32 %v3156, %v3826
      %v3828 = vpop.f32.mrb[0].mxu0
      %v3829 = vadd.f32 %v3156, %v3828
      %3830 = vmatprep.mubr.bf16.mxu0 %v3567
      %3831 = vmatmul.mubr.bf16.gmra.mrb[0].mxu0 %v3566
      %v3832 = vpop.f32.mrb[0].mxu0
      %v3833 = vadd.f32 %v3161, %v3832
      %v3834 = vpop.f32.mrb[0].mxu0
      %v3835 = vadd.f32 %v3161, %v3834
      %v3836 = vpop.f32.mrb[0].mxu0
      %v3837 = vadd.f32 %v3166, %v3836
      %v3838 = vpop.f32.mrb[0].mxu0
      %v3839 = vadd.f32 %v3166, %v3838
      %3840 = vmatprep.mubr.bf16.mxu0 %v3569
      %3841 = vmatmul.mubr.bf16.gmra.mrb[0].mxu0 %v3568
      %v3842 = vpop.f32.mrb[0].mxu0
      %v3843 = vadd.f32 %v3171, %v3842
      %v3844 = vpop.f32.mrb[0].mxu0
      %v3845 = vadd.f32 %v3171, %v3844
      %v3846 = vpop.f32.mrb[0].mxu0
      %v3847 = vadd.f32 %v3176, %v3846
      %v3848 = vpop.f32.mrb[0].mxu0
      %v3849 = vadd.f32 %v3176, %v3848
      %3850 = vmatprep.mubr.bf16.mxu0 %v3571
      %3851 = vmatmul.mubr.bf16.gmra.mrb[0].mxu0 %v3570
      %v3852 = vpop.f32.mrb[0].mxu0
      %v3853 = vadd.f32 %v3181, %v3852
      %v3854 = vpop.f32.mrb[0].mxu0
      %v3855 = vadd.f32 %v3181, %v3854
      %v3856 = vpop.f32.mrb[0].mxu0
      %v3857 = vadd.f32 %v3186, %v3856
      %v3858 = vpop.f32.mrb[0].mxu0
      %v3859 = vadd.f32 %v3186, %v3858
      %3860 = vmatprep.mubr.bf16.mxu0 %v3573
      %3861 = vmatmul.mubr.bf16.gmra.mrb[0].mxu0 %v3572
      %v3862 = vpop.f32.mrb[0].mxu0
      %v3863 = vadd.f32 %v3191, %v3862
      %v3864 = vpop.f32.mrb[0].mxu0
      %v3865 = vadd.f32 %v3191, %v3864
      %v3866 = vpop.f32.mrb[0].mxu0
      %v3867 = vadd.f32 %v3196, %v3866
      %v3868 = vpop.f32.mrb[0].mxu0
      %v3869 = vadd.f32 %v3196, %v3868
      %3870 = vmatprep.mubr.bf16.mxu0 %v3575
      %3871 = vmatmul.mubr.bf16.gmra.mrb[0].mxu0 %v3574
      %v3872 = vpop.f32.mrb[0].mxu0
      %v3873 = vadd.f32 %v3201, %v3872
      %v3874 = vpop.f32.mrb[0].mxu0
      %v3875 = vadd.f32 %v3201, %v3874
      %v3876 = vpop.f32.mrb[0].mxu0
      %v3877 = vadd.f32 %v3206, %v3876
      %v3878 = vpop.f32.mrb[0].mxu0
      %v3879 = vadd.f32 %v3206, %v3878
      %3880 = vmatprep.mubr.bf16.mxu0 %v3577
      %3881 = vmatmul.mubr.bf16.gmra.mrb[0].mxu0 %v3576
      %v3882 = vpop.f32.mrb[0].mxu0
      %v3883 = vadd.f32 %v3211, %v3882
      %v3884 = vpop.f32.mrb[0].mxu0
      %v3885 = vadd.f32 %v3211, %v3884
      %v3886 = vpop.f32.mrb[0].mxu0
      %v3887 = vadd.f32 %v3216, %v3886
      %v3888 = vpop.f32.mrb[0].mxu0
      %v3889 = vadd.f32 %v3216, %v3888
      %3890 = vmatprep.mubr.bf16.mxu0 %v3579
      %3891 = vmatmul.mubr.bf16.gmra.mrb[0].mxu0 %v3578
      %v3892 = vpop.f32.mrb[0].mxu0
      %v3893 = vadd.f32 %v3221, %v3892
      %v3894 = vpop.f32.mrb[0].mxu0
      %v3895 = vadd.f32 %v3221, %v3894
      %v3896 = vpop.f32.mrb[0].mxu0
      %v3897 = vadd.f32 %v3226, %v3896
      %v3898 = vpop.f32.mrb[0].mxu0
      %v3899 = vadd.f32 %v3226, %v3898
      %3900 = vmatprep.mubr.bf16.mxu0 %v3581
      %3901 = vmatmul.mubr.bf16.gmra.mrb[0].mxu0 %v3580
      %v3902 = vpop.f32.mrb[0].mxu0
      %v3903 = vadd.f32 %v3231, %v3902
      %v3904 = vpop.f32.mrb[0].mxu0
      %v3905 = vadd.f32 %v3231, %v3904
      %v3906 = vpop.f32.mrb[0].mxu0
      %v3907 = vadd.f32 %v3236, %v3906
      %v3908 = vpop.f32.mrb[0].mxu0
      %v3909 = vadd.f32 %v3236, %v3908
      %3910 = vmatprep.mubr.bf16.mxu0 %v3583
      %3911 = vmatmul.mubr.bf16.gmra.mrb[0].mxu0 %v3582
      %v3912 = vpop.f32.mrb[0].mxu0
      %v3913 = vadd.f32 %v3241, %v3912
      %v3914 = vpop.f32.mrb[0].mxu0
      %v3915 = vadd.f32 %v3241, %v3914
      %v3916 = vpop.f32.mrb[0].mxu0
      %v3917 = vadd.f32 %v3246, %v3916
      %v3918 = vpop.f32.mrb[0].mxu0
      %v3919 = vadd.f32 %v3246, %v3918
      %3920 = vmatprep.mubr.bf16.mxu0 %v3585
      %3921 = vmatmul.mubr.bf16.gmra.mrb[0].mxu0 %v3584
      %v3922 = vpop.f32.mrb[0].mxu0
      %v3923 = vadd.f32 %v3251, %v3922
      %v3924 = vpop.f32.mrb[0].mxu0
      %v3925 = vadd.f32 %v3251, %v3924
      %v3926 = vpop.f32.mrb[0].mxu0
      %v3927 = vadd.f32 %v3256, %v3926
      %v3928 = vpop.f32.mrb[0].mxu0
      %v3929 = vadd.f32 %v3256, %v3928
      %3930 = vmatprep.mubr.bf16.mxu0 %v3587
      %3931 = vmatmul.mubr.bf16.gmra.mrb[0].mxu0 %v3586
      %v3932 = vpop.f32.mrb[0].mxu0
      %v3933 = vadd.f32 %v3261, %v3932
      %v3934 = vpop.f32.mrb[0].mxu0
      %v3935 = vadd.f32 %v3261, %v3934
      %v3936 = vpop.f32.mrb[0].mxu0
      %v3937 = vadd.f32 %v3266, %v3936
      %v3938 = vpop.f32.mrb[0].mxu0
      %v3939 = vadd.f32 %v3266, %v3938
      %3940 = vmatprep.mubr.bf16.mxu0 %v3589
      %3941 = vmatmul.mubr.bf16.gmra.mrb[0].mxu0 %v3588
      %v3942 = vpop.f32.mrb[0].mxu0
      %v3943 = vadd.f32 %v3271, %v3942
      %v3944 = vpop.f32.mrb[0].mxu0
      %v3945 = vadd.f32 %v3271, %v3944
      %v3946 = vpop.f32.mrb[0].mxu0
      %v3947 = vadd.f32 %v3276, %v3946
      %v3948 = vpop.f32.mrb[0].mxu0
      %v3949 = vadd.f32 %v3276, %v3948
      %3950 = vmatprep.mubr.bf16.mxu0 %v3591
      %3951 = vmatmul.mubr.bf16.gmra.mrb[0].mxu0 %v3590
      %v3952 = vpop.f32.mrb[0].mxu0
      %v3953 = vadd.f32 %v3281, %v3952
      %v3954 = vpop.f32.mrb[0].mxu0
      %v3955 = vadd.f32 %v3281, %v3954
      %v3956 = vpop.f32.mrb[0].mxu0
      %v3957 = vadd.f32 %v3286, %v3956
      %v3958 = vpop.f32.mrb[0].mxu0
      %v3959 = vadd.f32 %v3286, %v3958
      %3960 = vmatprep.mubr.bf16.mxu0 %v3593
      %3961 = vmatmul.mubr.bf16.gmra.mrb[0].mxu0 %v3592
      %v3962 = vpop.f32.mrb[0].mxu0
      %v3963 = vadd.f32 %v3291, %v3962
      %v3964 = vpop.f32.mrb[0].mxu0
      %v3965 = vadd.f32 %v3291, %v3964
      %v3966 = vpop.f32.mrb[0].mxu0
      %v3967 = vadd.f32 %v3296, %v3966
      %v3968 = vpop.f32.mrb[0].mxu0
      %v3969 = vadd.f32 %v3296, %v3968
      %3970 = vmatprep.mubr.bf16.mxu0 %v3595
      %3971 = vmatmul.mubr.bf16.gmra.mrb[0].mxu0 %v3594
      %v3972 = vpop.f32.mrb[0].mxu0
      %v3973 = vadd.f32 %v3301, %v3972
      %v3974 = vpop.f32.mrb[0].mxu0
      %v3975 = vadd.f32 %v3301, %v3974
      %v3976 = vpop.f32.mrb[0].mxu0
      %v3977 = vadd.f32 %v3306, %v3976
      %v3978 = vpop.f32.mrb[0].mxu0
      %v3979 = vadd.f32 %v3306, %v3978
      %3980 = vmatprep.mubr.bf16.mxu0 %v3597
      %3981 = vmatmul.mubr.bf16.gmra.mrb[0].mxu0 %v3596
      %v3982 = vpop.f32.mrb[0].mxu0
      %v3983 = vadd.f32 %v3311, %v3982
      %v3984 = vpop.f32.mrb[0].mxu0
      %v3985 = vadd.f32 %v3311, %v3984
      %v3986 = vpop.f32.mrb[0].mxu0
      %v3987 = vadd.f32 %v3316, %v3986
      %v3988 = vpop.f32.mrb[0].mxu0
      %v3989 = vadd.f32 %v3316, %v3988
      %3990 = vmatprep.mubr.bf16.mxu0 %v3599
      %3991 = vmatmul.mubr.bf16.gmra.mrb[0].mxu0 %v3598
      %v3992 = vpop.f32.mrb[0].mxu0
      %v3993 = vadd.f32 %v3321, %v3992
      %v3994 = vpop.f32.mrb[0].mxu0
      %v3995 = vadd.f32 %v3321, %v3994
      %v3996 = vpop.f32.mrb[0].mxu0
      %v3997 = vadd.f32 %v3326, %v3996
      %v3998 = vpop.f32.mrb[0].mxu0
      %v3999 = vadd.f32 %v3326, %v3998
      %4000 = vmatprep.mubr.bf16.mxu0 %v3601
      %4001 = vmatmul.mubr.bf16.gmra.mrb[0].mxu0 %v3600
      %v4002 = vpop.f32.mrb[0].mxu0
      %v4003 = vadd.f32 %v3331, %v4002
      %v4004 = vpop.f32.mrb[0].mxu0
      %v4005 = vadd.f32 %v3331, %v4004
      %v4006 = vpop.f32.mrb[0].mxu0
      %v4007 = vadd.f32 %v3336, %v4006
      %v4008 = vpop.f32.mrb[0].mxu0
      %v4009 = vadd.f32 %v3336, %v4008
      %4010 = vmatprep.mubr.bf16.mxu0 %v3603
      %4011 = vmatmul.mubr.bf16.gmra.mrb[0].mxu0 %v3602
      %v4012 = vpop.f32.mrb[0].mxu0
      %v4013 = vadd.f32 %v3341, %v4012
      %v4014 = vpop.f32.mrb[0].mxu0
      %v4015 = vadd.f32 %v3341, %v4014
      %v4016 = vpop.f32.mrb[0].mxu0
      %v4017 = vadd.f32 %v3346, %v4016
      %v4018 = vpop.f32.mrb[0].mxu0
      %v4019 = vadd.f32 %v3346, %v4018
      %4020 = vdwg.mxu0
      %4021 = vmatprep.subr.bf16.mxu0 %v2903
      %4022 = vmatpush1.bf16.msra.mxu0 %v2902
      %4023 = vmatprep.subr.bf16.mxu0 %v2907
      %4024 = vmatpush1.bf16.msra.mxu0 %v2906
      %4025 = vmatprep.subr.bf16.mxu0 %v2911
      %4026 = vmatpush1.bf16.msra.mxu0 %v2910
      %4027 = vmatprep.subr.bf16.mxu0 %v2915
      %4028 = vmatpush1.bf16.msra.mxu0 %v2914
      %4029 = vmatprep.subr.bf16.mxu0 %v2919
      %4030 = vmatpush1.bf16.msra.mxu0 %v2918
      %4031 = vmatprep.subr.bf16.mxu0 %v2923
      %4032 = vmatpush1.bf16.msra.mxu0 %v2922
      %4033 = vmatprep.subr.bf16.mxu0 %v2927
      %4034 = vmatpush1.bf16.msra.mxu0 %v2926
      %4035 = vmatprep.subr.bf16.mxu0 %v2931
      %4036 = vmatpush1.bf16.msra.mxu0 %v2930
      %4037 = vmatprep.subr.bf16.mxu0 %v2935
      %4038 = vmatpush1.bf16.msra.mxu0 %v2934
      %4039 = vmatprep.subr.bf16.mxu0 %v2939
      %4040 = vmatpush1.bf16.msra.mxu0 %v2938
      %4041 = vmatprep.subr.bf16.mxu0 %v2943
      %4042 = vmatpush1.bf16.msra.mxu0 %v2942
      %4043 = vmatprep.subr.bf16.mxu0 %v2947
      %4044 = vmatpush1.bf16.msra.mxu0 %v2946
      %4045 = vmatprep.subr.bf16.mxu0 %v2951
      %4046 = vmatpush1.bf16.msra.mxu0 %v2950
      %4047 = vmatprep.subr.bf16.mxu0 %v2955
      %4048 = vmatpush1.bf16.msra.mxu0 %v2954
      %4049 = vmatprep.subr.bf16.mxu0 %v2959
      %4050 = vmatpush1.bf16.msra.mxu0 %v2958
      %4051 = vmatprep.subr.bf16.mxu0 %v2963
      %4052 = vmatpush1.bf16.msra.mxu0 %v2962
      %4053 = vmatprep.mubr.bf16.mxu0 %v3541
      %4054 = vmatmul.mubr.bf16.gmra.mrb[0].mxu0 %v3540
      %v4055 = vpop.f32.mrb[0].mxu0
      %v4056 = vadd.f32 %v3031, %v4055
      %v4057 = vpop.f32.mrb[0].mxu0
      %v4058 = vadd.f32 %v3031, %v4057
      %v4059 = vpop.f32.mrb[0].mxu0
      %v4060 = vadd.f32 %v3036, %v4059
      %v4061 = vpop.f32.mrb[0].mxu0
      %v4062 = vadd.f32 %v3036, %v4061
      %4063 = vmatprep.mubr.bf16.mxu0 %v3543
      %4064 = vmatmul.mubr.bf16.gmra.mrb[0].mxu0 %v3542
      %v4065 = vpop.f32.mrb[0].mxu0
      %v4066 = vadd.f32 %v3041, %v4065
      %v4067 = vpop.f32.mrb[0].mxu0
      %v4068 = vadd.f32 %v3041, %v4067
      %v4069 = vpop.f32.mrb[0].mxu0
      %v4070 = vadd.f32 %v3046, %v4069
      %v4071 = vpop.f32.mrb[0].mxu0
      %v4072 = vadd.f32 %v3046, %v4071
      %4073 = vmatprep.mubr.bf16.mxu0 %v3545
      %4074 = vmatmul.mubr.bf16.gmra.mrb[0].mxu0 %v3544
      %v4075 = vpop.f32.mrb[0].mxu0
      %v4076 = vadd.f32 %v3051, %v4075
      %v4077 = vpop.f32.mrb[0].mxu0
      %v4078 = vadd.f32 %v3051, %v4077
      %v4079 = vpop.f32.mrb[0].mxu0
      %v4080 = vadd.f32 %v3056, %v4079
      %v4081 = vpop.f32.mrb[0].mxu0
      %v4082 = vadd.f32 %v3056, %v4081
      %4083 = vmatprep.mubr.bf16.mxu0 %v3547
      %4084 = vmatmul.mubr.bf16.gmra.mrb[0].mxu0 %v3546
      %v4085 = vpop.f32.mrb[0].mxu0
      %v4086 = vadd.f32 %v3061, %v4085
      %v4087 = vpop.f32.mrb[0].mxu0
      %v4088 = vadd.f32 %v3061, %v4087
      %v4089 = vpop.f32.mrb[0].mxu0
      %v4090 = vadd.f32 %v3066, %v4089
      %v4091 = vpop.f32.mrb[0].mxu0
      %v4092 = vadd.f32 %v3066, %v4091
      %4093 = vmatprep.mubr.bf16.mxu0 %v3549
      %4094 = vmatmul.mubr.bf16.gmra.mrb[0].mxu0 %v3548
      %v4095 = vpop.f32.mrb[0].mxu0
      %v4096 = vadd.f32 %v3071, %v4095
      %v4097 = vpop.f32.mrb[0].mxu0
      %v4098 = vadd.f32 %v3071, %v4097
      %v4099 = vpop.f32.mrb[0].mxu0
      %v4100 = vadd.f32 %v3076, %v4099
      %v4101 = vpop.f32.mrb[0].mxu0
      %v4102 = vadd.f32 %v3076, %v4101
      %4103 = vmatprep.mubr.bf16.mxu0 %v3551
      %4104 = vmatmul.mubr.bf16.gmra.mrb[0].mxu0 %v3550
      %v4105 = vpop.f32.mrb[0].mxu0
      %v4106 = vadd.f32 %v3081, %v4105
      %v4107 = vpop.f32.mrb[0].mxu0
      %v4108 = vadd.f32 %v3081, %v4107
      %v4109 = vpop.f32.mrb[0].mxu0
      %v4110 = vadd.f32 %v3086, %v4109
      %v4111 = vpop.f32.mrb[0].mxu0
      %v4112 = vadd.f32 %v3086, %v4111
      %4113 = vmatprep.mubr.bf16.mxu0 %v3553
      %4114 = vmatmul.mubr.bf16.gmra.mrb[0].mxu0 %v3552
      %v4115 = vpop.f32.mrb[0].mxu0
      %v4116 = vadd.f32 %v3091, %v4115
      %v4117 = vpop.f32.mrb[0].mxu0
      %v4118 = vadd.f32 %v3091, %v4117
      %v4119 = vpop.f32.mrb[0].mxu0
      %v4120 = vadd.f32 %v3096, %v4119
      %v4121 = vpop.f32.mrb[0].mxu0
      %v4122 = vadd.f32 %v3096, %v4121
      %4123 = vmatprep.mubr.bf16.mxu0 %v3555
      %4124 = vmatmul.mubr.bf16.gmra.mrb[0].mxu0 %v3554
      %v4125 = vpop.f32.mrb[0].mxu0
      %v4126 = vadd.f32 %v3101, %v4125
      %v4127 = vpop.f32.mrb[0].mxu0
      %v4128 = vadd.f32 %v3101, %v4127
      %v4129 = vpop.f32.mrb[0].mxu0
      %v4130 = vadd.f32 %v3106, %v4129
      %v4131 = vpop.f32.mrb[0].mxu0
      %v4132 = vadd.f32 %v3106, %v4131
      %4133 = vmatprep.mubr.bf16.mxu0 %v3557
      %4134 = vmatmul.mubr.bf16.gmra.mrb[0].mxu0 %v3556
      %v4135 = vpop.f32.mrb[0].mxu0
      %v4136 = vadd.f32 %v3111, %v4135
      %v4137 = vpop.f32.mrb[0].mxu0
      %v4138 = vadd.f32 %v3111, %v4137
      %v4139 = vpop.f32.mrb[0].mxu0
      %v4140 = vadd.f32 %v3116, %v4139
      %v4141 = vpop.f32.mrb[0].mxu0
      %v4142 = vadd.f32 %v3116, %v4141
      %4143 = vmatprep.mubr.bf16.mxu0 %v3559
      %4144 = vmatmul.mubr.bf16.gmra.mrb[0].mxu0 %v3558
      %v4145 = vpop.f32.mrb[0].mxu0
      %v4146 = vadd.f32 %v3121, %v4145
      %v4147 = vpop.f32.mrb[0].mxu0
      %v4148 = vadd.f32 %v3121, %v4147
      %v4149 = vpop.f32.mrb[0].mxu0
      %v4150 = vadd.f32 %v3126, %v4149
      %v4151 = vpop.f32.mrb[0].mxu0
      %v4152 = vadd.f32 %v3126, %v4151
      %4153 = vmatprep.mubr.bf16.mxu0 %v3561
      %4154 = vmatmul.mubr.bf16.gmra.mrb[0].mxu0 %v3560
      %v4155 = vpop.f32.mrb[0].mxu0
      %v4156 = vadd.f32 %v3131, %v4155
      %v4157 = vpop.f32.mrb[0].mxu0
      %v4158 = vadd.f32 %v3131, %v4157
      %v4159 = vpop.f32.mrb[0].mxu0
      %v4160 = vadd.f32 %v3136, %v4159
      %v4161 = vpop.f32.mrb[0].mxu0
      %v4162 = vadd.f32 %v3136, %v4161
      %4163 = vmatprep.mubr.bf16.mxu0 %v3563
      %4164 = vmatmul.mubr.bf16.gmra.mrb[0].mxu0 %v3562
      %v4165 = vpop.f32.mrb[0].mxu0
      %v4166 = vadd.f32 %v3141, %v4165
      %v4167 = vpop.f32.mrb[0].mxu0
      %v4168 = vadd.f32 %v3141, %v4167
      %v4169 = vpop.f32.mrb[0].mxu0
      %v4170 = vadd.f32 %v3146, %v4169
      %v4171 = vpop.f32.mrb[0].mxu0
      %v4172 = vadd.f32 %v3146, %v4171
      %4173 = vmatprep.mubr.bf16.mxu0 %v3565
      %4174 = vmatmul.mubr.bf16.gmra.mrb[0].mxu0 %v3564
      %v4175 = vpop.f32.mrb[0].mxu0
      %v4176 = vadd.f32 %v3151, %v4175
      %v4177 = vpop.f32.mrb[0].mxu0
      %v4178 = vadd.f32 %v3151, %v4177
      %v4179 = vpop.f32.mrb[0].mxu0
      %v4180 = vadd.f32 %v3156, %v4179
      %v4181 = vpop.f32.mrb[0].mxu0
      %v4182 = vadd.f32 %v3156, %v4181
      %4183 = vmatprep.mubr.bf16.mxu0 %v3567
      %4184 = vmatmul.mubr.bf16.gmra.mrb[0].mxu0 %v3566
      %v4185 = vpop.f32.mrb[0].mxu0
      %v4186 = vadd.f32 %v3161, %v4185
      %v4187 = vpop.f32.mrb[0].mxu0
      %v4188 = vadd.f32 %v3161, %v4187
      %v4189 = vpop.f32.mrb[0].mxu0
      %v4190 = vadd.f32 %v3166, %v4189
      %v4191 = vpop.f32.mrb[0].mxu0
      %v4192 = vadd.f32 %v3166, %v4191
      %4193 = vmatprep.mubr.bf16.mxu0 %v3569
      %4194 = vmatmul.mubr.bf16.gmra.mrb[0].mxu0 %v3568
      %v4195 = vpop.f32.mrb[0].mxu0
      %v4196 = vadd.f32 %v3171, %v4195
      %v4197 = vpop.f32.mrb[0].mxu0
      %v4198 = vadd.f32 %v3171, %v4197
      %v4199 = vpop.f32.mrb[0].mxu0
      %v4200 = vadd.f32 %v3176, %v4199
      %v4201 = vpop.f32.mrb[0].mxu0
      %v4202 = vadd.f32 %v3176, %v4201
      %4203 = vmatprep.mubr.bf16.mxu0 %v3571
      %4204 = vmatmul.mubr.bf16.gmra.mrb[0].mxu0 %v3570
      %v4205 = vpop.f32.mrb[0].mxu0
      %v4206 = vadd.f32 %v3181, %v4205
      %v4207 = vpop.f32.mrb[0].mxu0
      %v4208 = vadd.f32 %v3181, %v4207
      %v4209 = vpop.f32.mrb[0].mxu0
      %v4210 = vadd.f32 %v3186, %v4209
      %v4211 = vpop.f32.mrb[0].mxu0
      %v4212 = vadd.f32 %v3186, %v4211
      %4213 = vmatprep.mubr.bf16.mxu0 %v3573
      %4214 = vmatmul.mubr.bf16.gmra.mrb[0].mxu0 %v3572
      %v4215 = vpop.f32.mrb[0].mxu0
      %v4216 = vadd.f32 %v3191, %v4215
      %v4217 = vpop.f32.mrb[0].mxu0
      %v4218 = vadd.f32 %v3191, %v4217
      %v4219 = vpop.f32.mrb[0].mxu0
      %v4220 = vadd.f32 %v3196, %v4219
      %v4221 = vpop.f32.mrb[0].mxu0
      %v4222 = vadd.f32 %v3196, %v4221
      %4223 = vmatprep.mubr.bf16.mxu0 %v3575
      %4224 = vmatmul.mubr.bf16.gmra.mrb[0].mxu0 %v3574
      %v4225 = vpop.f32.mrb[0].mxu0
      %v4226 = vadd.f32 %v3201, %v4225
      %v4227 = vpop.f32.mrb[0].mxu0
      %v4228 = vadd.f32 %v3201, %v4227
      %v4229 = vpop.f32.mrb[0].mxu0
      %v4230 = vadd.f32 %v3206, %v4229
      %v4231 = vpop.f32.mrb[0].mxu0
      %v4232 = vadd.f32 %v3206, %v4231
      %4233 = vmatprep.mubr.bf16.mxu0 %v3577
      %4234 = vmatmul.mubr.bf16.gmra.mrb[0].mxu0 %v3576
      %v4235 = vpop.f32.mrb[0].mxu0
      %v4236 = vadd.f32 %v3211, %v4235
      %v4237 = vpop.f32.mrb[0].mxu0
      %v4238 = vadd.f32 %v3211, %v4237
      %v4239 = vpop.f32.mrb[0].mxu0
      %v4240 = vadd.f32 %v3216, %v4239
      %v4241 = vpop.f32.mrb[0].mxu0
      %v4242 = vadd.f32 %v3216, %v4241
      %4243 = vmatprep.mubr.bf16.mxu0 %v3579
      %4244 = vmatmul.mubr.bf16.gmra.mrb[0].mxu0 %v3578
      %v4245 = vpop.f32.mrb[0].mxu0
      %v4246 = vadd.f32 %v3221, %v4245
      %v4247 = vpop.f32.mrb[0].mxu0
      %v4248 = vadd.f32 %v3221, %v4247
      %v4249 = vpop.f32.mrb[0].mxu0
      %v4250 = vadd.f32 %v3226, %v4249
      %v4251 = vpop.f32.mrb[0].mxu0
      %v4252 = vadd.f32 %v3226, %v4251
      %4253 = vmatprep.mubr.bf16.mxu0 %v3581
      %4254 = vmatmul.mubr.bf16.gmra.mrb[0].mxu0 %v3580
      %v4255 = vpop.f32.mrb[0].mxu0
      %v4256 = vadd.f32 %v3231, %v4255
      %v4257 = vpop.f32.mrb[0].mxu0
      %v4258 = vadd.f32 %v3231, %v4257
      %v4259 = vpop.f32.mrb[0].mxu0
      %v4260 = vadd.f32 %v3236, %v4259
      %v4261 = vpop.f32.mrb[0].mxu0
      %v4262 = vadd.f32 %v3236, %v4261
      %4263 = vmatprep.mubr.bf16.mxu0 %v3583
      %4264 = vmatmul.mubr.bf16.gmra.mrb[0].mxu0 %v3582
      %v4265 = vpop.f32.mrb[0].mxu0
      %v4266 = vadd.f32 %v3241, %v4265
      %v4267 = vpop.f32.mrb[0].mxu0
      %v4268 = vadd.f32 %v3241, %v4267
      %v4269 = vpop.f32.mrb[0].mxu0
      %v4270 = vadd.f32 %v3246, %v4269
      %v4271 = vpop.f32.mrb[0].mxu0
      %v4272 = vadd.f32 %v3246, %v4271
      %4273 = vmatprep.mubr.bf16.mxu0 %v3585
      %4274 = vmatmul.mubr.bf16.gmra.mrb[0].mxu0 %v3584
      %v4275 = vpop.f32.mrb[0].mxu0
      %v4276 = vadd.f32 %v3251, %v4275
      %v4277 = vpop.f32.mrb[0].mxu0
      %v4278 = vadd.f32 %v3251, %v4277
      %v4279 = vpop.f32.mrb[0].mxu0
      %v4280 = vadd.f32 %v3256, %v4279
      %v4281 = vpop.f32.mrb[0].mxu0
      %v4282 = vadd.f32 %v3256, %v4281
      %4283 = vmatprep.mubr.bf16.mxu0 %v3587
      %4284 = vmatmul.mubr.bf16.gmra.mrb[0].mxu0 %v3586
      %v4285 = vpop.f32.mrb[0].mxu0
      %v4286 = vadd.f32 %v3261, %v4285
      %v4287 = vpop.f32.mrb[0].mxu0
      %v4288 = vadd.f32 %v3261, %v4287
      %v4289 = vpop.f32.mrb[0].mxu0
      %v4290 = vadd.f32 %v3266, %v4289
      %v4291 = vpop.f32.mrb[0].mxu0
      %v4292 = vadd.f32 %v3266, %v4291
      %4293 = vmatprep.mubr.bf16.mxu0 %v3589
      %4294 = vmatmul.mubr.bf16.gmra.mrb[0].mxu0 %v3588
      %v4295 = vpop.f32.mrb[0].mxu0
      %v4296 = vadd.f32 %v3271, %v4295
      %v4297 = vpop.f32.mrb[0].mxu0
      %v4298 = vadd.f32 %v3271, %v4297
      %v4299 = vpop.f32.mrb[0].mxu0
      %v4300 = vadd.f32 %v3276, %v4299
      %v4301 = vpop.f32.mrb[0].mxu0
      %v4302 = vadd.f32 %v3276, %v4301
      %4303 = vmatprep.mubr.bf16.mxu0 %v3591
      %4304 = vmatmul.mubr.bf16.gmra.mrb[0].mxu0 %v3590
      %v4305 = vpop.f32.mrb[0].mxu0
      %v4306 = vadd.f32 %v3281, %v4305
      %v4307 = vpop.f32.mrb[0].mxu0
      %v4308 = vadd.f32 %v3281, %v4307
      %v4309 = vpop.f32.mrb[0].mxu0
      %v4310 = vadd.f32 %v3286, %v4309
      %v4311 = vpop.f32.mrb[0].mxu0
      %v4312 = vadd.f32 %v3286, %v4311
      %4313 = vmatprep.mubr.bf16.mxu0 %v3593
      %4314 = vmatmul.mubr.bf16.gmra.mrb[0].mxu0 %v3592
      %v4315 = vpop.f32.mrb[0].mxu0
      %v4316 = vadd.f32 %v3291, %v4315
      %v4317 = vpop.f32.mrb[0].mxu0
      %v4318 = vadd.f32 %v3291, %v4317
      %v4319 = vpop.f32.mrb[0].mxu0
      %v4320 = vadd.f32 %v3296, %v4319
      %v4321 = vpop.f32.mrb[0].mxu0
      %v4322 = vadd.f32 %v3296, %v4321
      %4323 = vmatprep.mubr.bf16.mxu0 %v3595
      %4324 = vmatmul.mubr.bf16.gmra.mrb[0].mxu0 %v3594
      %v4325 = vpop.f32.mrb[0].mxu0
      %v4326 = vadd.f32 %v3301, %v4325
      %v4327 = vpop.f32.mrb[0].mxu0
      %v4328 = vadd.f32 %v3301, %v4327
      %v4329 = vpop.f32.mrb[0].mxu0
      %v4330 = vadd.f32 %v3306, %v4329
      %v4331 = vpop.f32.mrb[0].mxu0
      %v4332 = vadd.f32 %v3306, %v4331
      %4333 = vmatprep.mubr.bf16.mxu0 %v3597
      %4334 = vmatmul.mubr.bf16.gmra.mrb[0].mxu0 %v3596
      %v4335 = vpop.f32.mrb[0].mxu0
      %v4336 = vadd.f32 %v3311, %v4335
      %v4337 = vpop.f32.mrb[0].mxu0
      %v4338 = vadd.f32 %v3311, %v4337
      %v4339 = vpop.f32.mrb[0].mxu0
      %v4340 = vadd.f32 %v3316, %v4339
      %v4341 = vpop.f32.mrb[0].mxu0
      %v4342 = vadd.f32 %v3316, %v4341
      %4343 = vmatprep.mubr.bf16.mxu0 %v3599
      %4344 = vmatmul.mubr.bf16.gmra.mrb[0].mxu0 %v3598
      %v4345 = vpop.f32.mrb[0].mxu0
      %v4346 = vadd.f32 %v3321, %v4345
      %v4347 = vpop.f32.mrb[0].mxu0
      %v4348 = vadd.f32 %v3321, %v4347
      %v4349 = vpop.f32.mrb[0].mxu0
      %v4350 = vadd.f32 %v3326, %v4349
      %v4351 = vpop.f32.mrb[0].mxu0
      %v4352 = vadd.f32 %v3326, %v4351
      %4353 = vmatprep.mubr.bf16.mxu0 %v3601
      %4354 = vmatmul.mubr.bf16.gmra.mrb[0].mxu0 %v3600
      %v4355 = vpop.f32.mrb[0].mxu0
      %v4356 = vadd.f32 %v3331, %v4355
      %v4357 = vpop.f32.mrb[0].mxu0
      %v4358 = vadd.f32 %v3331, %v4357
      %v4359 = vpop.f32.mrb[0].mxu0
      %v4360 = vadd.f32 %v3336, %v4359
      %v4361 = vpop.f32.mrb[0].mxu0
      %v4362 = vadd.f32 %v3336, %v4361
      %4363 = vmatprep.mubr.bf16.mxu0 %v3603
      %4364 = vmatmul.mubr.bf16.gmra.mrb[0].mxu0 %v3602
      %v4365 = vpop.f32.mrb[0].mxu0
      %v4366 = vadd.f32 %v3341, %v4365
      %v4367 = vpop.f32.mrb[0].mxu0
      %v4368 = vadd.f32 %v3341, %v4367
      %v4369 = vpop.f32.mrb[0].mxu0
      %v4370 = vadd.f32 %v3346, %v4369
      %v4371 = vpop.f32.mrb[0].mxu0
      %v4372 = vadd.f32 %v3346, %v4371
      %4373 = vdwg.mxu0
      %v4374 = vmax.f32 %v3703, 0.0
      %v4375 = vmax.f32 %v3705, 0.0
      %v4376 = vmax.f32 %v4056, 0.0
      %v4377 = vmax.f32 %v4058, 0.0
      %v4378 = vmax.f32 %v3707, 0.0
      %v4379 = vmax.f32 %v3709, 0.0
      %v4380 = vmax.f32 %v4060, 0.0
      %v4381 = vmax.f32 %v4062, 0.0
      %v4382 = vmax.f32 %v3713, 0.0
      %v4383 = vmax.f32 %v3715, 0.0
      %v4384 = vmax.f32 %v4066, 0.0
      %v4385 = vmax.f32 %v4068, 0.0
      %v4386 = vmax.f32 %v3717, 0.0
      %v4387 = vmax.f32 %v3719, 0.0
      %v4388 = vmax.f32 %v4070, 0.0
      %v4389 = vmax.f32 %v4072, 0.0
      %v4390 = vmax.f32 %v3723, 0.0
      %v4391 = vmax.f32 %v3725, 0.0
      %v4392 = vmax.f32 %v4076, 0.0
      %v4393 = vmax.f32 %v4078, 0.0
      %v4394 = vmax.f32 %v3727, 0.0
      %v4395 = vmax.f32 %v3729, 0.0
      %v4396 = vmax.f32 %v4080, 0.0
      %v4397 = vmax.f32 %v4082, 0.0
      %v4398 = vmax.f32 %v3733, 0.0
      %v4399 = vmax.f32 %v3735, 0.0
      %v4400 = vmax.f32 %v4086, 0.0
      %v4401 = vmax.f32 %v4088, 0.0
      %v4402 = vmax.f32 %v3737, 0.0
      %v4403 = vmax.f32 %v3739, 0.0
      %v4404 = vmax.f32 %v4090, 0.0
      %v4405 = vmax.f32 %v4092, 0.0
      %v4406 = vmax.f32 %v3743, 0.0
      %v4407 = vmax.f32 %v3745, 0.0
      %v4408 = vmax.f32 %v4096, 0.0
      %v4409 = vmax.f32 %v4098, 0.0
      %v4410 = vmax.f32 %v3747, 0.0
      %v4411 = vmax.f32 %v3749, 0.0
      %v4412 = vmax.f32 %v4100, 0.0
      %v4413 = vmax.f32 %v4102, 0.0
      %v4414 = vmax.f32 %v3753, 0.0
      %v4415 = vmax.f32 %v3755, 0.0
      %v4416 = vmax.f32 %v4106, 0.0
      %v4417 = vmax.f32 %v4108, 0.0
      %v4418 = vmax.f32 %v3757, 0.0
      %v4419 = vmax.f32 %v3759, 0.0
      %v4420 = vmax.f32 %v4110, 0.0
      %v4421 = vmax.f32 %v4112, 0.0
      %v4422 = vmax.f32 %v3763, 0.0
      %v4423 = vmax.f32 %v3765, 0.0
      %v4424 = vmax.f32 %v4116, 0.0
      %v4425 = vmax.f32 %v4118, 0.0
      %v4426 = vmax.f32 %v3767, 0.0
      %v4427 = vmax.f32 %v3769, 0.0
      %v4428 = vmax.f32 %v4120, 0.0
      %v4429 = vmax.f32 %v4122, 0.0
      %v4430 = vmax.f32 %v3773, 0.0
      %v4431 = vmax.f32 %v3775, 0.0
      %v4432 = vmax.f32 %v4126, 0.0
      %v4433 = vmax.f32 %v4128, 0.0
      %v4434 = vmax.f32 %v3777, 0.0
      %v4435 = vmax.f32 %v3779, 0.0
      %v4436 = vmax.f32 %v4130, 0.0
      %v4437 = vmax.f32 %v4132, 0.0
      %v4438 = vmax.f32 %v3783, 0.0
      %v4439 = vmax.f32 %v3785, 0.0
      %v4440 = vmax.f32 %v4136, 0.0
      %v4441 = vmax.f32 %v4138, 0.0
      %v4442 = vmax.f32 %v3787, 0.0
      %v4443 = vmax.f32 %v3789, 0.0
      %v4444 = vmax.f32 %v4140, 0.0
      %v4445 = vmax.f32 %v4142, 0.0
      %v4446 = vmax.f32 %v3793, 0.0
      %v4447 = vmax.f32 %v3795, 0.0
      %v4448 = vmax.f32 %v4146, 0.0
      %v4449 = vmax.f32 %v4148, 0.0
      %v4450 = vmax.f32 %v3797, 0.0
      %v4451 = vmax.f32 %v3799, 0.0
      %v4452 = vmax.f32 %v4150, 0.0
      %v4453 = vmax.f32 %v4152, 0.0
      %v4454 = vmax.f32 %v3803, 0.0
      %v4455 = vmax.f32 %v3805, 0.0
      %v4456 = vmax.f32 %v4156, 0.0
      %v4457 = vmax.f32 %v4158, 0.0
      %v4458 = vmax.f32 %v3807, 0.0
      %v4459 = vmax.f32 %v3809, 0.0
      %v4460 = vmax.f32 %v4160, 0.0
      %v4461 = vmax.f32 %v4162, 0.0
      %v4462 = vmax.f32 %v3813, 0.0
      %v4463 = vmax.f32 %v3815, 0.0
      %v4464 = vmax.f32 %v4166, 0.0
      %v4465 = vmax.f32 %v4168, 0.0
      %v4466 = vmax.f32 %v3817, 0.0
      %v4467 = vmax.f32 %v3819, 0.0
      %v4468 = vmax.f32 %v4170, 0.0
      %v4469 = vmax.f32 %v4172, 0.0
      %v4470 = vmax.f32 %v3823, 0.0
      %v4471 = vmax.f32 %v3825, 0.0
      %v4472 = vmax.f32 %v4176, 0.0
      %v4473 = vmax.f32 %v4178, 0.0
      %v4474 = vmax.f32 %v3827, 0.0
      %v4475 = vmax.f32 %v3829, 0.0
      %v4476 = vmax.f32 %v4180, 0.0
      %v4477 = vmax.f32 %v4182, 0.0
      %v4478 = vmax.f32 %v3833, 0.0
      %v4479 = vmax.f32 %v3835, 0.0
      %v4480 = vmax.f32 %v4186, 0.0
      %v4481 = vmax.f32 %v4188, 0.0
      %v4482 = vmax.f32 %v3837, 0.0
      %v4483 = vmax.f32 %v3839, 0.0
      %v4484 = vmax.f32 %v4190, 0.0
      %v4485 = vmax.f32 %v4192, 0.0
      %v4486 = vmax.f32 %v3843, 0.0
      %v4487 = vmax.f32 %v3845, 0.0
      %v4488 = vmax.f32 %v4196, 0.0
      %v4489 = vmax.f32 %v4198, 0.0
      %v4490 = vmax.f32 %v3847, 0.0
      %v4491 = vmax.f32 %v3849, 0.0
      %v4492 = vmax.f32 %v4200, 0.0
      %v4493 = vmax.f32 %v4202, 0.0
      %v4494 = vmax.f32 %v3853, 0.0
      %v4495 = vmax.f32 %v3855, 0.0
      %v4496 = vmax.f32 %v4206, 0.0
      %v4497 = vmax.f32 %v4208, 0.0
      %v4498 = vmax.f32 %v3857, 0.0
      %v4499 = vmax.f32 %v3859, 0.0
      %v4500 = vmax.f32 %v4210, 0.0
      %v4501 = vmax.f32 %v4212, 0.0
      %v4502 = vmax.f32 %v3863, 0.0
      %v4503 = vmax.f32 %v3865, 0.0
      %v4504 = vmax.f32 %v4216, 0.0
      %v4505 = vmax.f32 %v4218, 0.0
      %v4506 = vmax.f32 %v3867, 0.0
      %v4507 = vmax.f32 %v3869, 0.0
      %v4508 = vmax.f32 %v4220, 0.0
      %v4509 = vmax.f32 %v4222, 0.0
      %v4510 = vmax.f32 %v3873, 0.0
      %v4511 = vmax.f32 %v3875, 0.0
      %v4512 = vmax.f32 %v4226, 0.0
      %v4513 = vmax.f32 %v4228, 0.0
      %v4514 = vmax.f32 %v3877, 0.0
      %v4515 = vmax.f32 %v3879, 0.0
      %v4516 = vmax.f32 %v4230, 0.0
      %v4517 = vmax.f32 %v4232, 0.0
      %v4518 = vmax.f32 %v3883, 0.0
      %v4519 = vmax.f32 %v3885, 0.0
      %v4520 = vmax.f32 %v4236, 0.0
      %v4521 = vmax.f32 %v4238, 0.0
      %v4522 = vmax.f32 %v3887, 0.0
      %v4523 = vmax.f32 %v3889, 0.0
      %v4524 = vmax.f32 %v4240, 0.0
      %v4525 = vmax.f32 %v4242, 0.0
      %v4526 = vmax.f32 %v3893, 0.0
      %v4527 = vmax.f32 %v3895, 0.0
      %v4528 = vmax.f32 %v4246, 0.0
      %v4529 = vmax.f32 %v4248, 0.0
      %v4530 = vmax.f32 %v3897, 0.0
      %v4531 = vmax.f32 %v3899, 0.0
      %v4532 = vmax.f32 %v4250, 0.0
      %v4533 = vmax.f32 %v4252, 0.0
      %v4534 = vmax.f32 %v3903, 0.0
      %v4535 = vmax.f32 %v3905, 0.0
      %v4536 = vmax.f32 %v4256, 0.0
      %v4537 = vmax.f32 %v4258, 0.0
      %v4538 = vmax.f32 %v3907, 0.0
      %v4539 = vmax.f32 %v3909, 0.0
      %v4540 = vmax.f32 %v4260, 0.0
      %v4541 = vmax.f32 %v4262, 0.0
      %v4542 = vmax.f32 %v3913, 0.0
      %v4543 = vmax.f32 %v3915, 0.0
      %v4544 = vmax.f32 %v4266, 0.0
      %v4545 = vmax.f32 %v4268, 0.0
      %v4546 = vmax.f32 %v3917, 0.0
      %v4547 = vmax.f32 %v3919, 0.0
      %v4548 = vmax.f32 %v4270, 0.0
      %v4549 = vmax.f32 %v4272, 0.0
      %v4550 = vmax.f32 %v3923, 0.0
      %v4551 = vmax.f32 %v3925, 0.0
      %v4552 = vmax.f32 %v4276, 0.0
      %v4553 = vmax.f32 %v4278, 0.0
      %v4554 = vmax.f32 %v3927, 0.0
      %v4555 = vmax.f32 %v3929, 0.0
      %v4556 = vmax.f32 %v4280, 0.0
      %v4557 = vmax.f32 %v4282, 0.0
      %v4558 = vmax.f32 %v3933, 0.0
      %v4559 = vmax.f32 %v3935, 0.0
      %v4560 = vmax.f32 %v4286, 0.0
      %v4561 = vmax.f32 %v4288, 0.0
      %v4562 = vmax.f32 %v3937, 0.0
      %v4563 = vmax.f32 %v3939, 0.0
      %v4564 = vmax.f32 %v4290, 0.0
      %v4565 = vmax.f32 %v4292, 0.0
      %v4566 = vmax.f32 %v3943, 0.0
      %v4567 = vmax.f32 %v3945, 0.0
      %v4568 = vmax.f32 %v4296, 0.0
      %v4569 = vmax.f32 %v4298, 0.0
      %v4570 = vmax.f32 %v3947, 0.0
      %v4571 = vmax.f32 %v3949, 0.0
      %v4572 = vmax.f32 %v4300, 0.0
      %v4573 = vmax.f32 %v4302, 0.0
      %v4574 = vmax.f32 %v3953, 0.0
      %v4575 = vmax.f32 %v3955, 0.0
      %v4576 = vmax.f32 %v4306, 0.0
      %v4577 = vmax.f32 %v4308, 0.0
      %v4578 = vmax.f32 %v3957, 0.0
      %v4579 = vmax.f32 %v3959, 0.0
      %v4580 = vmax.f32 %v4310, 0.0
      %v4581 = vmax.f32 %v4312, 0.0
      %v4582 = vmax.f32 %v3963, 0.0
      %v4583 = vmax.f32 %v3965, 0.0
      %v4584 = vmax.f32 %v4316, 0.0
      %v4585 = vmax.f32 %v4318, 0.0
      %v4586 = vmax.f32 %v3967, 0.0
      %v4587 = vmax.f32 %v3969, 0.0
      %v4588 = vmax.f32 %v4320, 0.0
      %v4589 = vmax.f32 %v4322, 0.0
      %v4590 = vmax.f32 %v3973, 0.0
      %v4591 = vmax.f32 %v3975, 0.0
      %v4592 = vmax.f32 %v4326, 0.0
      %v4593 = vmax.f32 %v4328, 0.0
      %v4594 = vmax.f32 %v3977, 0.0
      %v4595 = vmax.f32 %v3979, 0.0
      %v4596 = vmax.f32 %v4330, 0.0
      %v4597 = vmax.f32 %v4332, 0.0
      %v4598 = vmax.f32 %v3983, 0.0
      %v4599 = vmax.f32 %v3985, 0.0
      %v4600 = vmax.f32 %v4336, 0.0
      %v4601 = vmax.f32 %v4338, 0.0
      %v4602 = vmax.f32 %v3987, 0.0
      %v4603 = vmax.f32 %v3989, 0.0
      %v4604 = vmax.f32 %v4340, 0.0
      %v4605 = vmax.f32 %v4342, 0.0
      %v4606 = vmax.f32 %v3993, 0.0
      %v4607 = vmax.f32 %v3995, 0.0
      %v4608 = vmax.f32 %v4346, 0.0
      %v4609 = vmax.f32 %v4348, 0.0
      %v4610 = vmax.f32 %v3997, 0.0
      %v4611 = vmax.f32 %v3999, 0.0
      %v4612 = vmax.f32 %v4350, 0.0
      %v4613 = vmax.f32 %v4352, 0.0
      %v4614 = vmax.f32 %v4003, 0.0
      %v4615 = vmax.f32 %v4005, 0.0
      %v4616 = vmax.f32 %v4356, 0.0
      %v4617 = vmax.f32 %v4358, 0.0
      %v4618 = vmax.f32 %v4007, 0.0
      %v4619 = vmax.f32 %v4009, 0.0
      %v4620 = vmax.f32 %v4360, 0.0
      %v4621 = vmax.f32 %v4362, 0.0
      %v4622 = vmax.f32 %v4013, 0.0
      %v4623 = vmax.f32 %v4015, 0.0
      %v4624 = vmax.f32 %v4366, 0.0
      %v4625 = vmax.f32 %v4368, 0.0
      %v4626 = vmax.f32 %v4017, 0.0
      %v4627 = vmax.f32 %v4019, 0.0
      %v4628 = vmax.f32 %v4370, 0.0
      %v4629 = vmax.f32 %v4372, 0.0
      %v4630 = vld [vmem:[#allocation2] sm:$0xff]
      %v4631 = vld [vmem:[#allocation2 + $0x8] sm:$0xff]
      %v4632 = vld [vmem:[#allocation2 + $0x10] sm:$0xff]
      %v4633 = vld [vmem:[#allocation2 + $0x18] sm:$0xff]
      %v4634 = vld [vmem:[#allocation2 + $0x20] sm:$0xff]
      %v4635 = vld [vmem:[#allocation2 + $0x28] sm:$0xff]
      %v4636 = vld [vmem:[#allocation2 + $0x30] sm:$0xff]
      %v4637 = vld [vmem:[#allocation2 + $0x38] sm:$0xff]
      %v4638 = vld [vmem:[#allocation2 + $0x40] sm:$0xff]
      %v4639 = vld [vmem:[#allocation2 + $0x48] sm:$0xff]
      %v4640 = vld [vmem:[#allocation2 + $0x50] sm:$0xff]
      %v4641 = vld [vmem:[#allocation2 + $0x58] sm:$0xff]
      %v4642 = vld [vmem:[#allocation2 + $0x60] sm:$0xff]
      %v4643 = vld [vmem:[#allocation2 + $0x68] sm:$0xff]
      %v4644 = vld [vmem:[#allocation2 + $0x70] sm:$0xff]
      %v4645 = vld [vmem:[#allocation2 + $0x78] sm:$0xff]
      %v4646 = vld [vmem:[#allocation2 + $0x80] sm:$0xff]
      %v4647 = vld [vmem:[#allocation2 + $0x88] sm:$0xff]
      %v4648 = vld [vmem:[#allocation2 + $0x90] sm:$0xff]
      %v4649 = vld [vmem:[#allocation2 + $0x98] sm:$0xff]
      %v4650 = vld [vmem:[#allocation2 + $0xa0] sm:$0xff]
      %v4651 = vld [vmem:[#allocation2 + $0xa8] sm:$0xff]
      %v4652 = vld [vmem:[#allocation2 + $0xb0] sm:$0xff]
      %v4653 = vld [vmem:[#allocation2 + $0xb8] sm:$0xff]
      %v4654 = vld [vmem:[#allocation2 + $0xc0] sm:$0xff]
      %v4655 = vld [vmem:[#allocation2 + $0xc8] sm:$0xff]
      %v4656 = vld [vmem:[#allocation2 + $0xd0] sm:$0xff]
      %v4657 = vld [vmem:[#allocation2 + $0xd8] sm:$0xff]
      %v4658 = vld [vmem:[#allocation2 + $0xe0] sm:$0xff]
      %v4659 = vld [vmem:[#allocation2 + $0xe8] sm:$0xff]
      %v4660 = vld [vmem:[#allocation2 + $0xf0] sm:$0xff]
      %v4661 = vld [vmem:[#allocation2 + $0xf8] sm:$0xff]
      %v4662 = vld [vmem:[#allocation2 + $0x100] sm:$0xff]
      %v4663 = vld [vmem:[#allocation2 + $0x108] sm:$0xff]
      %v4664 = vld [vmem:[#allocation2 + $0x110] sm:$0xff]
      %v4665 = vld [vmem:[#allocation2 + $0x118] sm:$0xff]
      %v4666 = vld [vmem:[#allocation2 + $0x120] sm:$0xff]
      %v4667 = vld [vmem:[#allocation2 + $0x128] sm:$0xff]
      %v4668 = vld [vmem:[#allocation2 + $0x130] sm:$0xff]
      %v4669 = vld [vmem:[#allocation2 + $0x138] sm:$0xff]
      %v4670 = vld [vmem:[#allocation2 + $0x140] sm:$0xff]
      %v4671 = vld [vmem:[#allocation2 + $0x148] sm:$0xff]
      %v4672 = vld [vmem:[#allocation2 + $0x150] sm:$0xff]
      %v4673 = vld [vmem:[#allocation2 + $0x158] sm:$0xff]
      %v4674 = vld [vmem:[#allocation2 + $0x160] sm:$0xff]
      %v4675 = vld [vmem:[#allocation2 + $0x168] sm:$0xff]
      %v4676 = vld [vmem:[#allocation2 + $0x170] sm:$0xff]
      %v4677 = vld [vmem:[#allocation2 + $0x178] sm:$0xff]
      %v4678 = vld [vmem:[#allocation2 + $0x180] sm:$0xff]
      %v4679 = vld [vmem:[#allocation2 + $0x188] sm:$0xff]
      %v4680 = vld [vmem:[#allocation2 + $0x190] sm:$0xff]
      %v4681 = vld [vmem:[#allocation2 + $0x198] sm:$0xff]
      %v4682 = vld [vmem:[#allocation2 + $0x1a0] sm:$0xff]
      %v4683 = vld [vmem:[#allocation2 + $0x1a8] sm:$0xff]
      %v4684 = vld [vmem:[#allocation2 + $0x1b0] sm:$0xff]
      %v4685 = vld [vmem:[#allocation2 + $0x1b8] sm:$0xff]
      %v4686 = vld [vmem:[#allocation2 + $0x1c0] sm:$0xff]
      %v4687 = vld [vmem:[#allocation2 + $0x1c8] sm:$0xff]
      %v4688 = vld [vmem:[#allocation2 + $0x1d0] sm:$0xff]
      %v4689 = vld [vmem:[#allocation2 + $0x1d8] sm:$0xff]
      %v4690 = vld [vmem:[#allocation2 + $0x1e0] sm:$0xff]
      %v4691 = vld [vmem:[#allocation2 + $0x1e8] sm:$0xff]
      %v4692 = vld [vmem:[#allocation2 + $0x1f0] sm:$0xff]
      %v4693 = vld [vmem:[#allocation2 + $0x1f8] sm:$0xff]
      %v4694 = vmax.f32 %v4374, %v4375
      %v4695 = vmax.f32 %v4694, %v4376
      %v4696 = vmax.f32 %v4695, %v4377
      %4697 = vmax.xlane.f32.xlu0 %v4696
      %v4698 = vpop.xlane.xlu0 %4697
      %v4699 = vmax.f32 %v4378, %v4379
      %v4700 = vmax.f32 %v4699, %v4380
      %v4701 = vmax.f32 %v4700, %v4381
      %4702 = vmax.xlane.f32.xlu0 %v4701
      %v4703 = vpop.xlane.xlu0 %4702
      %v4704 = vmax.f32 %v4382, %v4383
      %v4705 = vmax.f32 %v4704, %v4384
      %v4706 = vmax.f32 %v4705, %v4385
      %4707 = vmax.xlane.f32.xlu0 %v4706
      %v4708 = vpop.xlane.xlu0 %4707
      %v4709 = vmax.f32 %v4386, %v4387
      %v4710 = vmax.f32 %v4709, %v4388
      %v4711 = vmax.f32 %v4710, %v4389
      %4712 = vmax.xlane.f32.xlu0 %v4711
      %v4713 = vpop.xlane.xlu0 %4712
      %v4714 = vmax.f32 %v4390, %v4391
      %v4715 = vmax.f32 %v4714, %v4392
      %v4716 = vmax.f32 %v4715, %v4393
      %4717 = vmax.xlane.f32.xlu0 %v4716
      %v4718 = vpop.xlane.xlu0 %4717
      %v4719 = vmax.f32 %v4394, %v4395
      %v4720 = vmax.f32 %v4719, %v4396
      %v4721 = vmax.f32 %v4720, %v4397
      %4722 = vmax.xlane.f32.xlu0 %v4721
      %v4723 = vpop.xlane.xlu0 %4722
      %v4724 = vmax.f32 %v4398, %v4399
      %v4725 = vmax.f32 %v4724, %v4400
      %v4726 = vmax.f32 %v4725, %v4401
      %4727 = vmax.xlane.f32.xlu0 %v4726
      %v4728 = vpop.xlane.xlu0 %4727
      %v4729 = vmax.f32 %v4402, %v4403
      %v4730 = vmax.f32 %v4729, %v4404
      %v4731 = vmax.f32 %v4730, %v4405
      %4732 = vmax.xlane.f32.xlu0 %v4731
      %v4733 = vpop.xlane.xlu0 %4732
      %v4734 = vmax.f32 %v4406, %v4407
      %v4735 = vmax.f32 %v4734, %v4408
      %v4736 = vmax.f32 %v4735, %v4409
      %4737 = vmax.xlane.f32.xlu0 %v4736
      %v4738 = vpop.xlane.xlu0 %4737
      %v4739 = vmax.f32 %v4410, %v4411
      %v4740 = vmax.f32 %v4739, %v4412
      %v4741 = vmax.f32 %v4740, %v4413
      %4742 = vmax.xlane.f32.xlu0 %v4741
      %v4743 = vpop.xlane.xlu0 %4742
      %v4744 = vmax.f32 %v4414, %v4415
      %v4745 = vmax.f32 %v4744, %v4416
      %v4746 = vmax.f32 %v4745, %v4417
      %4747 = vmax.xlane.f32.xlu0 %v4746
      %v4748 = vpop.xlane.xlu0 %4747
      %v4749 = vmax.f32 %v4418, %v4419
      %v4750 = vmax.f32 %v4749, %v4420
      %v4751 = vmax.f32 %v4750, %v4421
      %4752 = vmax.xlane.f32.xlu0 %v4751
      %v4753 = vpop.xlane.xlu0 %4752
      %v4754 = vmax.f32 %v4422, %v4423
      %v4755 = vmax.f32 %v4754, %v4424
      %v4756 = vmax.f32 %v4755, %v4425
      %4757 = vmax.xlane.f32.xlu0 %v4756
      %v4758 = vpop.xlane.xlu0 %4757
      %v4759 = vmax.f32 %v4426, %v4427
      %v4760 = vmax.f32 %v4759, %v4428
      %v4761 = vmax.f32 %v4760, %v4429
      %4762 = vmax.xlane.f32.xlu0 %v4761
      %v4763 = vpop.xlane.xlu0 %4762
      %v4764 = vmax.f32 %v4430, %v4431
      %v4765 = vmax.f32 %v4764, %v4432
      %v4766 = vmax.f32 %v4765, %v4433
      %4767 = vmax.xlane.f32.xlu0 %v4766
      %v4768 = vpop.xlane.xlu0 %4767
      %v4769 = vmax.f32 %v4434, %v4435
      %v4770 = vmax.f32 %v4769, %v4436
      %v4771 = vmax.f32 %v4770, %v4437
      %4772 = vmax.xlane.f32.xlu0 %v4771
      %v4773 = vpop.xlane.xlu0 %4772
      %v4774 = vmax.f32 %v4438, %v4439
      %v4775 = vmax.f32 %v4774, %v4440
      %v4776 = vmax.f32 %v4775, %v4441
      %4777 = vmax.xlane.f32.xlu0 %v4776
      %v4778 = vpop.xlane.xlu0 %4777
      %v4779 = vmax.f32 %v4442, %v4443
      %v4780 = vmax.f32 %v4779, %v4444
      %v4781 = vmax.f32 %v4780, %v4445
      %4782 = vmax.xlane.f32.xlu0 %v4781
      %v4783 = vpop.xlane.xlu0 %4782
      %v4784 = vmax.f32 %v4446, %v4447
      %v4785 = vmax.f32 %v4784, %v4448
      %v4786 = vmax.f32 %v4785, %v4449
      %4787 = vmax.xlane.f32.xlu0 %v4786
      %v4788 = vpop.xlane.xlu0 %4787
      %v4789 = vmax.f32 %v4450, %v4451
      %v4790 = vmax.f32 %v4789, %v4452
      %v4791 = vmax.f32 %v4790, %v4453
      %4792 = vmax.xlane.f32.xlu0 %v4791
      %v4793 = vpop.xlane.xlu0 %4792
      %v4794 = vmax.f32 %v4454, %v4455
      %v4795 = vmax.f32 %v4794, %v4456
      %v4796 = vmax.f32 %v4795, %v4457
      %4797 = vmax.xlane.f32.xlu0 %v4796
      %v4798 = vpop.xlane.xlu0 %4797
      %v4799 = vmax.f32 %v4458, %v4459
      %v4800 = vmax.f32 %v4799, %v4460
      %v4801 = vmax.f32 %v4800, %v4461
      %4802 = vmax.xlane.f32.xlu0 %v4801
      %v4803 = vpop.xlane.xlu0 %4802
      %v4804 = vmax.f32 %v4462, %v4463
      %v4805 = vmax.f32 %v4804, %v4464
      %v4806 = vmax.f32 %v4805, %v4465
      %4807 = vmax.xlane.f32.xlu0 %v4806
      %v4808 = vpop.xlane.xlu0 %4807
      %v4809 = vmax.f32 %v4466, %v4467
      %v4810 = vmax.f32 %v4809, %v4468
      %v4811 = vmax.f32 %v4810, %v4469
      %4812 = vmax.xlane.f32.xlu0 %v4811
      %v4813 = vpop.xlane.xlu0 %4812
      %v4814 = vmax.f32 %v4470, %v4471
      %v4815 = vmax.f32 %v4814, %v4472
      %v4816 = vmax.f32 %v4815, %v4473
      %4817 = vmax.xlane.f32.xlu0 %v4816
      %v4818 = vpop.xlane.xlu0 %4817
      %v4819 = vmax.f32 %v4474, %v4475
      %v4820 = vmax.f32 %v4819, %v4476
      %v4821 = vmax.f32 %v4820, %v4477
      %4822 = vmax.xlane.f32.xlu0 %v4821
      %v4823 = vpop.xlane.xlu0 %4822
      %v4824 = vmax.f32 %v4478, %v4479
      %v4825 = vmax.f32 %v4824, %v4480
      %v4826 = vmax.f32 %v4825, %v4481
      %4827 = vmax.xlane.f32.xlu0 %v4826
      %v4828 = vpop.xlane.xlu0 %4827
      %v4829 = vmax.f32 %v4482, %v4483
      %v4830 = vmax.f32 %v4829, %v4484
      %v4831 = vmax.f32 %v4830, %v4485
      %4832 = vmax.xlane.f32.xlu0 %v4831
      %v4833 = vpop.xlane.xlu0 %4832
      %v4834 = vmax.f32 %v4486, %v4487
      %v4835 = vmax.f32 %v4834, %v4488
      %v4836 = vmax.f32 %v4835, %v4489
      %4837 = vmax.xlane.f32.xlu0 %v4836
      %v4838 = vpop.xlane.xlu0 %4837
      %v4839 = vmax.f32 %v4490, %v4491
      %v4840 = vmax.f32 %v4839, %v4492
      %v4841 = vmax.f32 %v4840, %v4493
      %4842 = vmax.xlane.f32.xlu0 %v4841
      %v4843 = vpop.xlane.xlu0 %4842
      %v4844 = vmax.f32 %v4494, %v4495
      %v4845 = vmax.f32 %v4844, %v4496
      %v4846 = vmax.f32 %v4845, %v4497
      %4847 = vmax.xlane.f32.xlu0 %v4846
      %v4848 = vpop.xlane.xlu0 %4847
      %v4849 = vmax.f32 %v4498, %v4499
      %v4850 = vmax.f32 %v4849, %v4500
      %v4851 = vmax.f32 %v4850, %v4501
      %4852 = vmax.xlane.f32.xlu0 %v4851
      %v4853 = vpop.xlane.xlu0 %4852
      %v4854 = vmax.f32 %v4502, %v4503
      %v4855 = vmax.f32 %v4854, %v4504
      %v4856 = vmax.f32 %v4855, %v4505
      %4857 = vmax.xlane.f32.xlu0 %v4856
      %v4858 = vpop.xlane.xlu0 %4857
      %v4859 = vmax.f32 %v4506, %v4507
      %v4860 = vmax.f32 %v4859, %v4508
      %v4861 = vmax.f32 %v4860, %v4509
      %4862 = vmax.xlane.f32.xlu0 %v4861
      %v4863 = vpop.xlane.xlu0 %4862
      %v4864 = vmax.f32 %v4510, %v4511
      %v4865 = vmax.f32 %v4864, %v4512
      %v4866 = vmax.f32 %v4865, %v4513
      %4867 = vmax.xlane.f32.xlu0 %v4866
      %v4868 = vpop.xlane.xlu0 %4867
      %v4869 = vmax.f32 %v4514, %v4515
      %v4870 = vmax.f32 %v4869, %v4516
      %v4871 = vmax.f32 %v4870, %v4517
      %4872 = vmax.xlane.f32.xlu0 %v4871
      %v4873 = vpop.xlane.xlu0 %4872
      %v4874 = vmax.f32 %v4518, %v4519
      %v4875 = vmax.f32 %v4874, %v4520
      %v4876 = vmax.f32 %v4875, %v4521
      %4877 = vmax.xlane.f32.xlu0 %v4876
      %v4878 = vpop.xlane.xlu0 %4877
      %v4879 = vmax.f32 %v4522, %v4523
      %v4880 = vmax.f32 %v4879, %v4524
      %v4881 = vmax.f32 %v4880, %v4525
      %4882 = vmax.xlane.f32.xlu0 %v4881
      %v4883 = vpop.xlane.xlu0 %4882
      %v4884 = vmax.f32 %v4526, %v4527
      %v4885 = vmax.f32 %v4884, %v4528
      %v4886 = vmax.f32 %v4885, %v4529
      %4887 = vmax.xlane.f32.xlu0 %v4886
      %v4888 = vpop.xlane.xlu0 %4887
      %v4889 = vmax.f32 %v4530, %v4531
      %v4890 = vmax.f32 %v4889, %v4532
      %v4891 = vmax.f32 %v4890, %v4533
      %4892 = vmax.xlane.f32.xlu0 %v4891
      %v4893 = vpop.xlane.xlu0 %4892
      %v4894 = vmax.f32 %v4534, %v4535
      %v4895 = vmax.f32 %v4894, %v4536
      %v4896 = vmax.f32 %v4895, %v4537
      %4897 = vmax.xlane.f32.xlu0 %v4896
      %v4898 = vpop.xlane.xlu0 %4897
      %v4899 = vmax.f32 %v4538, %v4539
      %v4900 = vmax.f32 %v4899, %v4540
      %v4901 = vmax.f32 %v4900, %v4541
      %4902 = vmax.xlane.f32.xlu0 %v4901
      %v4903 = vpop.xlane.xlu0 %4902
      %v4904 = vmax.f32 %v4542, %v4543
      %v4905 = vmax.f32 %v4904, %v4544
      %v4906 = vmax.f32 %v4905, %v4545
      %4907 = vmax.xlane.f32.xlu0 %v4906
      %v4908 = vpop.xlane.xlu0 %4907
      %v4909 = vmax.f32 %v4546, %v4547
      %v4910 = vmax.f32 %v4909, %v4548
      %v4911 = vmax.f32 %v4910, %v4549
      %4912 = vmax.xlane.f32.xlu0 %v4911
      %v4913 = vpop.xlane.xlu0 %4912
      %v4914 = vmax.f32 %v4550, %v4551
      %v4915 = vmax.f32 %v4914, %v4552
      %v4916 = vmax.f32 %v4915, %v4553
      %4917 = vmax.xlane.f32.xlu0 %v4916
      %v4918 = vpop.xlane.xlu0 %4917
      %v4919 = vmax.f32 %v4554, %v4555
      %v4920 = vmax.f32 %v4919, %v4556
      %v4921 = vmax.f32 %v4920, %v4557
      %4922 = vmax.xlane.f32.xlu0 %v4921
      %v4923 = vpop.xlane.xlu0 %4922
      %v4924 = vmax.f32 %v4558, %v4559
      %v4925 = vmax.f32 %v4924, %v4560
      %v4926 = vmax.f32 %v4925, %v4561
      %4927 = vmax.xlane.f32.xlu0 %v4926
      %v4928 = vpop.xlane.xlu0 %4927
      %v4929 = vmax.f32 %v4562, %v4563
      %v4930 = vmax.f32 %v4929, %v4564
      %v4931 = vmax.f32 %v4930, %v4565
      %4932 = vmax.xlane.f32.xlu0 %v4931
      %v4933 = vpop.xlane.xlu0 %4932
      %v4934 = vmax.f32 %v4566, %v4567
      %v4935 = vmax.f32 %v4934, %v4568
      %v4936 = vmax.f32 %v4935, %v4569
      %4937 = vmax.xlane.f32.xlu0 %v4936
      %v4938 = vpop.xlane.xlu0 %4937
      %v4939 = vmax.f32 %v4570, %v4571
      %v4940 = vmax.f32 %v4939, %v4572
      %v4941 = vmax.f32 %v4940, %v4573
      %4942 = vmax.xlane.f32.xlu0 %v4941
      %v4943 = vpop.xlane.xlu0 %4942
      %v4944 = vmax.f32 %v4574, %v4575
      %v4945 = vmax.f32 %v4944, %v4576
      %v4946 = vmax.f32 %v4945, %v4577
      %4947 = vmax.xlane.f32.xlu0 %v4946
      %v4948 = vpop.xlane.xlu0 %4947
      %v4949 = vmax.f32 %v4578, %v4579
      %v4950 = vmax.f32 %v4949, %v4580
      %v4951 = vmax.f32 %v4950, %v4581
      %4952 = vmax.xlane.f32.xlu0 %v4951
      %v4953 = vpop.xlane.xlu0 %4952
      %v4954 = vmax.f32 %v4582, %v4583
      %v4955 = vmax.f32 %v4954, %v4584
      %v4956 = vmax.f32 %v4955, %v4585
      %4957 = vmax.xlane.f32.xlu0 %v4956
      %v4958 = vpop.xlane.xlu0 %4957
      %v4959 = vmax.f32 %v4586, %v4587
      %v4960 = vmax.f32 %v4959, %v4588
      %v4961 = vmax.f32 %v4960, %v4589
      %4962 = vmax.xlane.f32.xlu0 %v4961
      %v4963 = vpop.xlane.xlu0 %4962
      %v4964 = vmax.f32 %v4590, %v4591
      %v4965 = vmax.f32 %v4964, %v4592
      %v4966 = vmax.f32 %v4965, %v4593
      %4967 = vmax.xlane.f32.xlu0 %v4966
      %v4968 = vpop.xlane.xlu0 %4967
      %v4969 = vmax.f32 %v4594, %v4595
      %v4970 = vmax.f32 %v4969, %v4596
      %v4971 = vmax.f32 %v4970, %v4597
      %4972 = vmax.xlane.f32.xlu0 %v4971
      %v4973 = vpop.xlane.xlu0 %4972
      %v4974 = vmax.f32 %v4598, %v4599
      %v4975 = vmax.f32 %v4974, %v4600
      %v4976 = vmax.f32 %v4975, %v4601
      %4977 = vmax.xlane.f32.xlu0 %v4976
      %v4978 = vpop.xlane.xlu0 %4977
      %v4979 = vmax.f32 %v4602, %v4603
      %v4980 = vmax.f32 %v4979, %v4604
      %v4981 = vmax.f32 %v4980, %v4605
      %4982 = vmax.xlane.f32.xlu0 %v4981
      %v4983 = vpop.xlane.xlu0 %4982
      %v4984 = vmax.f32 %v4606, %v4607
      %v4985 = vmax.f32 %v4984, %v4608
      %v4986 = vmax.f32 %v4985, %v4609
      %4987 = vmax.xlane.f32.xlu0 %v4986
      %v4988 = vpop.xlane.xlu0 %4987
      %v4989 = vmax.f32 %v4610, %v4611
      %v4990 = vmax.f32 %v4989, %v4612
      %v4991 = vmax.f32 %v4990, %v4613
      %4992 = vmax.xlane.f32.xlu0 %v4991
      %v4993 = vpop.xlane.xlu0 %4992
      %v4994 = vmax.f32 %v4614, %v4615
      %v4995 = vmax.f32 %v4994, %v4616
      %v4996 = vmax.f32 %v4995, %v4617
      %4997 = vmax.xlane.f32.xlu0 %v4996
      %v4998 = vpop.xlane.xlu0 %4997
      %v4999 = vmax.f32 %v4618, %v4619
      %v5000 = vmax.f32 %v4999, %v4620
      %v5001 = vmax.f32 %v5000, %v4621
      %5002 = vmax.xlane.f32.xlu0 %v5001
      %v5003 = vpop.xlane.xlu0 %5002
      %v5004 = vmax.f32 %v4622, %v4623
      %v5005 = vmax.f32 %v5004, %v4624
      %v5006 = vmax.f32 %v5005, %v4625
      %5007 = vmax.xlane.f32.xlu0 %v5006
      %v5008 = vpop.xlane.xlu0 %5007
      %v5009 = vmax.f32 %v4626, %v4627
      %v5010 = vmax.f32 %v5009, %v4628
      %v5011 = vmax.f32 %v5010, %v4629
      %5012 = vmax.xlane.f32.xlu0 %v5011
      %v5013 = vpop.xlane.xlu0 %5012
      %v5014 = vmax.f32 %v4630, %v4698
      %v5015 = vmax.f32 %v4631, %v4703
      %v5016 = vmax.f32 %v4632, %v4708
      %v5017 = vmax.f32 %v4633, %v4713
      %v5018 = vmax.f32 %v4634, %v4718
      %v5019 = vmax.f32 %v4635, %v4723
      %v5020 = vmax.f32 %v4636, %v4728
      %v5021 = vmax.f32 %v4637, %v4733
      %v5022 = vmax.f32 %v4638, %v4738
      %v5023 = vmax.f32 %v4639, %v4743
      %v5024 = vmax.f32 %v4640, %v4748
      %v5025 = vmax.f32 %v4641, %v4753
      %v5026 = vmax.f32 %v4642, %v4758
      %v5027 = vmax.f32 %v4643, %v4763
      %v5028 = vmax.f32 %v4644, %v4768
      %v5029 = vmax.f32 %v4645, %v4773
      %v5030 = vmax.f32 %v4646, %v4778
      %v5031 = vmax.f32 %v4647, %v4783
      %v5032 = vmax.f32 %v4648, %v4788
      %v5033 = vmax.f32 %v4649, %v4793
      %v5034 = vmax.f32 %v4650, %v4798
      %v5035 = vmax.f32 %v4651, %v4803
      %v5036 = vmax.f32 %v4652, %v4808
      %v5037 = vmax.f32 %v4653, %v4813
      %v5038 = vmax.f32 %v4654, %v4818
      %v5039 = vmax.f32 %v4655, %v4823
      %v5040 = vmax.f32 %v4656, %v4828
      %v5041 = vmax.f32 %v4657, %v4833
      %v5042 = vmax.f32 %v4658, %v4838
      %v5043 = vmax.f32 %v4659, %v4843
      %v5044 = vmax.f32 %v4660, %v4848
      %v5045 = vmax.f32 %v4661, %v4853
      %v5046 = vmax.f32 %v4662, %v4858
      %v5047 = vmax.f32 %v4663, %v4863
      %v5048 = vmax.f32 %v4664, %v4868
      %v5049 = vmax.f32 %v4665, %v4873
      %v5050 = vmax.f32 %v4666, %v4878
      %v5051 = vmax.f32 %v4667, %v4883
      %v5052 = vmax.f32 %v4668, %v4888
      %v5053 = vmax.f32 %v4669, %v4893
      %v5054 = vmax.f32 %v4670, %v4898
      %v5055 = vmax.f32 %v4671, %v4903
      %v5056 = vmax.f32 %v4672, %v4908
      %v5057 = vmax.f32 %v4673, %v4913
      %v5058 = vmax.f32 %v4674, %v4918
      %v5059 = vmax.f32 %v4675, %v4923
      %v5060 = vmax.f32 %v4676, %v4928
      %v5061 = vmax.f32 %v4677, %v4933
      %v5062 = vmax.f32 %v4678, %v4938
      %v5063 = vmax.f32 %v4679, %v4943
      %v5064 = vmax.f32 %v4680, %v4948
      %v5065 = vmax.f32 %v4681, %v4953
      %v5066 = vmax.f32 %v4682, %v4958
      %v5067 = vmax.f32 %v4683, %v4963
      %v5068 = vmax.f32 %v4684, %v4968
      %v5069 = vmax.f32 %v4685, %v4973
      %v5070 = vmax.f32 %v4686, %v4978
      %v5071 = vmax.f32 %v4687, %v4983
      %v5072 = vmax.f32 %v4688, %v4988
      %v5073 = vmax.f32 %v4689, %v4993
      %v5074 = vmax.f32 %v4690, %v4998
      %v5075 = vmax.f32 %v4691, %v5003
      %v5076 = vmax.f32 %v4692, %v5008
      %v5077 = vmax.f32 %v4693, %v5013
      %vm5078 = vcmask 7168
      %5079 = vst.msk [vmem:[#allocation2] sm:$0xff] %vm5078, %v5014
      %5080 = vst.msk [vmem:[#allocation2 + $0x8] sm:$0xff] %vm5078, %v5015
      %5081 = vst.msk [vmem:[#allocation2 + $0x10] sm:$0xff] %vm5078, %v5016
      %5082 = vst.msk [vmem:[#allocation2 + $0x18] sm:$0xff] %vm5078, %v5017
      %5083 = vst.msk [vmem:[#allocation2 + $0x20] sm:$0xff] %vm5078, %v5018
      %5084 = vst.msk [vmem:[#allocation2 + $0x28] sm:$0xff] %vm5078, %v5019
      %5085 = vst.msk [vmem:[#allocation2 + $0x30] sm:$0xff] %vm5078, %v5020
      %5086 = vst.msk [vmem:[#allocation2 + $0x38] sm:$0xff] %vm5078, %v5021
      %5087 = vst.msk [vmem:[#allocation2 + $0x40] sm:$0xff] %vm5078, %v5022
      %5088 = vst.msk [vmem:[#allocation2 + $0x48] sm:$0xff] %vm5078, %v5023
      %5089 = vst.msk [vmem:[#allocation2 + $0x50] sm:$0xff] %vm5078, %v5024
      %5090 = vst.msk [vmem:[#allocation2 + $0x58] sm:$0xff] %vm5078, %v5025
      %5091 = vst.msk [vmem:[#allocation2 + $0x60] sm:$0xff] %vm5078, %v5026
      %5092 = vst.msk [vmem:[#allocation2 + $0x68] sm:$0xff] %vm5078, %v5027
      %5093 = vst.msk [vmem:[#allocation2 + $0x70] sm:$0xff] %vm5078, %v5028
      %5094 = vst.msk [vmem:[#allocation2 + $0x78] sm:$0xff] %vm5078, %v5029
      %5095 = vst.msk [vmem:[#allocation2 + $0x80] sm:$0xff] %vm5078, %v5030
      %5096 = vst.msk [vmem:[#allocation2 + $0x88] sm:$0xff] %vm5078, %v5031
      %5097 = vst.msk [vmem:[#allocation2 + $0x90] sm:$0xff] %vm5078, %v5032
      %5098 = vst.msk [vmem:[#allocation2 + $0x98] sm:$0xff] %vm5078, %v5033
      %5099 = vst.msk [vmem:[#allocation2 + $0xa0] sm:$0xff] %vm5078, %v5034
      %5100 = vst.msk [vmem:[#allocation2 + $0xa8] sm:$0xff] %vm5078, %v5035
      %5101 = vst.msk [vmem:[#allocation2 + $0xb0] sm:$0xff] %vm5078, %v5036
      %5102 = vst.msk [vmem:[#allocation2 + $0xb8] sm:$0xff] %vm5078, %v5037
      %5103 = vst.msk [vmem:[#allocation2 + $0xc0] sm:$0xff] %vm5078, %v5038
      %5104 = vst.msk [vmem:[#allocation2 + $0xc8] sm:$0xff] %vm5078, %v5039
      %5105 = vst.msk [vmem:[#allocation2 + $0xd0] sm:$0xff] %vm5078, %v5040
      %5106 = vst.msk [vmem:[#allocation2 + $0xd8] sm:$0xff] %vm5078, %v5041
      %5107 = vst.msk [vmem:[#allocation2 + $0xe0] sm:$0xff] %vm5078, %v5042
      %5108 = vst.msk [vmem:[#allocation2 + $0xe8] sm:$0xff] %vm5078, %v5043
      %5109 = vst.msk [vmem:[#allocation2 + $0xf0] sm:$0xff] %vm5078, %v5044
      %5110 = vst.msk [vmem:[#allocation2 + $0xf8] sm:$0xff] %vm5078, %v5045
      %5111 = vst.msk [vmem:[#allocation2 + $0x100] sm:$0xff] %vm5078, %v5046
      %5112 = vst.msk [vmem:[#allocation2 + $0x108] sm:$0xff] %vm5078, %v5047
      %5113 = vst.msk [vmem:[#allocation2 + $0x110] sm:$0xff] %vm5078, %v5048
      %5114 = vst.msk [vmem:[#allocation2 + $0x118] sm:$0xff] %vm5078, %v5049
      %5115 = vst.msk [vmem:[#allocation2 + $0x120] sm:$0xff] %vm5078, %v5050
      %5116 = vst.msk [vmem:[#allocation2 + $0x128] sm:$0xff] %vm5078, %v5051
      %5117 = vst.msk [vmem:[#allocation2 + $0x130] sm:$0xff] %vm5078, %v5052
      %5118 = vst.msk [vmem:[#allocation2 + $0x138] sm:$0xff] %vm5078, %v5053
      %5119 = vst.msk [vmem:[#allocation2 + $0x140] sm:$0xff] %vm5078, %v5054
      %5120 = vst.msk [vmem:[#allocation2 + $0x148] sm:$0xff] %vm5078, %v5055
      %5121 = vst.msk [vmem:[#allocation2 + $0x150] sm:$0xff] %vm5078, %v5056
      %5122 = vst.msk [vmem:[#allocation2 + $0x158] sm:$0xff] %vm5078, %v5057
      %5123 = vst.msk [vmem:[#allocation2 + $0x160] sm:$0xff] %vm5078, %v5058
      %5124 = vst.msk [vmem:[#allocation2 + $0x168] sm:$0xff] %vm5078, %v5059
      %5125 = vst.msk [vmem:[#allocation2 + $0x170] sm:$0xff] %vm5078, %v5060
      %5126 = vst.msk [vmem:[#allocation2 + $0x178] sm:$0xff] %vm5078, %v5061
      %5127 = vst.msk [vmem:[#allocation2 + $0x180] sm:$0xff] %vm5078, %v5062
      %5128 = vst.msk [vmem:[#allocation2 + $0x188] sm:$0xff] %vm5078, %v5063
      %5129 = vst.msk [vmem:[#allocation2 + $0x190] sm:$0xff] %vm5078, %v5064
      %5130 = vst.msk [vmem:[#allocation2 + $0x198] sm:$0xff] %vm5078, %v5065
      %5131 = vst.msk [vmem:[#allocation2 + $0x1a0] sm:$0xff] %vm5078, %v5066
      %5132 = vst.msk [vmem:[#allocation2 + $0x1a8] sm:$0xff] %vm5078, %v5067
      %5133 = vst.msk [vmem:[#allocation2 + $0x1b0] sm:$0xff] %vm5078, %v5068
      %5134 = vst.msk [vmem:[#allocation2 + $0x1b8] sm:$0xff] %vm5078, %v5069
      %5135 = vst.msk [vmem:[#allocation2 + $0x1c0] sm:$0xff] %vm5078, %v5070
      %5136 = vst.msk [vmem:[#allocation2 + $0x1c8] sm:$0xff] %vm5078, %v5071
      %5137 = vst.msk [vmem:[#allocation2 + $0x1d0] sm:$0xff] %vm5078, %v5072
      %5138 = vst.msk [vmem:[#allocation2 + $0x1d8] sm:$0xff] %vm5078, %v5073
      %5139 = vst.msk [vmem:[#allocation2 + $0x1e0] sm:$0xff] %vm5078, %v5074
      %5140 = vst.msk [vmem:[#allocation2 + $0x1e8] sm:$0xff] %vm5078, %v5075
      %5141 = vst.msk [vmem:[#allocation2 + $0x1f0] sm:$0xff] %vm5078, %v5076
      %5142 = vst.msk [vmem:[#allocation2 + $0x1f8] sm:$0xff] %vm5078, %v5077
      // Predicated region
      $region69: #{tpu_custom_call.1} parent=63 // pred_check
        %p5143 = pneg %p440
      $region70: #{tpu_custom_call.1} parent=63 // pred_check_branch
        %5145 = sbr.rel (%p5143) target = $region72
      $region71: #{tpu_custom_call.1} parent=63 // pred_region
        %v5146 = vld [vmem:[#allocation2] sm:$0xff]
        %v5147 = vld [vmem:[#allocation2 + $0x8] sm:$0xff]
        %v5148 = vld [vmem:[#allocation2 + $0x10] sm:$0xff]
        %v5149 = vld [vmem:[#allocation2 + $0x18] sm:$0xff]
        %v5150 = vld [vmem:[#allocation2 + $0x20] sm:$0xff]
        %v5151 = vld [vmem:[#allocation2 + $0x28] sm:$0xff]
        %v5152 = vld [vmem:[#allocation2 + $0x30] sm:$0xff]
        %v5153 = vld [vmem:[#allocation2 + $0x38] sm:$0xff]
        %v5154 = vld [vmem:[#allocation2 + $0x40] sm:$0xff]
        %v5155 = vld [vmem:[#allocation2 + $0x48] sm:$0xff]
        %v5156 = vld [vmem:[#allocation2 + $0x50] sm:$0xff]
        %v5157 = vld [vmem:[#allocation2 + $0x58] sm:$0xff]
        %v5158 = vld [vmem:[#allocation2 + $0x60] sm:$0xff]
        %v5159 = vld [vmem:[#allocation2 + $0x68] sm:$0xff]
        %v5160 = vld [vmem:[#allocation2 + $0x70] sm:$0xff]
        %v5161 = vld [vmem:[#allocation2 + $0x78] sm:$0xff]
        %v5162 = vld [vmem:[#allocation2 + $0x80] sm:$0xff]
        %v5163 = vld [vmem:[#allocation2 + $0x88] sm:$0xff]
        %v5164 = vld [vmem:[#allocation2 + $0x90] sm:$0xff]
        %v5165 = vld [vmem:[#allocation2 + $0x98] sm:$0xff]
        %v5166 = vld [vmem:[#allocation2 + $0xa0] sm:$0xff]
        %v5167 = vld [vmem:[#allocation2 + $0xa8] sm:$0xff]
        %v5168 = vld [vmem:[#allocation2 + $0xb0] sm:$0xff]
        %v5169 = vld [vmem:[#allocation2 + $0xb8] sm:$0xff]
        %v5170 = vld [vmem:[#allocation2 + $0xc0] sm:$0xff]
        %v5171 = vld [vmem:[#allocation2 + $0xc8] sm:$0xff]
        %v5172 = vld [vmem:[#allocation2 + $0xd0] sm:$0xff]
        %v5173 = vld [vmem:[#allocation2 + $0xd8] sm:$0xff]
        %v5174 = vld [vmem:[#allocation2 + $0xe0] sm:$0xff]
        %v5175 = vld [vmem:[#allocation2 + $0xe8] sm:$0xff]
        %v5176 = vld [vmem:[#allocation2 + $0xf0] sm:$0xff]
        %v5177 = vld [vmem:[#allocation2 + $0xf8] sm:$0xff]
        %v5178 = vld [vmem:[#allocation2 + $0x100] sm:$0xff]
        %v5179 = vld [vmem:[#allocation2 + $0x108] sm:$0xff]
        %v5180 = vld [vmem:[#allocation2 + $0x110] sm:$0xff]
        %v5181 = vld [vmem:[#allocation2 + $0x118] sm:$0xff]
        %v5182 = vld [vmem:[#allocation2 + $0x120] sm:$0xff]
        %v5183 = vld [vmem:[#allocation2 + $0x128] sm:$0xff]
        %v5184 = vld [vmem:[#allocation2 + $0x130] sm:$0xff]
        %v5185 = vld [vmem:[#allocation2 + $0x138] sm:$0xff]
        %v5186 = vld [vmem:[#allocation2 + $0x140] sm:$0xff]
        %v5187 = vld [vmem:[#allocation2 + $0x148] sm:$0xff]
        %v5188 = vld [vmem:[#allocation2 + $0x150] sm:$0xff]
        %v5189 = vld [vmem:[#allocation2 + $0x158] sm:$0xff]
        %v5190 = vld [vmem:[#allocation2 + $0x160] sm:$0xff]
        %v5191 = vld [vmem:[#allocation2 + $0x168] sm:$0xff]
        %v5192 = vld [vmem:[#allocation2 + $0x170] sm:$0xff]
        %v5193 = vld [vmem:[#allocation2 + $0x178] sm:$0xff]
        %v5194 = vld [vmem:[#allocation2 + $0x180] sm:$0xff]
        %v5195 = vld [vmem:[#allocation2 + $0x188] sm:$0xff]
        %v5196 = vld [vmem:[#allocation2 + $0x190] sm:$0xff]
        %v5197 = vld [vmem:[#allocation2 + $0x198] sm:$0xff]
        %v5198 = vld [vmem:[#allocation2 + $0x1a0] sm:$0xff]
        %v5199 = vld [vmem:[#allocation2 + $0x1a8] sm:$0xff]
        %v5200 = vld [vmem:[#allocation2 + $0x1b0] sm:$0xff]
        %v5201 = vld [vmem:[#allocation2 + $0x1b8] sm:$0xff]
        %v5202 = vld [vmem:[#allocation2 + $0x1c0] sm:$0xff]
        %v5203 = vld [vmem:[#allocation2 + $0x1c8] sm:$0xff]
        %v5204 = vld [vmem:[#allocation2 + $0x1d0] sm:$0xff]
        %v5205 = vld [vmem:[#allocation2 + $0x1d8] sm:$0xff]
        %v5206 = vld [vmem:[#allocation2 + $0x1e0] sm:$0xff]
        %v5207 = vld [vmem:[#allocation2 + $0x1e8] sm:$0xff]
        %v5208 = vld [vmem:[#allocation2 + $0x1f0] sm:$0xff]
        %v5209 = vld [vmem:[#allocation2 + $0x1f8] sm:$0xff]
        %5210 = vst.msk [vmem:[%s438] sm:$0xff] %vm5078, %v5146
        %5211 = vst.msk [vmem:[%s438 + $0x8] sm:$0xff] %vm5078, %v5147
        %5212 = vst.msk [vmem:[%s438 + $0x10] sm:$0xff] %vm5078, %v5148
        %5213 = vst.msk [vmem:[%s438 + $0x18] sm:$0xff] %vm5078, %v5149
        %5214 = vst.msk [vmem:[%s438 + $0x20] sm:$0xff] %vm5078, %v5150
        %5215 = vst.msk [vmem:[%s438 + $0x28] sm:$0xff] %vm5078, %v5151
        %5216 = vst.msk [vmem:[%s438 + $0x30] sm:$0xff] %vm5078, %v5152
        %5217 = vst.msk [vmem:[%s438 + $0x38] sm:$0xff] %vm5078, %v5153
        %5218 = vst.msk [vmem:[%s438 + $0x40] sm:$0xff] %vm5078, %v5154
        %5219 = vst.msk [vmem:[%s438 + $0x48] sm:$0xff] %vm5078, %v5155
        %5220 = vst.msk [vmem:[%s438 + $0x50] sm:$0xff] %vm5078, %v5156
        %5221 = vst.msk [vmem:[%s438 + $0x58] sm:$0xff] %vm5078, %v5157
        %5222 = vst.msk [vmem:[%s438 + $0x60] sm:$0xff] %vm5078, %v5158
        %5223 = vst.msk [vmem:[%s438 + $0x68] sm:$0xff] %vm5078, %v5159
        %5224 = vst.msk [vmem:[%s438 + $0x70] sm:$0xff] %vm5078, %v5160
        %5225 = vst.msk [vmem:[%s438 + $0x78] sm:$0xff] %vm5078, %v5161
        %5226 = vst.msk [vmem:[%s438 + $0x80] sm:$0xff] %vm5078, %v5162
        %5227 = vst.msk [vmem:[%s438 + $0x88] sm:$0xff] %vm5078, %v5163
        %5228 = vst.msk [vmem:[%s438 + $0x90] sm:$0xff] %vm5078, %v5164
        %5229 = vst.msk [vmem:[%s438 + $0x98] sm:$0xff] %vm5078, %v5165
        %5230 = vst.msk [vmem:[%s438 + $0xa0] sm:$0xff] %vm5078, %v5166
        %5231 = vst.msk [vmem:[%s438 + $0xa8] sm:$0xff] %vm5078, %v5167
        %5232 = vst.msk [vmem:[%s438 + $0xb0] sm:$0xff] %vm5078, %v5168
        %5233 = vst.msk [vmem:[%s438 + $0xb8] sm:$0xff] %vm5078, %v5169
        %5234 = vst.msk [vmem:[%s438 + $0xc0] sm:$0xff] %vm5078, %v5170
        %5235 = vst.msk [vmem:[%s438 + $0xc8] sm:$0xff] %vm5078, %v5171
        %5236 = vst.msk [vmem:[%s438 + $0xd0] sm:$0xff] %vm5078, %v5172
        %5237 = vst.msk [vmem:[%s438 + $0xd8] sm:$0xff] %vm5078, %v5173
        %5238 = vst.msk [vmem:[%s438 + $0xe0] sm:$0xff] %vm5078, %v5174
        %5239 = vst.msk [vmem:[%s438 + $0xe8] sm:$0xff] %vm5078, %v5175
        %5240 = vst.msk [vmem:[%s438 + $0xf0] sm:$0xff] %vm5078, %v5176
        %5241 = vst.msk [vmem:[%s438 + $0xf8] sm:$0xff] %vm5078, %v5177
        %5242 = vst.msk [vmem:[%s438 + $0x100] sm:$0xff] %vm5078, %v5178
        %5243 = vst.msk [vmem:[%s438 + $0x108] sm:$0xff] %vm5078, %v5179
        %5244 = vst.msk [vmem:[%s438 + $0x110] sm:$0xff] %vm5078, %v5180
        %5245 = vst.msk [vmem:[%s438 + $0x118] sm:$0xff] %vm5078, %v5181
        %5246 = vst.msk [vmem:[%s438 + $0x120] sm:$0xff] %vm5078, %v5182
        %5247 = vst.msk [vmem:[%s438 + $0x128] sm:$0xff] %vm5078, %v5183
        %5248 = vst.msk [vmem:[%s438 + $0x130] sm:$0xff] %vm5078, %v5184
        %5249 = vst.msk [vmem:[%s438 + $0x138] sm:$0xff] %vm5078, %v5185
        %5250 = vst.msk [vmem:[%s438 + $0x140] sm:$0xff] %vm5078, %v5186
        %5251 = vst.msk [vmem:[%s438 + $0x148] sm:$0xff] %vm5078, %v5187
        %5252 = vst.msk [vmem:[%s438 + $0x150] sm:$0xff] %vm5078, %v5188
        %5253 = vst.msk [vmem:[%s438 + $0x158] sm:$0xff] %vm5078, %v5189
        %5254 = vst.msk [vmem:[%s438 + $0x160] sm:$0xff] %vm5078, %v5190
        %5255 = vst.msk [vmem:[%s438 + $0x168] sm:$0xff] %vm5078, %v5191
        %5256 = vst.msk [vmem:[%s438 + $0x170] sm:$0xff] %vm5078, %v5192
        %5257 = vst.msk [vmem:[%s438 + $0x178] sm:$0xff] %vm5078, %v5193
        %5258 = vst.msk [vmem:[%s438 + $0x180] sm:$0xff] %vm5078, %v5194
        %5259 = vst.msk [vmem:[%s438 + $0x188] sm:$0xff] %vm5078, %v5195
        %5260 = vst.msk [vmem:[%s438 + $0x190] sm:$0xff] %vm5078, %v5196
        %5261 = vst.msk [vmem:[%s438 + $0x198] sm:$0xff] %vm5078, %v5197
        %5262 = vst.msk [vmem:[%s438 + $0x1a0] sm:$0xff] %vm5078, %v5198
        %5263 = vst.msk [vmem:[%s438 + $0x1a8] sm:$0xff] %vm5078, %v5199
        %5264 = vst.msk [vmem:[%s438 + $0x1b0] sm:$0xff] %vm5078, %v5200
        %5265 = vst.msk [vmem:[%s438 + $0x1b8] sm:$0xff] %vm5078, %v5201
        %5266 = vst.msk [vmem:[%s438 + $0x1c0] sm:$0xff] %vm5078, %v5202
        %5267 = vst.msk [vmem:[%s438 + $0x1c8] sm:$0xff] %vm5078, %v5203
        %5268 = vst.msk [vmem:[%s438 + $0x1d0] sm:$0xff] %vm5078, %v5204
        %5269 = vst.msk [vmem:[%s438 + $0x1d8] sm:$0xff] %vm5078, %v5205
        %5270 = vst.msk [vmem:[%s438 + $0x1e0] sm:$0xff] %vm5078, %v5206
        %5271 = vst.msk [vmem:[%s438 + $0x1e8] sm:$0xff] %vm5078, %v5207
        %5272 = vst.msk [vmem:[%s438 + $0x1f0] sm:$0xff] %vm5078, %v5208
        %5273 = vst.msk [vmem:[%s438 + $0x1f8] sm:$0xff] %vm5078, %v5209
      $region72: #{tpu_custom_call.1} parent=63 // pred_fallthru
        _
      %p5274 = scmp.lt.s32.totalorder %s27, 1
      %s5275 = scalar_select %p5274, %s27, 1
      %p5276 = scmp.lt.s32.totalorder %s28, 0
      %s5277 = scalar_select %p5276, %s28, 0
      %s5278 = smul.addr %s5277, 64
      %s5279 = smul.addr %s5275, 64
      %s5280 = sadd.s32 %s5278, %s5279
      %s5281 = smul.addr %s5280, 8
      %s5282 = scalar_lea.vmem %s11, %s5281
      // Predicated region
      $region73: #{tpu_custom_call.1} parent=63 // pred_check
        %p5283 = pneg %p301
      $region74: #{tpu_custom_call.1} parent=63 // pred_check_branch
        %5285 = sbr.rel (%p5283) target = $region76
      $region75: #{tpu_custom_call.1} parent=63 // pred_region
        _
      $region76: #{tpu_custom_call.1} parent=63 // pred_fallthru
        _
    $region64: #{tpu_custom_call.1} parent=5 // pred_fallthru
      _
    %p5286 = scmp.le.s32.totalorder 2, %s17
    // Predicated region
    $region77: #{tpu_custom_call.1} parent=5 // pred_check
      %p5287 = pneg %p5286
    $region78: #{tpu_custom_call.1} parent=5 // pred_check_branch
      %5289 = sbr.rel (%p5287) target = $region80
    $region79: #{tpu_custom_call.1} parent=5 // pred_region
      %s5290 = ssub.s32 %s17, 2
      // Predicated region
      $region81: #{tpu_custom_call.1} parent=79 // pred_check
        %p5291 = pneg %p307
      $region82: #{tpu_custom_call.1} parent=79 // pred_check_branch
        %5293 = sbr.rel (%p5291) target = $region84
      $region83: #{tpu_custom_call.1} parent=79 // pred_region
        %p5294 = scmp.lt.s32.totalorder %s30, 1
        %s5295 = scalar_select %p5294, %s30, 1
        %p5296 = scmp.lt.s32.totalorder %s31, 0
        %s5297 = scalar_select %p5296, %s31, 0
        %s5298 = smul.addr %s5297, 64
        %s5299 = smul.addr %s5295, 64
        %s5300 = sadd.s32 %s5298, %s5299
        %s5301 = smul.addr %s5300, 8
        %s5302 = scalar_lea.vmem %s11, %s5301
      $region84: #{tpu_custom_call.1} parent=79 // pred_fallthru
        _
    $region80: #{tpu_custom_call.1} parent=5 // pred_fallthru
      _
  $region6: #{tpu_custom_call.1} parent=0 // loop_footer
    %s21 = sadd.s32 1, %s17
  $region7: #{tpu_custom_call.1} parent=0 // loop_footer_branch
    %16 = sbr.rel target = $region3
  $region8: #{tpu_custom_call.1} parent=0 // loop_exit
    _

</llo_original>
